<compile_context>
chip_gen: v7x
topology: tpu7x:2x2x1
jax: 0.10.0
libtpu: 0.0.40
codegen_flags: <defaults>
</compile_context>

<pallas_src>
import functools

import jax
import jax.numpy as jnp
from jax.experimental import pallas as pl
from jax.experimental.pallas import tpu as pltpu


def _round_up(x, m):
    return ((x + m - 1) // m) * m


def attack_kernel(x1_ref, l_ref,
                  wf0, bf0, wf1, bf1, wf2, bf2,          # features branch
                  wl0, bl0, wl1, bl1,                     # labels branch
                  wc0h, wc0g, bc0, wc1, bc1, wc2, bc2,    # combine MLP
                  wc3, bc3, wc4, bc4,
                  o_ref):
    """One batch tile of the full forward pass (all weights VMEM-resident)."""

    def matmul(x, w_ref):
        # bf16 x bf16 on the MXU, f32 accumulation.
        return jnp.dot(x.astype(jnp.bfloat16), w_ref[...],
                       preferred_element_type=jnp.float32)

    def linear_relu(x, w_ref, b_ref):
        return jnp.maximum(matmul(x, w_ref) + b_ref[...], 0.0)

    # features branch: 128 (zero-padded 100) -> 1024 -> 512 -> 64
    h = x1_ref[...]
    h = linear_relu(h, wf0, bf0)
    h = linear_relu(h, wf1, bf1)
    h = linear_relu(h, wf2, bf2)

    # labels branch: padded num_classes -> 128 -> 64
    g = l_ref[...]
    g = linear_relu(g, wl0, bl0)
    g = linear_relu(g, wl1, bl1)

    # concat-free first combine layer:
    #   [h | g] @ wc0 == h @ wc0[:64] + g @ wc0[64:]
    c = jnp.maximum(matmul(h, wc0h) + matmul(g, wc0g) + bc0[...], 0.0)

    # rest of combine MLP: 512 -> 256 -> 128 -> 64 (ReLU after each)
    c = linear_relu(c, wc1, bc1)
    c = linear_relu(c, wc2, bc2)
    c = linear_relu(c, wc3, bc3)

    # final 64 -> 1 layer: broadcast-mul + lane reduce on VPU/XLU
    # (avoids an N=1 MXU matmul on the serial critical path), then sigmoid.
    z = jnp.sum(c * wc4[...], axis=-1, keepdims=True) + bc4[...]
    o_ref[...] = jax.nn.sigmoid(z)


def make_params(num_classes, key):
    """Deterministic parameter init mirroring the PyTorch module:
    weights ~ Normal(0, 0.01), biases = 0. Weights stored as (in, out)."""
    layer_dims = [
        (100, 1024), (1024, 512), (512, 64),                      # features
        (num_classes, 128), (128, 64),                            # labels
        (128, 512), (512, 256), (256, 128), (128, 64), (64, 1),   # combine
    ]
    params = []
    keys = jax.random.split(key, len(layer_dims))
    for k, (din, dout) in zip(keys, layer_dims):
        w = 0.01 * jax.random.normal(k, (din, dout), dtype=jnp.float32)
        b = jnp.zeros((1, dout), dtype=jnp.float32)
        params.append(w)
        params.append(b)
    return params


def prepare_params(params, num_classes):
    """Pad first-layer K dims to lane multiples, split wc0 (concat-free first
    combine layer), reshape wc4 to a (1, 64) row, and cast weight matrices to
    bf16 (biases and the tiny wc4 row stay f32)."""
    (wf0, bf0, wf1, bf1, wf2, bf2,
     wl0, bl0, wl1, bl1,
     wc0, bc0, wc1, bc1, wc2, bc2, wc3, bc3, wc4, bc4) = params

    pad_x = _round_up(100, 128)
    pad_c = _round_up(num_classes, 128)

    wf0p = jnp.zeros((pad_x, 1024), jnp.float32).at[:100, :].set(wf0)
    wl0p = jnp.zeros((pad_c, 128), jnp.float32).at[:num_classes, :].set(wl0)

    wc0h, wc0g = wc0[:64, :], wc0[64:, :]
    wc4row = wc4.reshape(1, 64)

    bf16 = lambda w: w.astype(jnp.bfloat16)
    weights = (
        bf16(wf0p), bf0, bf16(wf1), bf1, bf16(wf2), bf2,
        bf16(wl0p), bl0, bf16(wl1), bl1,
        bf16(wc0h), bf16(wc0g), bc0, bf16(wc1), bc1,
        bf16(wc2), bc2, bf16(wc3), bc3,
        wc4row, bc4,
    )
    return weights


def _choose_tile_b(batch):
    if batch >= 256:
        return 256   # fills the 256-row MXU on v6e/v7x (2x oversubscribes v5e's 128)
    return max(8, _round_up(batch, 8))


@functools.partial(jax.jit, static_argnames=("tile_b",))
def _attack_pallas(x1, l, weights, *, tile_b):
    batch, in_x = x1.shape
    in_c = l.shape[1]
    pad_x = weights[0].shape[0]   # padded x1 feature width (128)
    pad_c = weights[6].shape[0]   # padded label width

    padded_b = _round_up(batch, tile_b)
    x1p = jnp.zeros((padded_b, pad_x), jnp.float32).at[:batch, :in_x].set(x1)
    lp = jnp.zeros((padded_b, pad_c), jnp.float32).at[:batch, :in_c].set(l)

    grid = (padded_b // tile_b,)

    def act_spec(feat):
        return pl.BlockSpec((tile_b, feat), lambda i: (i, 0))

    # Block-invariant specs: weights are DMA'd once and stay VMEM-resident.
    weight_specs = [pl.BlockSpec(w.shape, lambda i: (0, 0)) for w in weights]

    flops = 2 * padded_b * (
        pad_x * 1024 + 1024 * 512 + 512 * 64 +
        pad_c * 128 + 128 * 64 +
        64 * 512 + 64 * 512 + 512 * 256 + 256 * 128 + 128 * 64 + 64)
    bytes_accessed = (
        sum(int(w.size) * w.dtype.itemsize for w in weights)
        + int(x1p.size) * 4 + int(lp.size) * 4 + padded_b * 4)
    cost = pl.CostEstimate(flops=flops, transcendentals=padded_b,
                           bytes_accessed=bytes_accessed)

    out = pl.pallas_call(
        attack_kernel,
        out_shape=jax.ShapeDtypeStruct((padded_b, 1), jnp.float32),
        grid_spec=pltpu.PrefetchScalarGridSpec(
            num_scalar_prefetch=0,
            grid=grid,
            in_specs=[act_spec(pad_x), act_spec(pad_c)] + weight_specs,
            out_specs=pl.BlockSpec((tile_b, 1), lambda i: (i, 0)),
        ),
        compiler_params=pltpu.CompilerParams(
            dimension_semantics=("parallel",),      # shard batch tiles on v7x's 2 TCs
            vmem_limit_bytes=32 << 20,              # safe on v7x (64 MiB physical)
        ),
        cost_estimate=cost,
    )(x1p, lp, *weights)

    return out[:batch]


def inference_attack_forward(x1, l, prepared_weights):
    tile_b = _choose_tile_b(x1.shape[0])
    return _attack_pallas(x1, l, prepared_weights, tile_b=tile_b)


def reference_forward(x1, l, params):
    """Plain-JAX f32 reference of the same network."""
    (wf0, bf0, wf1, bf1, wf2, bf2,
     wl0, bl0, wl1, bl1,
     wc0, bc0, wc1, bc1, wc2, bc2, wc3, bc3, wc4, bc4) = params

    def lr(x, w, b):
        return jnp.maximum(x @ w + b, 0.0)

    h = lr(lr(lr(x1, wf0, bf0), wf1, bf1), wf2, bf2)
    g = lr(lr(l, wl0, bl0), wl1, bl1)
    c = jnp.concatenate([h, g], axis=1)
    c = lr(lr(lr(lr(c, wc0, bc0), wc1, bc1), wc2, bc2), wc3, bc3)
    return jax.nn.sigmoid(c @ wc4 + bc4)


if __name__ == "__main__":
    num_classes = 10

    key = jax.random.PRNGKey(0)
    k_x1, k_l, k_p, k_x2, k_l2 = jax.random.split(key, 5)

    params = make_params(num_classes, k_p)
    weights = prepare_params(params, num_classes)

    # small batch (single tile)
    batch = 8
    x1 = jax.random.normal(k_x1, (batch, 100), dtype=jnp.float32)
    l = jax.nn.softmax(jax.random.normal(k_l, (batch, num_classes)), axis=-1)

    out = jax.block_until_ready(inference_attack_forward(x1, l, weights))
    ref = reference_forward(x1, l, params)
    assert out.shape == (batch, 1), out.shape
    assert jnp.allclose(out, ref, atol=1e-2, rtol=1e-2), (out, ref)

    # larger, non-multiple batch (exercises the grid, tiling and padding path)
    batch2 = 300
    x1b = jax.random.normal(k_x2, (batch2, 100), dtype=jnp.float32)
    lb = jax.nn.softmax(jax.random.normal(k_l2, (batch2, num_classes)), axis=-1)

    out2 = jax.block_until_ready(inference_attack_forward(x1b, lb, weights))
    ref2 = reference_forward(x1b, lb, params)
    assert out2.shape == (batch2, 1), out2.shape
    assert jnp.allclose(out2, ref2, atol=1e-2, rtol=1e-2), (out2, ref2)

    print("KERNEL_OK")
</pallas_src>

<mosaic_0001>
module attributes {stable_mosaic.version = 11 : i64} {
  func.func @attack_kernel(%arg0: i32, %arg1: memref<8x128xf32, #tpu.memory_space<vmem>>, %arg2: memref<8x128xf32, #tpu.memory_space<vmem>>, %arg3: memref<128x1024xbf16, #tpu.memory_space<vmem>>, %arg4: memref<1x1024xf32, #tpu.memory_space<vmem>>, %arg5: memref<1024x512xbf16, #tpu.memory_space<vmem>>, %arg6: memref<1x512xf32, #tpu.memory_space<vmem>>, %arg7: memref<512x64xbf16, #tpu.memory_space<vmem>>, %arg8: memref<1x64xf32, #tpu.memory_space<vmem>>, %arg9: memref<128x128xbf16, #tpu.memory_space<vmem>>, %arg10: memref<1x128xf32, #tpu.memory_space<vmem>>, %arg11: memref<128x64xbf16, #tpu.memory_space<vmem>>, %arg12: memref<1x64xf32, #tpu.memory_space<vmem>>, %arg13: memref<64x512xbf16, #tpu.memory_space<vmem>>, %arg14: memref<64x512xbf16, #tpu.memory_space<vmem>>, %arg15: memref<1x512xf32, #tpu.memory_space<vmem>>, %arg16: memref<512x256xbf16, #tpu.memory_space<vmem>>, %arg17: memref<1x256xf32, #tpu.memory_space<vmem>>, %arg18: memref<256x128xbf16, #tpu.memory_space<vmem>>, %arg19: memref<1x128xf32, #tpu.memory_space<vmem>>, %arg20: memref<128x64xbf16, #tpu.memory_space<vmem>>, %arg21: memref<1x64xf32, #tpu.memory_space<vmem>>, %arg22: memref<1x64xf32, #tpu.memory_space<vmem>>, %arg23: memref<1x1xf32, #tpu.memory_space<vmem>>, %arg24: memref<8x1xf32, #tpu.memory_space<vmem>>) attributes {dimension_semantics = [#tpu.dimension_semantics<parallel>], iteration_bounds = array<i64: 1>, scalar_prefetch = 0 : i64, scratch_operands = 0 : i64, tpu.core_type = #tpu.core_type<tc>, window_params = [{transform_indices = @transform_0, window_bounds = array<i64: 8, 128>}, {transform_indices = @transform_1, window_bounds = array<i64: 8, 128>}, {pipeline_mode = #tpu.pipeline_mode<synchronous>, transform_indices = @transform_2, window_bounds = array<i64: 128, 1024>}, {pipeline_mode = #tpu.pipeline_mode<synchronous>, transform_indices = @transform_3, window_bounds = array<i64: 1, 1024>}, {pipeline_mode = #tpu.pipeline_mode<synchronous>, transform_indices = @transform_4, window_bounds = array<i64: 1024, 512>}, {pipeline_mode = #tpu.pipeline_mode<synchronous>, transform_indices = @transform_5, window_bounds = array<i64: 1, 512>}, {pipeline_mode = #tpu.pipeline_mode<synchronous>, transform_indices = @transform_6, window_bounds = array<i64: 512, 64>}, {pipeline_mode = #tpu.pipeline_mode<synchronous>, transform_indices = @transform_7, window_bounds = array<i64: 1, 64>}, {pipeline_mode = #tpu.pipeline_mode<synchronous>, transform_indices = @transform_8, window_bounds = array<i64: 128, 128>}, {pipeline_mode = #tpu.pipeline_mode<synchronous>, transform_indices = @transform_9, window_bounds = array<i64: 1, 128>}, {pipeline_mode = #tpu.pipeline_mode<synchronous>, transform_indices = @transform_10, window_bounds = array<i64: 128, 64>}, {pipeline_mode = #tpu.pipeline_mode<synchronous>, transform_indices = @transform_11, window_bounds = array<i64: 1, 64>}, {pipeline_mode = #tpu.pipeline_mode<synchronous>, transform_indices = @transform_12, window_bounds = array<i64: 64, 512>}, {pipeline_mode = #tpu.pipeline_mode<synchronous>, transform_indices = @transform_13, window_bounds = array<i64: 64, 512>}, {pipeline_mode = #tpu.pipeline_mode<synchronous>, transform_indices = @transform_14, window_bounds = array<i64: 1, 512>}, {pipeline_mode = #tpu.pipeline_mode<synchronous>, transform_indices = @transform_15, window_bounds = array<i64: 512, 256>}, {pipeline_mode = #tpu.pipeline_mode<synchronous>, transform_indices = @transform_16, window_bounds = array<i64: 1, 256>}, {pipeline_mode = #tpu.pipeline_mode<synchronous>, transform_indices = @transform_17, window_bounds = array<i64: 256, 128>}, {pipeline_mode = #tpu.pipeline_mode<synchronous>, transform_indices = @transform_18, window_bounds = array<i64: 1, 128>}, {pipeline_mode = #tpu.pipeline_mode<synchronous>, transform_indices = @transform_19, window_bounds = array<i64: 128, 64>}, {pipeline_mode = #tpu.pipeline_mode<synchronous>, transform_indices = @transform_20, window_bounds = array<i64: 1, 64>}, {pipeline_mode = #tpu.pipeline_mode<synchronous>, transform_indices = @transform_21, window_bounds = array<i64: 1, 64>}, {pipeline_mode = #tpu.pipeline_mode<synchronous>, transform_indices = @transform_22, window_bounds = array<i64: 1, 1>}, {transform_indices = @transform_23, window_bounds = array<i64: 8, 1>}]} {
    %c0 = arith.constant 0 : index
    %c0_0 = arith.constant 0 : index
    %0 = vector.load %arg1[%c0, %c0_0] : memref<8x128xf32, #tpu.memory_space<vmem>>, vector<8x128xf32>
    %1 = arith.truncf %0 : vector<8x128xf32> to vector<8x128xbf16>
    %c0_1 = arith.constant 0 : index
    %c0_2 = arith.constant 0 : index
    %2 = vector.load %arg3[%c0_1, %c0_2] : memref<128x1024xbf16, #tpu.memory_space<vmem>>, vector<128x1024xbf16>
    %cst = arith.constant dense<0.000000e+00> : vector<8x1024xf32>
    %3 = tpu.matmul %1, %2, %cst {dimension_numbers = #tpu.dot_dimension_numbers<[1], [0], [0], [1], [0, 0, 1, 1], [], []>} : vector<8x128xbf16>, vector<128x1024xbf16>, vector<8x1024xf32> -> vector<8x1024xf32>
    %c0_3 = arith.constant 0 : index
    %c0_4 = arith.constant 0 : index
    %4 = vector.load %arg4[%c0_3, %c0_4] : memref<1x1024xf32, #tpu.memory_space<vmem>>, vector<1x1024xf32>
    %5 = vector.broadcast %4 : vector<1x1024xf32> to vector<8x1024xf32>
    %6 = arith.addf %3, %5 : vector<8x1024xf32>
    %cst_5 = arith.constant 0.000000e+00 : f32
    %7 = vector.broadcast %cst_5 : f32 to vector<8x1024xf32>
    %8 = arith.maximumf %6, %7 : vector<8x1024xf32>
    %9 = arith.truncf %8 : vector<8x1024xf32> to vector<8x1024xbf16>
    %c0_6 = arith.constant 0 : index
    %c0_7 = arith.constant 0 : index
    %10 = vector.load %arg5[%c0_6, %c0_7] : memref<1024x512xbf16, #tpu.memory_space<vmem>>, vector<1024x512xbf16>
    %cst_8 = arith.constant dense<0.000000e+00> : vector<8x512xf32>
    %11 = tpu.matmul %9, %10, %cst_8 {dimension_numbers = #tpu.dot_dimension_numbers<[1], [0], [0], [1], [0, 0, 1, 1], [], []>} : vector<8x1024xbf16>, vector<1024x512xbf16>, vector<8x512xf32> -> vector<8x512xf32>
    %c0_9 = arith.constant 0 : index
    %c0_10 = arith.constant 0 : index
    %12 = vector.load %arg6[%c0_9, %c0_10] : memref<1x512xf32, #tpu.memory_space<vmem>>, vector<1x512xf32>
    %13 = vector.broadcast %12 : vector<1x512xf32> to vector<8x512xf32>
    %14 = arith.addf %11, %13 : vector<8x512xf32>
    %cst_11 = arith.constant 0.000000e+00 : f32
    %15 = vector.broadcast %cst_11 : f32 to vector<8x512xf32>
    %16 = arith.maximumf %14, %15 : vector<8x512xf32>
    %17 = arith.truncf %16 : vector<8x512xf32> to vector<8x512xbf16>
    %c0_12 = arith.constant 0 : index
    %c0_13 = arith.constant 0 : index
    %18 = vector.load %arg7[%c0_12, %c0_13] : memref<512x64xbf16, #tpu.memory_space<vmem>>, vector<512x64xbf16>
    %cst_14 = arith.constant dense<0.000000e+00> : vector<8x64xf32>
    %19 = tpu.matmul %17, %18, %cst_14 {dimension_numbers = #tpu.dot_dimension_numbers<[1], [0], [0], [1], [0, 0, 1, 1], [], []>} : vector<8x512xbf16>, vector<512x64xbf16>, vector<8x64xf32> -> vector<8x64xf32>
    %c0_15 = arith.constant 0 : index
    %c0_16 = arith.constant 0 : index
    %20 = vector.load %arg8[%c0_15, %c0_16] : memref<1x64xf32, #tpu.memory_space<vmem>>, vector<1x64xf32>
    %21 = vector.broadcast %20 : vector<1x64xf32> to vector<8x64xf32>
    %22 = arith.addf %19, %21 : vector<8x64xf32>
    %cst_17 = arith.constant 0.000000e+00 : f32
    %23 = vector.broadcast %cst_17 : f32 to vector<8x64xf32>
    %24 = arith.maximumf %22, %23 : vector<8x64xf32>
    %c0_18 = arith.constant 0 : index
    %c0_19 = arith.constant 0 : index
    %25 = vector.load %arg2[%c0_18, %c0_19] : memref<8x128xf32, #tpu.memory_space<vmem>>, vector<8x128xf32>
    %26 = arith.truncf %25 : vector<8x128xf32> to vector<8x128xbf16>
    %c0_20 = arith.constant 0 : index
    %c0_21 = arith.constant 0 : index
    %27 = vector.load %arg9[%c0_20, %c0_21] : memref<128x128xbf16, #tpu.memory_space<vmem>>, vector<128x128xbf16>
    %cst_22 = arith.constant dense<0.000000e+00> : vector<8x128xf32>
    %28 = tpu.matmul %26, %27, %cst_22 {dimension_numbers = #tpu.dot_dimension_numbers<[1], [0], [0], [1], [0, 0, 1, 1], [], []>} : vector<8x128xbf16>, vector<128x128xbf16>, vector<8x128xf32> -> vector<8x128xf32>
    %c0_23 = arith.constant 0 : index
    %c0_24 = arith.constant 0 : index
    %29 = vector.load %arg10[%c0_23, %c0_24] : memref<1x128xf32, #tpu.memory_space<vmem>>, vector<1x128xf32>
    %30 = vector.broadcast %29 : vector<1x128xf32> to vector<8x128xf32>
    %31 = arith.addf %28, %30 : vector<8x128xf32>
    %cst_25 = arith.constant 0.000000e+00 : f32
    %32 = vector.broadcast %cst_25 : f32 to vector<8x128xf32>
    %33 = arith.maximumf %31, %32 : vector<8x128xf32>
    %34 = arith.truncf %33 : vector<8x128xf32> to vector<8x128xbf16>
    %c0_26 = arith.constant 0 : index
    %c0_27 = arith.constant 0 : index
    %35 = vector.load %arg11[%c0_26, %c0_27] : memref<128x64xbf16, #tpu.memory_space<vmem>>, vector<128x64xbf16>
    %cst_28 = arith.constant dense<0.000000e+00> : vector<8x64xf32>
    %36 = tpu.matmul %34, %35, %cst_28 {dimension_numbers = #tpu.dot_dimension_numbers<[1], [0], [0], [1], [0, 0, 1, 1], [], []>} : vector<8x128xbf16>, vector<128x64xbf16>, vector<8x64xf32> -> vector<8x64xf32>
    %c0_29 = arith.constant 0 : index
    %c0_30 = arith.constant 0 : index
    %37 = vector.load %arg12[%c0_29, %c0_30] : memref<1x64xf32, #tpu.memory_space<vmem>>, vector<1x64xf32>
    %38 = vector.broadcast %37 : vector<1x64xf32> to vector<8x64xf32>
    %39 = arith.addf %36, %38 : vector<8x64xf32>
    %cst_31 = arith.constant 0.000000e+00 : f32
    %40 = vector.broadcast %cst_31 : f32 to vector<8x64xf32>
    %41 = arith.maximumf %39, %40 : vector<8x64xf32>
    %42 = arith.truncf %24 : vector<8x64xf32> to vector<8x64xbf16>
    %c0_32 = arith.constant 0 : index
    %c0_33 = arith.constant 0 : index
    %43 = vector.load %arg13[%c0_32, %c0_33] : memref<64x512xbf16, #tpu.memory_space<vmem>>, vector<64x512xbf16>
    %cst_34 = arith.constant dense<0.000000e+00> : vector<8x512xf32>
    %44 = tpu.matmul %42, %43, %cst_34 {dimension_numbers = #tpu.dot_dimension_numbers<[1], [0], [0], [1], [0, 0, 1, 1], [], []>} : vector<8x64xbf16>, vector<64x512xbf16>, vector<8x512xf32> -> vector<8x512xf32>
    %45 = arith.truncf %41 : vector<8x64xf32> to vector<8x64xbf16>
    %c0_35 = arith.constant 0 : index
    %c0_36 = arith.constant 0 : index
    %46 = vector.load %arg14[%c0_35, %c0_36] : memref<64x512xbf16, #tpu.memory_space<vmem>>, vector<64x512xbf16>
    %cst_37 = arith.constant dense<0.000000e+00> : vector<8x512xf32>
    %47 = tpu.matmul %45, %46, %cst_37 {dimension_numbers = #tpu.dot_dimension_numbers<[1], [0], [0], [1], [0, 0, 1, 1], [], []>} : vector<8x64xbf16>, vector<64x512xbf16>, vector<8x512xf32> -> vector<8x512xf32>
    %48 = arith.addf %44, %47 : vector<8x512xf32>
    %c0_38 = arith.constant 0 : index
    %c0_39 = arith.constant 0 : index
    %49 = vector.load %arg15[%c0_38, %c0_39] : memref<1x512xf32, #tpu.memory_space<vmem>>, vector<1x512xf32>
    %50 = vector.broadcast %49 : vector<1x512xf32> to vector<8x512xf32>
    %51 = arith.addf %48, %50 : vector<8x512xf32>
    %cst_40 = arith.constant 0.000000e+00 : f32
    %52 = vector.broadcast %cst_40 : f32 to vector<8x512xf32>
    %53 = arith.maximumf %51, %52 : vector<8x512xf32>
    %54 = arith.truncf %53 : vector<8x512xf32> to vector<8x512xbf16>
    %c0_41 = arith.constant 0 : index
    %c0_42 = arith.constant 0 : index
    %55 = vector.load %arg16[%c0_41, %c0_42] : memref<512x256xbf16, #tpu.memory_space<vmem>>, vector<512x256xbf16>
    %cst_43 = arith.constant dense<0.000000e+00> : vector<8x256xf32>
    %56 = tpu.matmul %54, %55, %cst_43 {dimension_numbers = #tpu.dot_dimension_numbers<[1], [0], [0], [1], [0, 0, 1, 1], [], []>} : vector<8x512xbf16>, vector<512x256xbf16>, vector<8x256xf32> -> vector<8x256xf32>
    %c0_44 = arith.constant 0 : index
    %c0_45 = arith.constant 0 : index
    %57 = vector.load %arg17[%c0_44, %c0_45] : memref<1x256xf32, #tpu.memory_space<vmem>>, vector<1x256xf32>
    %58 = vector.broadcast %57 : vector<1x256xf32> to vector<8x256xf32>
    %59 = arith.addf %56, %58 : vector<8x256xf32>
    %cst_46 = arith.constant 0.000000e+00 : f32
    %60 = vector.broadcast %cst_46 : f32 to vector<8x256xf32>
    %61 = arith.maximumf %59, %60 : vector<8x256xf32>
    %62 = arith.truncf %61 : vector<8x256xf32> to vector<8x256xbf16>
    %c0_47 = arith.constant 0 : index
    %c0_48 = arith.constant 0 : index
    %63 = vector.load %arg18[%c0_47, %c0_48] : memref<256x128xbf16, #tpu.memory_space<vmem>>, vector<256x128xbf16>
    %cst_49 = arith.constant dense<0.000000e+00> : vector<8x128xf32>
    %64 = tpu.matmul %62, %63, %cst_49 {dimension_numbers = #tpu.dot_dimension_numbers<[1], [0], [0], [1], [0, 0, 1, 1], [], []>} : vector<8x256xbf16>, vector<256x128xbf16>, vector<8x128xf32> -> vector<8x128xf32>
    %c0_50 = arith.constant 0 : index
    %c0_51 = arith.constant 0 : index
    %65 = vector.load %arg19[%c0_50, %c0_51] : memref<1x128xf32, #tpu.memory_space<vmem>>, vector<1x128xf32>
    %66 = vector.broadcast %65 : vector<1x128xf32> to vector<8x128xf32>
    %67 = arith.addf %64, %66 : vector<8x128xf32>
    %cst_52 = arith.constant 0.000000e+00 : f32
    %68 = vector.broadcast %cst_52 : f32 to vector<8x128xf32>
    %69 = arith.maximumf %67, %68 : vector<8x128xf32>
    %70 = arith.truncf %69 : vector<8x128xf32> to vector<8x128xbf16>
    %c0_53 = arith.constant 0 : index
    %c0_54 = arith.constant 0 : index
    %71 = vector.load %arg20[%c0_53, %c0_54] : memref<128x64xbf16, #tpu.memory_space<vmem>>, vector<128x64xbf16>
    %cst_55 = arith.constant dense<0.000000e+00> : vector<8x64xf32>
    %72 = tpu.matmul %70, %71, %cst_55 {dimension_numbers = #tpu.dot_dimension_numbers<[1], [0], [0], [1], [0, 0, 1, 1], [], []>} : vector<8x128xbf16>, vector<128x64xbf16>, vector<8x64xf32> -> vector<8x64xf32>
    %c0_56 = arith.constant 0 : index
    %c0_57 = arith.constant 0 : index
    %73 = vector.load %arg21[%c0_56, %c0_57] : memref<1x64xf32, #tpu.memory_space<vmem>>, vector<1x64xf32>
    %74 = vector.broadcast %73 : vector<1x64xf32> to vector<8x64xf32>
    %75 = arith.addf %72, %74 : vector<8x64xf32>
    %cst_58 = arith.constant 0.000000e+00 : f32
    %76 = vector.broadcast %cst_58 : f32 to vector<8x64xf32>
    %77 = arith.maximumf %75, %76 : vector<8x64xf32>
    %c0_59 = arith.constant 0 : index
    %c0_60 = arith.constant 0 : index
    %78 = vector.load %arg22[%c0_59, %c0_60] : memref<1x64xf32, #tpu.memory_space<vmem>>, vector<1x64xf32>
    %79 = vector.broadcast %78 : vector<1x64xf32> to vector<8x64xf32>
    %80 = arith.mulf %77, %79 : vector<8x64xf32>
    %cst_61 = arith.constant dense<0.000000e+00> : vector<8xf32>
    %81 = vector.multi_reduction <add>, %80, %cst_61 [1] : vector<8x64xf32> to vector<8xf32>
    %82 = vector.shape_cast %81 : vector<8xf32> to vector<8x1xf32>
    %c0_62 = arith.constant 0 : index
    %c0_63 = arith.constant 0 : index
    %83 = vector.load %arg23[%c0_62, %c0_63] : memref<1x1xf32, #tpu.memory_space<vmem>>, vector<1x1xf32>
    %84 = vector.broadcast %83 : vector<1x1xf32> to vector<8x1xf32>
    %85 = arith.addf %82, %84 : vector<8x1xf32>
    %86 = arith.negf %85 : vector<8x1xf32>
    %87 = math.exp %86 : vector<8x1xf32>
    %cst_64 = arith.constant 1.000000e+00 : f32
    %88 = vector.broadcast %cst_64 : f32 to vector<8x1xf32>
    %89 = arith.addf %88, %87 : vector<8x1xf32>
    %90 = arith.divf %88, %89 : vector<8x1xf32>
    %c0_65 = arith.constant 0 : index
    %c0_66 = arith.constant 0 : index
    %91 = vector.load %arg24[%c0_65, %c0_66] : memref<8x1xf32, #tpu.memory_space<vmem>>, vector<8x1xf32>
    tpu.vector_store %arg24[%c0_65, %c0_66], %90 {strides = array<i32>} : memref<8x1xf32, #tpu.memory_space<vmem>>, vector<8x1xf32>,
    return
  }
  func.func @transform_0(%arg0: i32) -> (i32, i32) {
    %c0_i32 = arith.constant 0 : i32
    %c0_i32_0 = arith.constant 0 : i32
    return %arg0, %c0_i32 : i32, i32
  }
  func.func @transform_1(%arg0: i32) -> (i32, i32) {
    %c0_i32 = arith.constant 0 : i32
    %c0_i32_0 = arith.constant 0 : i32
    return %arg0, %c0_i32 : i32, i32
  }
  func.func @transform_2(%arg0: i32) -> (i32, i32) {
    %c0_i32 = arith.constant 0 : i32
    %c0_i32_0 = arith.constant 0 : i32
    %c0_i32_1 = arith.constant 0 : i32
    return %c0_i32, %c0_i32_0 : i32, i32
  }
  func.func @transform_3(%arg0: i32) -> (i32, i32) {
    %c0_i32 = arith.constant 0 : i32
    %c0_i32_0 = arith.constant 0 : i32
    %c0_i32_1 = arith.constant 0 : i32
    return %c0_i32, %c0_i32_0 : i32, i32
  }
  func.func @transform_4(%arg0: i32) -> (i32, i32) {
    %c0_i32 = arith.constant 0 : i32
    %c0_i32_0 = arith.constant 0 : i32
    %c0_i32_1 = arith.constant 0 : i32
    return %c0_i32, %c0_i32_0 : i32, i32
  }
  func.func @transform_5(%arg0: i32) -> (i32, i32) {
    %c0_i32 = arith.constant 0 : i32
    %c0_i32_0 = arith.constant 0 : i32
    %c0_i32_1 = arith.constant 0 : i32
    return %c0_i32, %c0_i32_0 : i32, i32
  }
  func.func @transform_6(%arg0: i32) -> (i32, i32) {
    %c0_i32 = arith.constant 0 : i32
    %c0_i32_0 = arith.constant 0 : i32
    %c0_i32_1 = arith.constant 0 : i32
    return %c0_i32, %c0_i32_0 : i32, i32
  }
  func.func @transform_7(%arg0: i32) -> (i32, i32) {
    %c0_i32 = arith.constant 0 : i32
    %c0_i32_0 = arith.constant 0 : i32
    %c0_i32_1 = arith.constant 0 : i32
    return %c0_i32, %c0_i32_0 : i32, i32
  }
  func.func @transform_8(%arg0: i32) -> (i32, i32) {
    %c0_i32 = arith.constant 0 : i32
    %c0_i32_0 = arith.constant 0 : i32
    %c0_i32_1 = arith.constant 0 : i32
    return %c0_i32, %c0_i32_0 : i32, i32
  }
  func.func @transform_9(%arg0: i32) -> (i32, i32) {
    %c0_i32 = arith.constant 0 : i32
    %c0_i32_0 = arith.constant 0 : i32
    %c0_i32_1 = arith.constant 0 : i32
    return %c0_i32, %c0_i32_0 : i32, i32
  }
  func.func @transform_10(%arg0: i32) -> (i32, i32) {
    %c0_i32 = arith.constant 0 : i32
    %c0_i32_0 = arith.constant 0 : i32
    %c0_i32_1 = arith.constant 0 : i32
    return %c0_i32, %c0_i32_0 : i32, i32
  }
  func.func @transform_11(%arg0: i32) -> (i32, i32) {
    %c0_i32 = arith.constant 0 : i32
    %c0_i32_0 = arith.constant 0 : i32
    %c0_i32_1 = arith.constant 0 : i32
    return %c0_i32, %c0_i32_0 : i32, i32
  }
  func.func @transform_12(%arg0: i32) -> (i32, i32) {
    %c0_i32 = arith.constant 0 : i32
    %c0_i32_0 = arith.constant 0 : i32
    %c0_i32_1 = arith.constant 0 : i32
    return %c0_i32, %c0_i32_0 : i32, i32
  }
  func.func @transform_13(%arg0: i32) -> (i32, i32) {
    %c0_i32 = arith.constant 0 : i32
    %c0_i32_0 = arith.constant 0 : i32
    %c0_i32_1 = arith.constant 0 : i32
    return %c0_i32, %c0_i32_0 : i32, i32
  }
  func.func @transform_14(%arg0: i32) -> (i32, i32) {
    %c0_i32 = arith.constant 0 : i32
    %c0_i32_0 = arith.constant 0 : i32
    %c0_i32_1 = arith.constant 0 : i32
    return %c0_i32, %c0_i32_0 : i32, i32
  }
  func.func @transform_15(%arg0: i32) -> (i32, i32) {
    %c0_i32 = arith.constant 0 : i32
    %c0_i32_0 = arith.constant 0 : i32
    %c0_i32_1 = arith.constant 0 : i32
    return %c0_i32, %c0_i32_0 : i32, i32
  }
  func.func @transform_16(%arg0: i32) -> (i32, i32) {
    %c0_i32 = arith.constant 0 : i32
    %c0_i32_0 = arith.constant 0 : i32
    %c0_i32_1 = arith.constant 0 : i32
    return %c0_i32, %c0_i32_0 : i32, i32
  }
  func.func @transform_17(%arg0: i32) -> (i32, i32) {
    %c0_i32 = arith.constant 0 : i32
    %c0_i32_0 = arith.constant 0 : i32
    %c0_i32_1 = arith.constant 0 : i32
    return %c0_i32, %c0_i32_0 : i32, i32
  }
  func.func @transform_18(%arg0: i32) -> (i32, i32) {
    %c0_i32 = arith.constant 0 : i32
    %c0_i32_0 = arith.constant 0 : i32
    %c0_i32_1 = arith.constant 0 : i32
    return %c0_i32, %c0_i32_0 : i32, i32
  }
  func.func @transform_19(%arg0: i32) -> (i32, i32) {
    %c0_i32 = arith.constant 0 : i32
    %c0_i32_0 = arith.constant 0 : i32
    %c0_i32_1 = arith.constant 0 : i32
    return %c0_i32, %c0_i32_0 : i32, i32
  }
  func.func @transform_20(%arg0: i32) -> (i32, i32) {
    %c0_i32 = arith.constant 0 : i32
    %c0_i32_0 = arith.constant 0 : i32
    %c0_i32_1 = arith.constant 0 : i32
    return %c0_i32, %c0_i32_0 : i32, i32
  }
  func.func @transform_21(%arg0: i32) -> (i32, i32) {
    %c0_i32 = arith.constant 0 : i32
    %c0_i32_0 = arith.constant 0 : i32
    %c0_i32_1 = arith.constant 0 : i32
    return %c0_i32, %c0_i32_0 : i32, i32
  }
  func.func @transform_22(%arg0: i32) -> (i32, i32) {
    %c0_i32 = arith.constant 0 : i32
    %c0_i32_0 = arith.constant 0 : i32
    %c0_i32_1 = arith.constant 0 : i32
    return %c0_i32, %c0_i32_0 : i32, i32
  }
  func.func @transform_23(%arg0: i32) -> (i32, i32) {
    %c0_i32 = arith.constant 0 : i32
    %c0_i32_0 = arith.constant 0 : i32
    return %arg0, %c0_i32 : i32, i32
  }
}

</mosaic_0001>

<llo_original>
// kernel: _attack_pallas.1
$region0: #{_attack_pallas.1}
  #allocation0 [shape = 'u32[]', space=smem, size = 0x4, offset = 0x4, fixed_abs, tag = 'smem constant byte address 0x4 - core index']
  #allocation1 [shape = 'u32[144,128]{1,0:T(1,128)}', space=vmem, size = 0x12000, scoped, tag = 'internal scratch']
  #allocation2 [shape = 'f32[1,1]{1,0:T(1,128)S(1)}', space=vmem, size = 0x200, scoped, tag = 'scoped memory for _attack_pallas.1']
  %s0 = inlined_call_operand.vmem [shape: f32[8,128], index: 0, kind: input, shape index: {}]
  %s1 = inlined_call_operand.vmem [shape: f32[8,128], index: 1, kind: input, shape index: {}]
  %s2 = inlined_call_operand.vmem [shape: bf16[128,1024], index: 2, kind: input, shape index: {}]
  %s3 = inlined_call_operand.hbm [shape: f32[1,1024], index: 3, kind: input, shape index: {}]
  %s4 = inlined_call_operand.hbm [shape: bf16[1024,512], index: 4, kind: input, shape index: {}]
  %s5 = inlined_call_operand.hbm [shape: f32[1,512], index: 5, kind: input, shape index: {}]
  %s6 = inlined_call_operand.vmem [shape: bf16[512,64], index: 6, kind: input, shape index: {}]
  %s7 = inlined_call_operand.hbm [shape: f32[1,64], index: 7, kind: input, shape index: {}]
  %s8 = inlined_call_operand.hbm [shape: bf16[128,128], index: 8, kind: input, shape index: {}]
  %s9 = inlined_call_operand.hbm [shape: f32[1,128], index: 9, kind: input, shape index: {}]
  %s10 = inlined_call_operand.vmem [shape: bf16[128,64], index: 10, kind: input, shape index: {}]
  %s11 = inlined_call_operand.hbm [shape: f32[1,64], index: 11, kind: input, shape index: {}]
  %s12 = inlined_call_operand.hbm [shape: bf16[64,512], index: 12, kind: input, shape index: {}]
  %s13 = inlined_call_operand.hbm [shape: bf16[64,512], index: 13, kind: input, shape index: {}]
  %s14 = inlined_call_operand.hbm [shape: f32[1,512], index: 14, kind: input, shape index: {}]
  %s15 = inlined_call_operand.hbm [shape: bf16[512,256], index: 15, kind: input, shape index: {}]
  %s16 = inlined_call_operand.vmem [shape: f32[1,256], index: 16, kind: input, shape index: {}]
  %s17 = inlined_call_operand.hbm [shape: bf16[256,128], index: 17, kind: input, shape index: {}]
  %s18 = inlined_call_operand.vmem [shape: f32[1,128], index: 18, kind: input, shape index: {}]
  %s19 = inlined_call_operand.vmem [shape: bf16[128,64], index: 19, kind: input, shape index: {}]
  %s20 = inlined_call_operand.vmem [shape: f32[1,64], index: 20, kind: input, shape index: {}]
  %s21 = inlined_call_operand.vmem [shape: f32[1,64], index: 21, kind: input, shape index: {}]
  %s22 = inlined_call_operand.<no memory space> [shape: f32[1,1], index: 22, kind: input, shape index: {}]
  %s23 = inlined_call_operand.vmem [shape: f32[8,1], index: 23, kind: output, shape index: {}]
  %s24 = sld [smem:[#allocation0]]
  $region150: #{_attack_pallas.1} parent=0
    _
  %s26 = ssub.s32 1, %s24
  %s27 = scalar_select 0, %s26, %s24
  %v28 = vstv %s22
  %29 = vst [vmem:[#allocation2] sm:$0x1] %v28
  $region1: #{_attack_pallas.1} parent=0
    #allocation3 [shape = 'u8[4096]{0}', space=vmem, size = 0x1000, scoped, tag = 'input window, operand 3, single buffered']
    #allocation4 [shape = 's32[1]{0}', space=sflag, size = 0x4, scoped, tag = 'scoped memory for _attack_pallas.1']
    #allocation5 [shape = 'u8[1048576]{0}', space=vmem, size = 0x100000, scoped, tag = 'input window, operand 4, single buffered']
    #allocation6 [shape = 's32[1]{0}', space=sflag, size = 0x4, scoped, tag = 'scoped memory for _attack_pallas.1']
    #allocation7 [shape = 'u8[2048]{0}', space=vmem, size = 0x800, scoped, tag = 'input window, operand 5, single buffered']
    #allocation8 [shape = 'u8[512]{0}', space=vmem, size = 0x400, scoped, tag = 'input window, operand 7, single buffered']
    #allocation9 [shape = 's32[1]{0}', space=sflag, size = 0x4, scoped, tag = 'scoped memory for _attack_pallas.1']
    #allocation10 [shape = 'u8[32768]{0}', space=vmem, size = 0x8000, scoped, tag = 'input window, operand 8, single buffered']
    #allocation11 [shape = 'u8[512]{0}', space=vmem, size = 0x400, scoped, tag = 'input window, operand 9, single buffered']
    #allocation12 [shape = 's32[1]{0}', space=sflag, size = 0x4, scoped, tag = 'scoped memory for _attack_pallas.1']
    #allocation13 [shape = 'u8[512]{0}', space=vmem, size = 0x400, scoped, tag = 'input window, operand 11, single buffered']
    #allocation14 [shape = 'u8[65536]{0}', space=vmem, size = 0x10000, scoped, tag = 'input window, operand 12, single buffered']
    #allocation15 [shape = 's32[1]{0}', space=sflag, size = 0x4, scoped, tag = 'scoped memory for _attack_pallas.1']
    #allocation16 [shape = 'u8[65536]{0}', space=vmem, size = 0x10000, scoped, tag = 'input window, operand 13, single buffered']
    #allocation17 [shape = 'u8[2048]{0}', space=vmem, size = 0x800, scoped, tag = 'input window, operand 14, single buffered']
    #allocation18 [shape = 's32[1]{0}', space=sflag, size = 0x4, scoped, tag = 'scoped memory for _attack_pallas.1']
    #allocation19 [shape = 'u8[262144]{0}', space=vmem, size = 0x40000, scoped, tag = 'input window, operand 15, single buffered']
    #allocation20 [shape = 'u8[65536]{0}', space=vmem, size = 0x10000, scoped, tag = 'input window, operand 17, single buffered']
    #allocation21 [shape = 's32[1]{0}', space=sflag, size = 0x4, scoped, tag = 'scoped memory for _attack_pallas.1']
    %30 = vsyncpa [#allocation4], 0
    %31 = vsyncpa [#allocation6], 0
    %32 = vsyncpa [#allocation9], 0
    %33 = vsyncpa [#allocation12], 0
    %34 = vsyncpa [#allocation15], 0
    %35 = vsyncpa [#allocation18], 0
    %36 = vsyncpa [#allocation21], 0
    // Predicated region
    $region2: #{_attack_pallas.1} parent=1 // pred_check
      _
    $region3: #{_attack_pallas.1} parent=1 // pred_check_branch
      %38 = sbr.rel (0) target = $region5
    $region4: #{_attack_pallas.1} parent=1 // pred_region
      _
    $region5: #{_attack_pallas.1} parent=1 // pred_fallthru
      _
    // Predicated region
    $region6: #{_attack_pallas.1} parent=1 // pred_check
      _
    $region7: #{_attack_pallas.1} parent=1 // pred_check_branch
      %40 = sbr.rel (0) target = $region9
    $region8: #{_attack_pallas.1} parent=1 // pred_region
      _
    $region9: #{_attack_pallas.1} parent=1 // pred_fallthru
      _
    // Predicated region
    $region10: #{_attack_pallas.1} parent=1 // pred_check
      _
    $region11: #{_attack_pallas.1} parent=1 // pred_check_branch
      %42 = sbr.rel (0) target = $region13
    $region12: #{_attack_pallas.1} parent=1 // pred_region
      _
    $region13: #{_attack_pallas.1} parent=1 // pred_fallthru
      _
    // Predicated region
    $region14: #{_attack_pallas.1} parent=1 // pred_check
      _
    $region15: #{_attack_pallas.1} parent=1 // pred_check_branch
      %44 = sbr.rel (0) target = $region17
    $region16: #{_attack_pallas.1} parent=1 // pred_region
      %s46 = ssub.s32 128, 128
      %47 = vsyncadd [#allocation4], %s46
      %s49 = sshll.u32 [#allocation3], 4
      %s50 = int_to_ptr.vmem [resolvable:$true] %s49
      %52 = dma.hbm_to_vmem [thread:$0]  %s3, 128, %s50, [#allocation4]
    $region17: #{_attack_pallas.1} parent=1 // pred_fallthru
      _
    // Predicated region
    $region18: #{_attack_pallas.1} parent=1 // pred_check
      _
    $region19: #{_attack_pallas.1} parent=1 // pred_check_branch
      %54 = sbr.rel (0) target = $region21
    $region20: #{_attack_pallas.1} parent=1 // pred_region
      %s56 = ssub.s32 32768, 32768
      %57 = vsyncadd [#allocation6], %s56
      %s58 = sshll.u32 [#allocation5], 4
      %s59 = int_to_ptr.vmem [resolvable:$true] %s58
      %64 = dma.hbm_to_vmem [thread:$0]  %s4, 32768, %s59, [#allocation6], 256, 256, 16
    $region21: #{_attack_pallas.1} parent=1 // pred_fallthru
      _
    // Predicated region
    $region22: #{_attack_pallas.1} parent=1 // pred_check
      _
    $region23: #{_attack_pallas.1} parent=1 // pred_check_branch
      %66 = sbr.rel (0) target = $region25
    $region24: #{_attack_pallas.1} parent=1 // pred_region
      %s68 = ssub.s32 64, 64
      %69 = vsyncadd [#allocation6], %s68
      %s71 = sshll.u32 [#allocation7], 4
      %s72 = int_to_ptr.vmem [resolvable:$true] %s71
      %74 = dma.hbm_to_vmem [thread:$0]  %s5, 64, %s72, [#allocation6]
    $region25: #{_attack_pallas.1} parent=1 // pred_fallthru
      _
    // Predicated region
    $region26: #{_attack_pallas.1} parent=1 // pred_check
      _
    $region27: #{_attack_pallas.1} parent=1 // pred_check_branch
      %76 = sbr.rel (0) target = $region29
    $region28: #{_attack_pallas.1} parent=1 // pred_region
      _
    $region29: #{_attack_pallas.1} parent=1 // pred_fallthru
      _
    // Predicated region
    $region30: #{_attack_pallas.1} parent=1 // pred_check
      _
    $region31: #{_attack_pallas.1} parent=1 // pred_check_branch
      %78 = sbr.rel (0) target = $region33
    $region32: #{_attack_pallas.1} parent=1 // pred_region
      %s80 = ssub.s32 16, 16
      %81 = vsyncadd [#allocation9], %s80
      %s83 = sshll.u32 [#allocation8], 4
      %s84 = int_to_ptr.vmem [resolvable:$true] %s83
      %86 = dma.hbm_to_vmem [thread:$0]  %s7, 16, %s84, [#allocation9]
    $region33: #{_attack_pallas.1} parent=1 // pred_fallthru
      _
    // Predicated region
    $region34: #{_attack_pallas.1} parent=1 // pred_check
      _
    $region35: #{_attack_pallas.1} parent=1 // pred_check_branch
      %88 = sbr.rel (0) target = $region37
    $region36: #{_attack_pallas.1} parent=1 // pred_region
      %s90 = ssub.s32 1024, 1024
      %91 = vsyncadd [#allocation9], %s90
      %s92 = sshll.u32 [#allocation10], 4
      %s93 = int_to_ptr.vmem [resolvable:$true] %s92
      %98 = dma.hbm_to_vmem [thread:$0]  %s8, 1024, %s93, [#allocation9], 64, 64, 4
    $region37: #{_attack_pallas.1} parent=1 // pred_fallthru
      _
    // Predicated region
    $region38: #{_attack_pallas.1} parent=1 // pred_check
      _
    $region39: #{_attack_pallas.1} parent=1 // pred_check_branch
      %100 = sbr.rel (0) target = $region41
    $region40: #{_attack_pallas.1} parent=1 // pred_region
      %s102 = ssub.s32 16, 16
      %103 = vsyncadd [#allocation12], %s102
      %s105 = sshll.u32 [#allocation11], 4
      %s106 = int_to_ptr.vmem [resolvable:$true] %s105
      %108 = dma.hbm_to_vmem [thread:$0]  %s9, 16, %s106, [#allocation12]
    $region41: #{_attack_pallas.1} parent=1 // pred_fallthru
      _
    // Predicated region
    $region42: #{_attack_pallas.1} parent=1 // pred_check
      _
    $region43: #{_attack_pallas.1} parent=1 // pred_check_branch
      %110 = sbr.rel (0) target = $region45
    $region44: #{_attack_pallas.1} parent=1 // pred_region
      _
    $region45: #{_attack_pallas.1} parent=1 // pred_fallthru
      _
    // Predicated region
    $region46: #{_attack_pallas.1} parent=1 // pred_check
      _
    $region47: #{_attack_pallas.1} parent=1 // pred_check_branch
      %112 = sbr.rel (0) target = $region49
    $region48: #{_attack_pallas.1} parent=1 // pred_region
      %s114 = ssub.s32 16, 16
      %115 = vsyncadd [#allocation12], %s114
      %s117 = sshll.u32 [#allocation13], 4
      %s118 = int_to_ptr.vmem [resolvable:$true] %s117
      %120 = dma.hbm_to_vmem [thread:$0]  %s11, 16, %s118, [#allocation12]
    $region49: #{_attack_pallas.1} parent=1 // pred_fallthru
      _
    // Predicated region
    $region50: #{_attack_pallas.1} parent=1 // pred_check
      _
    $region51: #{_attack_pallas.1} parent=1 // pred_check_branch
      %122 = sbr.rel (0) target = $region53
    $region52: #{_attack_pallas.1} parent=1 // pred_region
      %s124 = ssub.s32 2048, 2048
      %125 = vsyncadd [#allocation15], %s124
      %s126 = sshll.u32 [#allocation14], 4
      %s127 = int_to_ptr.vmem [resolvable:$true] %s126
      %132 = dma.hbm_to_vmem [thread:$0]  %s12, 2048, %s127, [#allocation15], 256, 256, 16
    $region53: #{_attack_pallas.1} parent=1 // pred_fallthru
      _
    // Predicated region
    $region54: #{_attack_pallas.1} parent=1 // pred_check
      _
    $region55: #{_attack_pallas.1} parent=1 // pred_check_branch
      %134 = sbr.rel (0) target = $region57
    $region56: #{_attack_pallas.1} parent=1 // pred_region
      %s136 = ssub.s32 2048, 2048
      %137 = vsyncadd [#allocation15], %s136
      %s138 = sshll.u32 [#allocation16], 4
      %s139 = int_to_ptr.vmem [resolvable:$true] %s138
      %144 = dma.hbm_to_vmem [thread:$0]  %s13, 2048, %s139, [#allocation15], 256, 256, 16
    $region57: #{_attack_pallas.1} parent=1 // pred_fallthru
      _
    // Predicated region
    $region58: #{_attack_pallas.1} parent=1 // pred_check
      _
    $region59: #{_attack_pallas.1} parent=1 // pred_check_branch
      %146 = sbr.rel (0) target = $region61
    $region60: #{_attack_pallas.1} parent=1 // pred_region
      %s148 = ssub.s32 64, 64
      %149 = vsyncadd [#allocation18], %s148
      %s151 = sshll.u32 [#allocation17], 4
      %s152 = int_to_ptr.vmem [resolvable:$true] %s151
      %154 = dma.hbm_to_vmem [thread:$0]  %s14, 64, %s152, [#allocation18]
    $region61: #{_attack_pallas.1} parent=1 // pred_fallthru
      _
    // Predicated region
    $region62: #{_attack_pallas.1} parent=1 // pred_check
      _
    $region63: #{_attack_pallas.1} parent=1 // pred_check_branch
      %156 = sbr.rel (0) target = $region65
    $region64: #{_attack_pallas.1} parent=1 // pred_region
      %s158 = ssub.s32 8192, 8192
      %159 = vsyncadd [#allocation18], %s158
      %s160 = sshll.u32 [#allocation19], 4
      %s161 = int_to_ptr.vmem [resolvable:$true] %s160
      %166 = dma.hbm_to_vmem [thread:$0]  %s15, 8192, %s161, [#allocation18], 128, 128, 8
    $region65: #{_attack_pallas.1} parent=1 // pred_fallthru
      _
    // Predicated region
    $region66: #{_attack_pallas.1} parent=1 // pred_check
      _
    $region67: #{_attack_pallas.1} parent=1 // pred_check_branch
      %168 = sbr.rel (0) target = $region69
    $region68: #{_attack_pallas.1} parent=1 // pred_region
      _
    $region69: #{_attack_pallas.1} parent=1 // pred_fallthru
      _
    // Predicated region
    $region70: #{_attack_pallas.1} parent=1 // pred_check
      _
    $region71: #{_attack_pallas.1} parent=1 // pred_check_branch
      %170 = sbr.rel (0) target = $region73
    $region72: #{_attack_pallas.1} parent=1 // pred_region
      %s172 = ssub.s32 2048, 2048
      %173 = vsyncadd [#allocation21], %s172
      %s174 = sshll.u32 [#allocation20], 4
      %s175 = int_to_ptr.vmem [resolvable:$true] %s174
      %180 = dma.hbm_to_vmem [thread:$0]  %s17, 2048, %s175, [#allocation21], 64, 64, 4
    $region73: #{_attack_pallas.1} parent=1 // pred_fallthru
      _
    // Predicated region
    $region74: #{_attack_pallas.1} parent=1 // pred_check
      _
    $region75: #{_attack_pallas.1} parent=1 // pred_check_branch
      %182 = sbr.rel (0) target = $region77
    $region76: #{_attack_pallas.1} parent=1 // pred_region
      _
    $region77: #{_attack_pallas.1} parent=1 // pred_fallthru
      _
    // Predicated region
    $region78: #{_attack_pallas.1} parent=1 // pred_check
      _
    $region79: #{_attack_pallas.1} parent=1 // pred_check_branch
      %184 = sbr.rel (0) target = $region81
    $region80: #{_attack_pallas.1} parent=1 // pred_region
      _
    $region81: #{_attack_pallas.1} parent=1 // pred_fallthru
      _
    // Predicated region
    $region82: #{_attack_pallas.1} parent=1 // pred_check
      _
    $region83: #{_attack_pallas.1} parent=1 // pred_check_branch
      %186 = sbr.rel (0) target = $region85
    $region84: #{_attack_pallas.1} parent=1 // pred_region
      _
    $region85: #{_attack_pallas.1} parent=1 // pred_fallthru
      _
    // Predicated region
    $region86: #{_attack_pallas.1} parent=1 // pred_check
      _
    $region87: #{_attack_pallas.1} parent=1 // pred_check_branch
      %188 = sbr.rel (0) target = $region89
    $region88: #{_attack_pallas.1} parent=1 // pred_region
      _
    $region89: #{_attack_pallas.1} parent=1 // pred_fallthru
      _
    // Predicated region
    $region90: #{_attack_pallas.1} parent=1 // pred_check
      _
    $region91: #{_attack_pallas.1} parent=1 // pred_check_branch
      %190 = sbr.rel (0) target = $region93
    $region92: #{_attack_pallas.1} parent=1 // pred_region
      _
    $region93: #{_attack_pallas.1} parent=1 // pred_fallthru
      _
    // Predicated region
    $region94: #{_attack_pallas.1} parent=1 // pred_check
      _
    $region95: #{_attack_pallas.1} parent=1 // pred_check_branch
      %192 = sbr.rel (0) target = $region97
    $region96: #{_attack_pallas.1} parent=1 // pred_region
      %193 = dma.done [#allocation4], 128
    $region97: #{_attack_pallas.1} parent=1 // pred_fallthru
      _
    // Predicated region
    $region98: #{_attack_pallas.1} parent=1 // pred_check
      _
    $region99: #{_attack_pallas.1} parent=1 // pred_check_branch
      %195 = sbr.rel (0) target = $region101
    $region100: #{_attack_pallas.1} parent=1 // pred_region
      %196 = dma.done [#allocation6], 32768
    $region101: #{_attack_pallas.1} parent=1 // pred_fallthru
      _
    // Predicated region
    $region102: #{_attack_pallas.1} parent=1 // pred_check
      _
    $region103: #{_attack_pallas.1} parent=1 // pred_check_branch
      %198 = sbr.rel (0) target = $region105
    $region104: #{_attack_pallas.1} parent=1 // pred_region
      %199 = dma.done [#allocation6], 64
    $region105: #{_attack_pallas.1} parent=1 // pred_fallthru
      _
    // Predicated region
    $region106: #{_attack_pallas.1} parent=1 // pred_check
      _
    $region107: #{_attack_pallas.1} parent=1 // pred_check_branch
      %201 = sbr.rel (0) target = $region109
    $region108: #{_attack_pallas.1} parent=1 // pred_region
      %202 = dma.done [#allocation9], 16
    $region109: #{_attack_pallas.1} parent=1 // pred_fallthru
      _
    // Predicated region
    $region110: #{_attack_pallas.1} parent=1 // pred_check
      _
    $region111: #{_attack_pallas.1} parent=1 // pred_check_branch
      %204 = sbr.rel (0) target = $region113
    $region112: #{_attack_pallas.1} parent=1 // pred_region
      %205 = dma.done [#allocation9], 1024
    $region113: #{_attack_pallas.1} parent=1 // pred_fallthru
      _
    // Predicated region
    $region114: #{_attack_pallas.1} parent=1 // pred_check
      _
    $region115: #{_attack_pallas.1} parent=1 // pred_check_branch
      %207 = sbr.rel (0) target = $region117
    $region116: #{_attack_pallas.1} parent=1 // pred_region
      %208 = dma.done [#allocation12], 16
    $region117: #{_attack_pallas.1} parent=1 // pred_fallthru
      _
    // Predicated region
    $region118: #{_attack_pallas.1} parent=1 // pred_check
      _
    $region119: #{_attack_pallas.1} parent=1 // pred_check_branch
      %210 = sbr.rel (0) target = $region121
    $region120: #{_attack_pallas.1} parent=1 // pred_region
      %211 = dma.done [#allocation12], 16
    $region121: #{_attack_pallas.1} parent=1 // pred_fallthru
      _
    // Predicated region
    $region122: #{_attack_pallas.1} parent=1 // pred_check
      _
    $region123: #{_attack_pallas.1} parent=1 // pred_check_branch
      %213 = sbr.rel (0) target = $region125
    $region124: #{_attack_pallas.1} parent=1 // pred_region
      %214 = dma.done [#allocation15], 2048
    $region125: #{_attack_pallas.1} parent=1 // pred_fallthru
      _
    // Predicated region
    $region126: #{_attack_pallas.1} parent=1 // pred_check
      _
    $region127: #{_attack_pallas.1} parent=1 // pred_check_branch
      %216 = sbr.rel (0) target = $region129
    $region128: #{_attack_pallas.1} parent=1 // pred_region
      %217 = dma.done [#allocation15], 2048
    $region129: #{_attack_pallas.1} parent=1 // pred_fallthru
      _
    // Predicated region
    $region130: #{_attack_pallas.1} parent=1 // pred_check
      _
    $region131: #{_attack_pallas.1} parent=1 // pred_check_branch
      %219 = sbr.rel (0) target = $region133
    $region132: #{_attack_pallas.1} parent=1 // pred_region
      %220 = dma.done [#allocation18], 64
    $region133: #{_attack_pallas.1} parent=1 // pred_fallthru
      _
    // Predicated region
    $region134: #{_attack_pallas.1} parent=1 // pred_check
      _
    $region135: #{_attack_pallas.1} parent=1 // pred_check_branch
      %222 = sbr.rel (0) target = $region137
    $region136: #{_attack_pallas.1} parent=1 // pred_region
      %223 = dma.done [#allocation18], 8192
    $region137: #{_attack_pallas.1} parent=1 // pred_fallthru
      _
    // Predicated region
    $region138: #{_attack_pallas.1} parent=1 // pred_check
      _
    $region139: #{_attack_pallas.1} parent=1 // pred_check_branch
      %225 = sbr.rel (0) target = $region141
    $region140: #{_attack_pallas.1} parent=1 // pred_region
      %226 = dma.done [#allocation21], 2048
    $region141: #{_attack_pallas.1} parent=1 // pred_fallthru
      _
    %v228 = vld [vmem:[%s0] sm:$0xff]
    %v229 = vpack.c.bf16 %v228, %v228
    %v230 = vld [vmem:[%s2] sm:$0xff]
    %v231 = vld [vmem:[%s2 + $0x8] sm:$0xff]
    %v232 = vld [vmem:[%s2 + $0x10] sm:$0xff]
    %v233 = vld [vmem:[%s2 + $0x18] sm:$0xff]
    %v234 = vld [vmem:[%s2 + $0x20] sm:$0xff]
    %v235 = vld [vmem:[%s2 + $0x28] sm:$0xff]
    %v236 = vld [vmem:[%s2 + $0x30] sm:$0xff]
    %v237 = vld [vmem:[%s2 + $0x38] sm:$0xff]
    %v238 = vld [vmem:[%s2 + $0x40] sm:$0xff]
    %v239 = vld [vmem:[%s2 + $0x48] sm:$0xff]
    %v240 = vld [vmem:[%s2 + $0x50] sm:$0xff]
    %v241 = vld [vmem:[%s2 + $0x58] sm:$0xff]
    %v242 = vld [vmem:[%s2 + $0x60] sm:$0xff]
    %v243 = vld [vmem:[%s2 + $0x68] sm:$0xff]
    %v244 = vld [vmem:[%s2 + $0x70] sm:$0xff]
    %v245 = vld [vmem:[%s2 + $0x78] sm:$0xff]
    %v246 = vld [vmem:[%s2 + $0x80] sm:$0xff]
    %v247 = vld [vmem:[%s2 + $0x88] sm:$0xff]
    %v248 = vld [vmem:[%s2 + $0x90] sm:$0xff]
    %v249 = vld [vmem:[%s2 + $0x98] sm:$0xff]
    %v250 = vld [vmem:[%s2 + $0xa0] sm:$0xff]
    %v251 = vld [vmem:[%s2 + $0xa8] sm:$0xff]
    %v252 = vld [vmem:[%s2 + $0xb0] sm:$0xff]
    %v253 = vld [vmem:[%s2 + $0xb8] sm:$0xff]
    %v254 = vld [vmem:[%s2 + $0xc0] sm:$0xff]
    %v255 = vld [vmem:[%s2 + $0xc8] sm:$0xff]
    %v256 = vld [vmem:[%s2 + $0xd0] sm:$0xff]
    %v257 = vld [vmem:[%s2 + $0xd8] sm:$0xff]
    %v258 = vld [vmem:[%s2 + $0xe0] sm:$0xff]
    %v259 = vld [vmem:[%s2 + $0xe8] sm:$0xff]
    %v260 = vld [vmem:[%s2 + $0xf0] sm:$0xff]
    %v261 = vld [vmem:[%s2 + $0xf8] sm:$0xff]
    %v262 = vld [vmem:[%s2 + $0x100] sm:$0xff]
    %v263 = vld [vmem:[%s2 + $0x108] sm:$0xff]
    %v264 = vld [vmem:[%s2 + $0x110] sm:$0xff]
    %v265 = vld [vmem:[%s2 + $0x118] sm:$0xff]
    %v266 = vld [vmem:[%s2 + $0x120] sm:$0xff]
    %v267 = vld [vmem:[%s2 + $0x128] sm:$0xff]
    %v268 = vld [vmem:[%s2 + $0x130] sm:$0xff]
    %v269 = vld [vmem:[%s2 + $0x138] sm:$0xff]
    %v270 = vld [vmem:[%s2 + $0x140] sm:$0xff]
    %v271 = vld [vmem:[%s2 + $0x148] sm:$0xff]
    %v272 = vld [vmem:[%s2 + $0x150] sm:$0xff]
    %v273 = vld [vmem:[%s2 + $0x158] sm:$0xff]
    %v274 = vld [vmem:[%s2 + $0x160] sm:$0xff]
    %v275 = vld [vmem:[%s2 + $0x168] sm:$0xff]
    %v276 = vld [vmem:[%s2 + $0x170] sm:$0xff]
    %v277 = vld [vmem:[%s2 + $0x178] sm:$0xff]
    %v278 = vld [vmem:[%s2 + $0x180] sm:$0xff]
    %v279 = vld [vmem:[%s2 + $0x188] sm:$0xff]
    %v280 = vld [vmem:[%s2 + $0x190] sm:$0xff]
    %v281 = vld [vmem:[%s2 + $0x198] sm:$0xff]
    %v282 = vld [vmem:[%s2 + $0x1a0] sm:$0xff]
    %v283 = vld [vmem:[%s2 + $0x1a8] sm:$0xff]
    %v284 = vld [vmem:[%s2 + $0x1b0] sm:$0xff]
    %v285 = vld [vmem:[%s2 + $0x1b8] sm:$0xff]
    %v286 = vld [vmem:[%s2 + $0x1c0] sm:$0xff]
    %v287 = vld [vmem:[%s2 + $0x1c8] sm:$0xff]
    %v288 = vld [vmem:[%s2 + $0x1d0] sm:$0xff]
    %v289 = vld [vmem:[%s2 + $0x1d8] sm:$0xff]
    %v290 = vld [vmem:[%s2 + $0x1e0] sm:$0xff]
    %v291 = vld [vmem:[%s2 + $0x1e8] sm:$0xff]
    %v292 = vld [vmem:[%s2 + $0x1f0] sm:$0xff]
    %v293 = vld [vmem:[%s2 + $0x1f8] sm:$0xff]
    %v294 = vld [vmem:[#allocation3] sm:$0xff]
    %v296 = vlaneseq
    %v297 = vshrl.u32 %v296, 7
    %v298 = vsub.s32 0, %v297
    %v299 = vrot.slane %v294, %v298
    %v300 = vlaneseq
    %v301 = vshrl.u32 %v300, 7
    %v302 = vsub.s32 1, %v301
    %v303 = vrot.slane %v294, %v302
    %v304 = vlaneseq
    %v305 = vshrl.u32 %v304, 7
    %v306 = vsub.s32 2, %v305
    %v307 = vrot.slane %v294, %v306
    %v308 = vlaneseq
    %v309 = vshrl.u32 %v308, 7
    %v310 = vsub.s32 3, %v309
    %v311 = vrot.slane %v294, %v310
    %v312 = vlaneseq
    %v313 = vshrl.u32 %v312, 7
    %v314 = vsub.s32 4, %v313
    %v315 = vrot.slane %v294, %v314
    %v316 = vlaneseq
    %v317 = vshrl.u32 %v316, 7
    %v318 = vsub.s32 5, %v317
    %v319 = vrot.slane %v294, %v318
    %v320 = vlaneseq
    %v321 = vshrl.u32 %v320, 7
    %v322 = vsub.s32 6, %v321
    %v323 = vrot.slane %v294, %v322
    %v324 = vlaneseq
    %v325 = vshrl.u32 %v324, 7
    %v326 = vsub.s32 7, %v325
    %v327 = vrot.slane %v294, %v326
    %v400 = vunpack.c.l.b16 %v230
    %v401 = vunpack.c.h.b16 %v230
    %v402 = vunpack.c.l.b16 %v231
    %v403 = vunpack.c.h.b16 %v231
    %v404 = vunpack.c.l.b16 %v232
    %v405 = vunpack.c.h.b16 %v232
    %v406 = vunpack.c.l.b16 %v233
    %v407 = vunpack.c.h.b16 %v233
    %v408 = vunpack.c.l.b16 %v234
    %v409 = vunpack.c.h.b16 %v234
    %v410 = vunpack.c.l.b16 %v235
    %v411 = vunpack.c.h.b16 %v235
    %v412 = vunpack.c.l.b16 %v236
    %v413 = vunpack.c.h.b16 %v236
    %v414 = vunpack.c.l.b16 %v237
    %v415 = vunpack.c.h.b16 %v237
    %v416 = vunpack.c.l.b16 %v238
    %v417 = vunpack.c.h.b16 %v238
    %v418 = vunpack.c.l.b16 %v239
    %v419 = vunpack.c.h.b16 %v239
    %v420 = vunpack.c.l.b16 %v240
    %v421 = vunpack.c.h.b16 %v240
    %v422 = vunpack.c.l.b16 %v241
    %v423 = vunpack.c.h.b16 %v241
    %v424 = vunpack.c.l.b16 %v242
    %v425 = vunpack.c.h.b16 %v242
    %v426 = vunpack.c.l.b16 %v243
    %v427 = vunpack.c.h.b16 %v243
    %v428 = vunpack.c.l.b16 %v244
    %v429 = vunpack.c.h.b16 %v244
    %v430 = vunpack.c.l.b16 %v245
    %v431 = vunpack.c.h.b16 %v245
    %v432 = vunpack.c.l.b16 %v246
    %v433 = vunpack.c.h.b16 %v246
    %v434 = vunpack.c.l.b16 %v247
    %v435 = vunpack.c.h.b16 %v247
    %v436 = vunpack.c.l.b16 %v248
    %v437 = vunpack.c.h.b16 %v248
    %v438 = vunpack.c.l.b16 %v249
    %v439 = vunpack.c.h.b16 %v249
    %v440 = vunpack.c.l.b16 %v250
    %v441 = vunpack.c.h.b16 %v250
    %v442 = vunpack.c.l.b16 %v251
    %v443 = vunpack.c.h.b16 %v251
    %v444 = vunpack.c.l.b16 %v252
    %v445 = vunpack.c.h.b16 %v252
    %v446 = vunpack.c.l.b16 %v253
    %v447 = vunpack.c.h.b16 %v253
    %v448 = vunpack.c.l.b16 %v254
    %v449 = vunpack.c.h.b16 %v254
    %v450 = vunpack.c.l.b16 %v255
    %v451 = vunpack.c.h.b16 %v255
    %v452 = vunpack.c.l.b16 %v256
    %v453 = vunpack.c.h.b16 %v256
    %v454 = vunpack.c.l.b16 %v257
    %v455 = vunpack.c.h.b16 %v257
    %v456 = vunpack.c.l.b16 %v258
    %v457 = vunpack.c.h.b16 %v258
    %v458 = vunpack.c.l.b16 %v259
    %v459 = vunpack.c.h.b16 %v259
    %v460 = vunpack.c.l.b16 %v260
    %v461 = vunpack.c.h.b16 %v260
    %v462 = vunpack.c.l.b16 %v261
    %v463 = vunpack.c.h.b16 %v261
    %v464 = vunpack.c.l.b16 %v262
    %v465 = vunpack.c.h.b16 %v262
    %v466 = vunpack.c.l.b16 %v263
    %v467 = vunpack.c.h.b16 %v263
    %v468 = vunpack.c.l.b16 %v264
    %v469 = vunpack.c.h.b16 %v264
    %v470 = vunpack.c.l.b16 %v265
    %v471 = vunpack.c.h.b16 %v265
    %v472 = vunpack.c.l.b16 %v266
    %v473 = vunpack.c.h.b16 %v266
    %v474 = vunpack.c.l.b16 %v267
    %v475 = vunpack.c.h.b16 %v267
    %v476 = vunpack.c.l.b16 %v268
    %v477 = vunpack.c.h.b16 %v268
    %v478 = vunpack.c.l.b16 %v269
    %v479 = vunpack.c.h.b16 %v269
    %v480 = vunpack.c.l.b16 %v270
    %v481 = vunpack.c.h.b16 %v270
    %v482 = vunpack.c.l.b16 %v271
    %v483 = vunpack.c.h.b16 %v271
    %v484 = vunpack.c.l.b16 %v272
    %v485 = vunpack.c.h.b16 %v272
    %v486 = vunpack.c.l.b16 %v273
    %v487 = vunpack.c.h.b16 %v273
    %v488 = vunpack.c.l.b16 %v274
    %v489 = vunpack.c.h.b16 %v274
    %v490 = vunpack.c.l.b16 %v275
    %v491 = vunpack.c.h.b16 %v275
    %v492 = vunpack.c.l.b16 %v276
    %v493 = vunpack.c.h.b16 %v276
    %v494 = vunpack.c.l.b16 %v277
    %v495 = vunpack.c.h.b16 %v277
    %v496 = vunpack.c.l.b16 %v278
    %v497 = vunpack.c.h.b16 %v278
    %v498 = vunpack.c.l.b16 %v279
    %v499 = vunpack.c.h.b16 %v279
    %v500 = vunpack.c.l.b16 %v280
    %v501 = vunpack.c.h.b16 %v280
    %v502 = vunpack.c.l.b16 %v281
    %v503 = vunpack.c.h.b16 %v281
    %v504 = vunpack.c.l.b16 %v282
    %v505 = vunpack.c.h.b16 %v282
    %v506 = vunpack.c.l.b16 %v283
    %v507 = vunpack.c.h.b16 %v283
    %v508 = vunpack.c.l.b16 %v284
    %v509 = vunpack.c.h.b16 %v284
    %v510 = vunpack.c.l.b16 %v285
    %v511 = vunpack.c.h.b16 %v285
    %v512 = vunpack.c.l.b16 %v286
    %v513 = vunpack.c.h.b16 %v286
    %v514 = vunpack.c.l.b16 %v287
    %v515 = vunpack.c.h.b16 %v287
    %v516 = vunpack.c.l.b16 %v288
    %v517 = vunpack.c.h.b16 %v288
    %v518 = vunpack.c.l.b16 %v289
    %v519 = vunpack.c.h.b16 %v289
    %v520 = vunpack.c.l.b16 %v290
    %v521 = vunpack.c.h.b16 %v290
    %v522 = vunpack.c.l.b16 %v291
    %v523 = vunpack.c.h.b16 %v291
    %v524 = vunpack.c.l.b16 %v292
    %v525 = vunpack.c.h.b16 %v292
    %v526 = vunpack.c.l.b16 %v293
    %v527 = vunpack.c.h.b16 %v293
    %v528 = vpack.c.b16 %v408, %v400
    %v529 = vpack.c.b16 %v409, %v401
    %v530 = vpack.c.b16 %v410, %v402
    %v531 = vpack.c.b16 %v411, %v403
    %v532 = vpack.c.b16 %v412, %v404
    %v533 = vpack.c.b16 %v413, %v405
    %v534 = vpack.c.b16 %v414, %v406
    %v535 = vpack.c.b16 %v415, %v407
    %v536 = vpack.c.b16 %v424, %v416
    %v537 = vpack.c.b16 %v425, %v417
    %v538 = vpack.c.b16 %v426, %v418
    %v539 = vpack.c.b16 %v427, %v419
    %v540 = vpack.c.b16 %v428, %v420
    %v541 = vpack.c.b16 %v429, %v421
    %v542 = vpack.c.b16 %v430, %v422
    %v543 = vpack.c.b16 %v431, %v423
    %v544 = vpack.c.b16 %v440, %v432
    %v545 = vpack.c.b16 %v441, %v433
    %v546 = vpack.c.b16 %v442, %v434
    %v547 = vpack.c.b16 %v443, %v435
    %v548 = vpack.c.b16 %v444, %v436
    %v549 = vpack.c.b16 %v445, %v437
    %v550 = vpack.c.b16 %v446, %v438
    %v551 = vpack.c.b16 %v447, %v439
    %v552 = vpack.c.b16 %v456, %v448
    %v553 = vpack.c.b16 %v457, %v449
    %v554 = vpack.c.b16 %v458, %v450
    %v555 = vpack.c.b16 %v459, %v451
    %v556 = vpack.c.b16 %v460, %v452
    %v557 = vpack.c.b16 %v461, %v453
    %v558 = vpack.c.b16 %v462, %v454
    %v559 = vpack.c.b16 %v463, %v455
    %v560 = vpack.c.b16 %v472, %v464
    %v561 = vpack.c.b16 %v473, %v465
    %v562 = vpack.c.b16 %v474, %v466
    %v563 = vpack.c.b16 %v475, %v467
    %v564 = vpack.c.b16 %v476, %v468
    %v565 = vpack.c.b16 %v477, %v469
    %v566 = vpack.c.b16 %v478, %v470
    %v567 = vpack.c.b16 %v479, %v471
    %v568 = vpack.c.b16 %v488, %v480
    %v569 = vpack.c.b16 %v489, %v481
    %v570 = vpack.c.b16 %v490, %v482
    %v571 = vpack.c.b16 %v491, %v483
    %v572 = vpack.c.b16 %v492, %v484
    %v573 = vpack.c.b16 %v493, %v485
    %v574 = vpack.c.b16 %v494, %v486
    %v575 = vpack.c.b16 %v495, %v487
    %v576 = vpack.c.b16 %v504, %v496
    %v577 = vpack.c.b16 %v505, %v497
    %v578 = vpack.c.b16 %v506, %v498
    %v579 = vpack.c.b16 %v507, %v499
    %v580 = vpack.c.b16 %v508, %v500
    %v581 = vpack.c.b16 %v509, %v501
    %v582 = vpack.c.b16 %v510, %v502
    %v583 = vpack.c.b16 %v511, %v503
    %v584 = vpack.c.b16 %v520, %v512
    %v585 = vpack.c.b16 %v521, %v513
    %v586 = vpack.c.b16 %v522, %v514
    %v587 = vpack.c.b16 %v523, %v515
    %v588 = vpack.c.b16 %v524, %v516
    %v589 = vpack.c.b16 %v525, %v517
    %v590 = vpack.c.b16 %v526, %v518
    %v591 = vpack.c.b16 %v527, %v519
    %656 = vmatprep.subr.bf16.mxu0 %v529
    %657 = vmatpush1.bf16.msra.mxu0 %v528
    %658 = vmatprep.subr.bf16.mxu0 %v537
    %659 = vmatpush1.bf16.msra.mxu0 %v536
    %660 = vmatprep.subr.bf16.mxu0 %v545
    %661 = vmatpush1.bf16.msra.mxu0 %v544
    %662 = vmatprep.subr.bf16.mxu0 %v553
    %663 = vmatpush1.bf16.msra.mxu0 %v552
    %664 = vmatprep.subr.bf16.mxu0 %v561
    %665 = vmatpush1.bf16.msra.mxu0 %v560
    %666 = vmatprep.subr.bf16.mxu0 %v569
    %667 = vmatpush1.bf16.msra.mxu0 %v568
    %668 = vmatprep.subr.bf16.mxu0 %v577
    %669 = vmatpush1.bf16.msra.mxu0 %v576
    %670 = vmatprep.subr.bf16.mxu0 %v585
    %671 = vmatpush1.bf16.msra.mxu0 %v584
    %672 = vmatprep.subr.bf16.mxu0 0
    %673 = vmatpush1.bf16.msra.mxu0 0
    %674 = vmatprep.subr.bf16.mxu0 0
    %675 = vmatpush1.bf16.msra.mxu0 0
    %676 = vmatprep.subr.bf16.mxu0 0
    %677 = vmatpush1.bf16.msra.mxu0 0
    %678 = vmatprep.subr.bf16.mxu0 0
    %679 = vmatpush1.bf16.msra.mxu0 0
    %680 = vmatprep.subr.bf16.mxu0 0
    %681 = vmatpush1.bf16.msra.mxu0 0
    %682 = vmatprep.subr.bf16.mxu0 0
    %683 = vmatpush1.bf16.msra.mxu0 0
    %684 = vmatprep.subr.bf16.mxu0 0
    %685 = vmatpush1.bf16.msra.mxu0 0
    %686 = vmatprep.subr.bf16.mxu0 0
    %687 = vmatpush1.bf16.msra.mxu0 0
    %688 = vmatprep.mubr.bf16.mxu0 0
    %689 = vmatmul.mubr.bf16.gmra.mrb[0].mxu0 %v229
    %v690 = vpop.f32.mrb[0].mxu0
    %v691 = vadd.f32 %v299, %v690
    %v692 = vpop.f32.mrb[0].mxu0
    %v693 = vadd.f32 %v303, %v692
    %v694 = vpop.f32.mrb[0].mxu0
    %v695 = vpop.f32.mrb[0].mxu0
    %696 = vdwg.mxu0
    %697 = vmatprep.subr.bf16.mxu0 %v531
    %698 = vmatpush1.bf16.msra.mxu0 %v530
    %699 = vmatprep.subr.bf16.mxu0 %v539
    %700 = vmatpush1.bf16.msra.mxu0 %v538
    %701 = vmatprep.subr.bf16.mxu0 %v547
    %702 = vmatpush1.bf16.msra.mxu0 %v546
    %703 = vmatprep.subr.bf16.mxu0 %v555
    %704 = vmatpush1.bf16.msra.mxu0 %v554
    %705 = vmatprep.subr.bf16.mxu0 %v563
    %706 = vmatpush1.bf16.msra.mxu0 %v562
    %707 = vmatprep.subr.bf16.mxu0 %v571
    %708 = vmatpush1.bf16.msra.mxu0 %v570
    %709 = vmatprep.subr.bf16.mxu0 %v579
    %710 = vmatpush1.bf16.msra.mxu0 %v578
    %711 = vmatprep.subr.bf16.mxu0 %v587
    %712 = vmatpush1.bf16.msra.mxu0 %v586
    %713 = vmatprep.subr.bf16.mxu0 0
    %714 = vmatpush1.bf16.msra.mxu0 0
    %715 = vmatprep.subr.bf16.mxu0 0
    %716 = vmatpush1.bf16.msra.mxu0 0
    %717 = vmatprep.subr.bf16.mxu0 0
    %718 = vmatpush1.bf16.msra.mxu0 0
    %719 = vmatprep.subr.bf16.mxu0 0
    %720 = vmatpush1.bf16.msra.mxu0 0
    %721 = vmatprep.subr.bf16.mxu0 0
    %722 = vmatpush1.bf16.msra.mxu0 0
    %723 = vmatprep.subr.bf16.mxu0 0
    %724 = vmatpush1.bf16.msra.mxu0 0
    %725 = vmatprep.subr.bf16.mxu0 0
    %726 = vmatpush1.bf16.msra.mxu0 0
    %727 = vmatprep.subr.bf16.mxu0 0
    %728 = vmatpush1.bf16.msra.mxu0 0
    %729 = vmatprep.mubr.bf16.mxu0 0
    %730 = vmatmul.mubr.bf16.gmra.mrb[0].mxu0 %v229
    %v731 = vpop.f32.mrb[0].mxu0
    %v732 = vadd.f32 %v307, %v731
    %v733 = vpop.f32.mrb[0].mxu0
    %v734 = vadd.f32 %v311, %v733
    %v735 = vpop.f32.mrb[0].mxu0
    %v736 = vpop.f32.mrb[0].mxu0
    %737 = vdwg.mxu0
    %738 = vmatprep.subr.bf16.mxu0 %v533
    %739 = vmatpush1.bf16.msra.mxu0 %v532
    %740 = vmatprep.subr.bf16.mxu0 %v541
    %741 = vmatpush1.bf16.msra.mxu0 %v540
    %742 = vmatprep.subr.bf16.mxu0 %v549
    %743 = vmatpush1.bf16.msra.mxu0 %v548
    %744 = vmatprep.subr.bf16.mxu0 %v557
    %745 = vmatpush1.bf16.msra.mxu0 %v556
    %746 = vmatprep.subr.bf16.mxu0 %v565
    %747 = vmatpush1.bf16.msra.mxu0 %v564
    %748 = vmatprep.subr.bf16.mxu0 %v573
    %749 = vmatpush1.bf16.msra.mxu0 %v572
    %750 = vmatprep.subr.bf16.mxu0 %v581
    %751 = vmatpush1.bf16.msra.mxu0 %v580
    %752 = vmatprep.subr.bf16.mxu0 %v589
    %753 = vmatpush1.bf16.msra.mxu0 %v588
    %754 = vmatprep.subr.bf16.mxu0 0
    %755 = vmatpush1.bf16.msra.mxu0 0
    %756 = vmatprep.subr.bf16.mxu0 0
    %757 = vmatpush1.bf16.msra.mxu0 0
    %758 = vmatprep.subr.bf16.mxu0 0
    %759 = vmatpush1.bf16.msra.mxu0 0
    %760 = vmatprep.subr.bf16.mxu0 0
    %761 = vmatpush1.bf16.msra.mxu0 0
    %762 = vmatprep.subr.bf16.mxu0 0
    %763 = vmatpush1.bf16.msra.mxu0 0
    %764 = vmatprep.subr.bf16.mxu0 0
    %765 = vmatpush1.bf16.msra.mxu0 0
    %766 = vmatprep.subr.bf16.mxu0 0
    %767 = vmatpush1.bf16.msra.mxu0 0
    %768 = vmatprep.subr.bf16.mxu0 0
    %769 = vmatpush1.bf16.msra.mxu0 0
    %770 = vmatprep.mubr.bf16.mxu0 0
    %771 = vmatmul.mubr.bf16.gmra.mrb[0].mxu0 %v229
    %v772 = vpop.f32.mrb[0].mxu0
    %v773 = vadd.f32 %v315, %v772
    %v774 = vpop.f32.mrb[0].mxu0
    %v775 = vadd.f32 %v319, %v774
    %v776 = vpop.f32.mrb[0].mxu0
    %v777 = vpop.f32.mrb[0].mxu0
    %778 = vdwg.mxu0
    %779 = vmatprep.subr.bf16.mxu0 %v535
    %780 = vmatpush1.bf16.msra.mxu0 %v534
    %781 = vmatprep.subr.bf16.mxu0 %v543
    %782 = vmatpush1.bf16.msra.mxu0 %v542
    %783 = vmatprep.subr.bf16.mxu0 %v551
    %784 = vmatpush1.bf16.msra.mxu0 %v550
    %785 = vmatprep.subr.bf16.mxu0 %v559
    %786 = vmatpush1.bf16.msra.mxu0 %v558
    %787 = vmatprep.subr.bf16.mxu0 %v567
    %788 = vmatpush1.bf16.msra.mxu0 %v566
    %789 = vmatprep.subr.bf16.mxu0 %v575
    %790 = vmatpush1.bf16.msra.mxu0 %v574
    %791 = vmatprep.subr.bf16.mxu0 %v583
    %792 = vmatpush1.bf16.msra.mxu0 %v582
    %793 = vmatprep.subr.bf16.mxu0 %v591
    %794 = vmatpush1.bf16.msra.mxu0 %v590
    %795 = vmatprep.subr.bf16.mxu0 0
    %796 = vmatpush1.bf16.msra.mxu0 0
    %797 = vmatprep.subr.bf16.mxu0 0
    %798 = vmatpush1.bf16.msra.mxu0 0
    %799 = vmatprep.subr.bf16.mxu0 0
    %800 = vmatpush1.bf16.msra.mxu0 0
    %801 = vmatprep.subr.bf16.mxu0 0
    %802 = vmatpush1.bf16.msra.mxu0 0
    %803 = vmatprep.subr.bf16.mxu0 0
    %804 = vmatpush1.bf16.msra.mxu0 0
    %805 = vmatprep.subr.bf16.mxu0 0
    %806 = vmatpush1.bf16.msra.mxu0 0
    %807 = vmatprep.subr.bf16.mxu0 0
    %808 = vmatpush1.bf16.msra.mxu0 0
    %809 = vmatprep.subr.bf16.mxu0 0
    %810 = vmatpush1.bf16.msra.mxu0 0
    %811 = vmatprep.mubr.bf16.mxu0 0
    %812 = vmatmul.mubr.bf16.gmra.mrb[0].mxu0 %v229
    %v813 = vpop.f32.mrb[0].mxu0
    %v814 = vadd.f32 %v323, %v813
    %v815 = vpop.f32.mrb[0].mxu0
    %v816 = vadd.f32 %v327, %v815
    %v817 = vpop.f32.mrb[0].mxu0
    %v818 = vpop.f32.mrb[0].mxu0
    %819 = vdwg.mxu0
    %v820 = vmax.f32 %v691, 0.0
    %v821 = vmax.f32 %v693, 0.0
    %v822 = vmax.f32 %v732, 0.0
    %v823 = vmax.f32 %v734, 0.0
    %v824 = vmax.f32 %v773, 0.0
    %v825 = vmax.f32 %v775, 0.0
    %v826 = vmax.f32 %v814, 0.0
    %v827 = vmax.f32 %v816, 0.0
    %v828 = vpack.c.bf16 %v820, %v820
    %v829 = vpack.c.bf16 %v821, %v821
    %v830 = vpack.c.bf16 %v822, %v822
    %v831 = vpack.c.bf16 %v823, %v823
    %v832 = vpack.c.bf16 %v824, %v824
    %v833 = vpack.c.bf16 %v825, %v825
    %v834 = vpack.c.bf16 %v826, %v826
    %v835 = vpack.c.bf16 %v827, %v827
    %v836 = vld [vmem:[#allocation5] sm:$0xff]
    %v837 = vld [vmem:[#allocation5 + $0x8] sm:$0xff]
    %v838 = vld [vmem:[#allocation5 + $0x10] sm:$0xff]
    %v839 = vld [vmem:[#allocation5 + $0x18] sm:$0xff]
    %v840 = vld [vmem:[#allocation5 + $0x20] sm:$0xff]
    %v841 = vld [vmem:[#allocation5 + $0x28] sm:$0xff]
    %v842 = vld [vmem:[#allocation5 + $0x30] sm:$0xff]
    %v843 = vld [vmem:[#allocation5 + $0x38] sm:$0xff]
    %v844 = vld [vmem:[#allocation5 + $0x40] sm:$0xff]
    %v845 = vld [vmem:[#allocation5 + $0x48] sm:$0xff]
    %v846 = vld [vmem:[#allocation5 + $0x50] sm:$0xff]
    %v847 = vld [vmem:[#allocation5 + $0x58] sm:$0xff]
    %v848 = vld [vmem:[#allocation5 + $0x60] sm:$0xff]
    %v849 = vld [vmem:[#allocation5 + $0x68] sm:$0xff]
    %v850 = vld [vmem:[#allocation5 + $0x70] sm:$0xff]
    %v851 = vld [vmem:[#allocation5 + $0x78] sm:$0xff]
    %v852 = vld [vmem:[#allocation5 + $0x80] sm:$0xff]
    %v853 = vld [vmem:[#allocation5 + $0x88] sm:$0xff]
    %v854 = vld [vmem:[#allocation5 + $0x90] sm:$0xff]
    %v855 = vld [vmem:[#allocation5 + $0x98] sm:$0xff]
    %v856 = vld [vmem:[#allocation5 + $0xa0] sm:$0xff]
    %v857 = vld [vmem:[#allocation5 + $0xa8] sm:$0xff]
    %v858 = vld [vmem:[#allocation5 + $0xb0] sm:$0xff]
    %v859 = vld [vmem:[#allocation5 + $0xb8] sm:$0xff]
    %v860 = vld [vmem:[#allocation5 + $0xc0] sm:$0xff]
    %v861 = vld [vmem:[#allocation5 + $0xc8] sm:$0xff]
    %v862 = vld [vmem:[#allocation5 + $0xd0] sm:$0xff]
    %v863 = vld [vmem:[#allocation5 + $0xd8] sm:$0xff]
    %v864 = vld [vmem:[#allocation5 + $0xe0] sm:$0xff]
    %v865 = vld [vmem:[#allocation5 + $0xe8] sm:$0xff]
    %v866 = vld [vmem:[#allocation5 + $0xf0] sm:$0xff]
    %v867 = vld [vmem:[#allocation5 + $0xf8] sm:$0xff]
    %v868 = vld [vmem:[#allocation5 + $0x100] sm:$0xff]
    %v869 = vld [vmem:[#allocation5 + $0x108] sm:$0xff]
    %v870 = vld [vmem:[#allocation5 + $0x110] sm:$0xff]
    %v871 = vld [vmem:[#allocation5 + $0x118] sm:$0xff]
    %v872 = vld [vmem:[#allocation5 + $0x120] sm:$0xff]
    %v873 = vld [vmem:[#allocation5 + $0x128] sm:$0xff]
    %v874 = vld [vmem:[#allocation5 + $0x130] sm:$0xff]
    %v875 = vld [vmem:[#allocation5 + $0x138] sm:$0xff]
    %v876 = vld [vmem:[#allocation5 + $0x140] sm:$0xff]
    %v877 = vld [vmem:[#allocation5 + $0x148] sm:$0xff]
    %v878 = vld [vmem:[#allocation5 + $0x150] sm:$0xff]
    %v879 = vld [vmem:[#allocation5 + $0x158] sm:$0xff]
    %v880 = vld [vmem:[#allocation5 + $0x160] sm:$0xff]
    %v881 = vld [vmem:[#allocation5 + $0x168] sm:$0xff]
    %v882 = vld [vmem:[#allocation5 + $0x170] sm:$0xff]
    %v883 = vld [vmem:[#allocation5 + $0x178] sm:$0xff]
    %v884 = vld [vmem:[#allocation5 + $0x180] sm:$0xff]
    %v885 = vld [vmem:[#allocation5 + $0x188] sm:$0xff]
    %v886 = vld [vmem:[#allocation5 + $0x190] sm:$0xff]
    %v887 = vld [vmem:[#allocation5 + $0x198] sm:$0xff]
    %v888 = vld [vmem:[#allocation5 + $0x1a0] sm:$0xff]
    %v889 = vld [vmem:[#allocation5 + $0x1a8] sm:$0xff]
    %v890 = vld [vmem:[#allocation5 + $0x1b0] sm:$0xff]
    %v891 = vld [vmem:[#allocation5 + $0x1b8] sm:$0xff]
    %v892 = vld [vmem:[#allocation5 + $0x1c0] sm:$0xff]
    %v893 = vld [vmem:[#allocation5 + $0x1c8] sm:$0xff]
    %v894 = vld [vmem:[#allocation5 + $0x1d0] sm:$0xff]
    %v895 = vld [vmem:[#allocation5 + $0x1d8] sm:$0xff]
    %v896 = vld [vmem:[#allocation5 + $0x1e0] sm:$0xff]
    %v897 = vld [vmem:[#allocation5 + $0x1e8] sm:$0xff]
    %v898 = vld [vmem:[#allocation5 + $0x1f0] sm:$0xff]
    %v899 = vld [vmem:[#allocation5 + $0x1f8] sm:$0xff]
    %v900 = vld [vmem:[#allocation5 + $0x200] sm:$0xff]
    %v901 = vld [vmem:[#allocation5 + $0x208] sm:$0xff]
    %v902 = vld [vmem:[#allocation5 + $0x210] sm:$0xff]
    %v903 = vld [vmem:[#allocation5 + $0x218] sm:$0xff]
    %v904 = vld [vmem:[#allocation5 + $0x220] sm:$0xff]
    %v905 = vld [vmem:[#allocation5 + $0x228] sm:$0xff]
    %v906 = vld [vmem:[#allocation5 + $0x230] sm:$0xff]
    %v907 = vld [vmem:[#allocation5 + $0x238] sm:$0xff]
    %v908 = vld [vmem:[#allocation5 + $0x240] sm:$0xff]
    %v909 = vld [vmem:[#allocation5 + $0x248] sm:$0xff]
    %v910 = vld [vmem:[#allocation5 + $0x250] sm:$0xff]
    %v911 = vld [vmem:[#allocation5 + $0x258] sm:$0xff]
    %v912 = vld [vmem:[#allocation5 + $0x260] sm:$0xff]
    %v913 = vld [vmem:[#allocation5 + $0x268] sm:$0xff]
    %v914 = vld [vmem:[#allocation5 + $0x270] sm:$0xff]
    %v915 = vld [vmem:[#allocation5 + $0x278] sm:$0xff]
    %v916 = vld [vmem:[#allocation5 + $0x280] sm:$0xff]
    %v917 = vld [vmem:[#allocation5 + $0x288] sm:$0xff]
    %v918 = vld [vmem:[#allocation5 + $0x290] sm:$0xff]
    %v919 = vld [vmem:[#allocation5 + $0x298] sm:$0xff]
    %v920 = vld [vmem:[#allocation5 + $0x2a0] sm:$0xff]
    %v921 = vld [vmem:[#allocation5 + $0x2a8] sm:$0xff]
    %v922 = vld [vmem:[#allocation5 + $0x2b0] sm:$0xff]
    %v923 = vld [vmem:[#allocation5 + $0x2b8] sm:$0xff]
    %v924 = vld [vmem:[#allocation5 + $0x2c0] sm:$0xff]
    %v925 = vld [vmem:[#allocation5 + $0x2c8] sm:$0xff]
    %v926 = vld [vmem:[#allocation5 + $0x2d0] sm:$0xff]
    %v927 = vld [vmem:[#allocation5 + $0x2d8] sm:$0xff]
    %v928 = vld [vmem:[#allocation5 + $0x2e0] sm:$0xff]
    %v929 = vld [vmem:[#allocation5 + $0x2e8] sm:$0xff]
    %v930 = vld [vmem:[#allocation5 + $0x2f0] sm:$0xff]
    %v931 = vld [vmem:[#allocation5 + $0x2f8] sm:$0xff]
    %v932 = vld [vmem:[#allocation5 + $0x300] sm:$0xff]
    %v933 = vld [vmem:[#allocation5 + $0x308] sm:$0xff]
    %v934 = vld [vmem:[#allocation5 + $0x310] sm:$0xff]
    %v935 = vld [vmem:[#allocation5 + $0x318] sm:$0xff]
    %v936 = vld [vmem:[#allocation5 + $0x320] sm:$0xff]
    %v937 = vld [vmem:[#allocation5 + $0x328] sm:$0xff]
    %v938 = vld [vmem:[#allocation5 + $0x330] sm:$0xff]
    %v939 = vld [vmem:[#allocation5 + $0x338] sm:$0xff]
    %v940 = vld [vmem:[#allocation5 + $0x340] sm:$0xff]
    %v941 = vld [vmem:[#allocation5 + $0x348] sm:$0xff]
    %v942 = vld [vmem:[#allocation5 + $0x350] sm:$0xff]
    %v943 = vld [vmem:[#allocation5 + $0x358] sm:$0xff]
    %v944 = vld [vmem:[#allocation5 + $0x360] sm:$0xff]
    %v945 = vld [vmem:[#allocation5 + $0x368] sm:$0xff]
    %v946 = vld [vmem:[#allocation5 + $0x370] sm:$0xff]
    %v947 = vld [vmem:[#allocation5 + $0x378] sm:$0xff]
    %v948 = vld [vmem:[#allocation5 + $0x380] sm:$0xff]
    %v949 = vld [vmem:[#allocation5 + $0x388] sm:$0xff]
    %v950 = vld [vmem:[#allocation5 + $0x390] sm:$0xff]
    %v951 = vld [vmem:[#allocation5 + $0x398] sm:$0xff]
    %v952 = vld [vmem:[#allocation5 + $0x3a0] sm:$0xff]
    %v953 = vld [vmem:[#allocation5 + $0x3a8] sm:$0xff]
    %v954 = vld [vmem:[#allocation5 + $0x3b0] sm:$0xff]
    %v955 = vld [vmem:[#allocation5 + $0x3b8] sm:$0xff]
    %v956 = vld [vmem:[#allocation5 + $0x3c0] sm:$0xff]
    %v957 = vld [vmem:[#allocation5 + $0x3c8] sm:$0xff]
    %v958 = vld [vmem:[#allocation5 + $0x3d0] sm:$0xff]
    %v959 = vld [vmem:[#allocation5 + $0x3d8] sm:$0xff]
    %v960 = vld [vmem:[#allocation5 + $0x3e0] sm:$0xff]
    %v961 = vld [vmem:[#allocation5 + $0x3e8] sm:$0xff]
    %v962 = vld [vmem:[#allocation5 + $0x3f0] sm:$0xff]
    %v963 = vld [vmem:[#allocation5 + $0x3f8] sm:$0xff]
    %v964 = vld [vmem:[#allocation5 + $0x400] sm:$0xff]
    %v965 = vld [vmem:[#allocation5 + $0x408] sm:$0xff]
    %v966 = vld [vmem:[#allocation5 + $0x410] sm:$0xff]
    %v967 = vld [vmem:[#allocation5 + $0x418] sm:$0xff]
    %v968 = vld [vmem:[#allocation5 + $0x420] sm:$0xff]
    %v969 = vld [vmem:[#allocation5 + $0x428] sm:$0xff]
    %v970 = vld [vmem:[#allocation5 + $0x430] sm:$0xff]
    %v971 = vld [vmem:[#allocation5 + $0x438] sm:$0xff]
    %v972 = vld [vmem:[#allocation5 + $0x440] sm:$0xff]
    %v973 = vld [vmem:[#allocation5 + $0x448] sm:$0xff]
    %v974 = vld [vmem:[#allocation5 + $0x450] sm:$0xff]
    %v975 = vld [vmem:[#allocation5 + $0x458] sm:$0xff]
    %v976 = vld [vmem:[#allocation5 + $0x460] sm:$0xff]
    %v977 = vld [vmem:[#allocation5 + $0x468] sm:$0xff]
    %v978 = vld [vmem:[#allocation5 + $0x470] sm:$0xff]
    %v979 = vld [vmem:[#allocation5 + $0x478] sm:$0xff]
    %v980 = vld [vmem:[#allocation5 + $0x480] sm:$0xff]
    %v981 = vld [vmem:[#allocation5 + $0x488] sm:$0xff]
    %v982 = vld [vmem:[#allocation5 + $0x490] sm:$0xff]
    %v983 = vld [vmem:[#allocation5 + $0x498] sm:$0xff]
    %v984 = vld [vmem:[#allocation5 + $0x4a0] sm:$0xff]
    %v985 = vld [vmem:[#allocation5 + $0x4a8] sm:$0xff]
    %v986 = vld [vmem:[#allocation5 + $0x4b0] sm:$0xff]
    %v987 = vld [vmem:[#allocation5 + $0x4b8] sm:$0xff]
    %v988 = vld [vmem:[#allocation5 + $0x4c0] sm:$0xff]
    %v989 = vld [vmem:[#allocation5 + $0x4c8] sm:$0xff]
    %v990 = vld [vmem:[#allocation5 + $0x4d0] sm:$0xff]
    %v991 = vld [vmem:[#allocation5 + $0x4d8] sm:$0xff]
    %v992 = vld [vmem:[#allocation5 + $0x4e0] sm:$0xff]
    %v993 = vld [vmem:[#allocation5 + $0x4e8] sm:$0xff]
    %v994 = vld [vmem:[#allocation5 + $0x4f0] sm:$0xff]
    %v995 = vld [vmem:[#allocation5 + $0x4f8] sm:$0xff]
    %v996 = vld [vmem:[#allocation5 + $0x500] sm:$0xff]
    %v997 = vld [vmem:[#allocation5 + $0x508] sm:$0xff]
    %v998 = vld [vmem:[#allocation5 + $0x510] sm:$0xff]
    %v999 = vld [vmem:[#allocation5 + $0x518] sm:$0xff]
    %v1000 = vld [vmem:[#allocation5 + $0x520] sm:$0xff]
    %v1001 = vld [vmem:[#allocation5 + $0x528] sm:$0xff]
    %v1002 = vld [vmem:[#allocation5 + $0x530] sm:$0xff]
    %v1003 = vld [vmem:[#allocation5 + $0x538] sm:$0xff]
    %v1004 = vld [vmem:[#allocation5 + $0x540] sm:$0xff]
    %v1005 = vld [vmem:[#allocation5 + $0x548] sm:$0xff]
    %v1006 = vld [vmem:[#allocation5 + $0x550] sm:$0xff]
    %v1007 = vld [vmem:[#allocation5 + $0x558] sm:$0xff]
    %v1008 = vld [vmem:[#allocation5 + $0x560] sm:$0xff]
    %v1009 = vld [vmem:[#allocation5 + $0x568] sm:$0xff]
    %v1010 = vld [vmem:[#allocation5 + $0x570] sm:$0xff]
    %v1011 = vld [vmem:[#allocation5 + $0x578] sm:$0xff]
    %v1012 = vld [vmem:[#allocation5 + $0x580] sm:$0xff]
    %v1013 = vld [vmem:[#allocation5 + $0x588] sm:$0xff]
    %v1014 = vld [vmem:[#allocation5 + $0x590] sm:$0xff]
    %v1015 = vld [vmem:[#allocation5 + $0x598] sm:$0xff]
    %v1016 = vld [vmem:[#allocation5 + $0x5a0] sm:$0xff]
    %v1017 = vld [vmem:[#allocation5 + $0x5a8] sm:$0xff]
    %v1018 = vld [vmem:[#allocation5 + $0x5b0] sm:$0xff]
    %v1019 = vld [vmem:[#allocation5 + $0x5b8] sm:$0xff]
    %v1020 = vld [vmem:[#allocation5 + $0x5c0] sm:$0xff]
    %v1021 = vld [vmem:[#allocation5 + $0x5c8] sm:$0xff]
    %v1022 = vld [vmem:[#allocation5 + $0x5d0] sm:$0xff]
    %v1023 = vld [vmem:[#allocation5 + $0x5d8] sm:$0xff]
    %v1024 = vld [vmem:[#allocation5 + $0x5e0] sm:$0xff]
    %v1025 = vld [vmem:[#allocation5 + $0x5e8] sm:$0xff]
    %v1026 = vld [vmem:[#allocation5 + $0x5f0] sm:$0xff]
    %v1027 = vld [vmem:[#allocation5 + $0x5f8] sm:$0xff]
    %v1028 = vld [vmem:[#allocation5 + $0x600] sm:$0xff]
    %v1029 = vld [vmem:[#allocation5 + $0x608] sm:$0xff]
    %v1030 = vld [vmem:[#allocation5 + $0x610] sm:$0xff]
    %v1031 = vld [vmem:[#allocation5 + $0x618] sm:$0xff]
    %v1032 = vld [vmem:[#allocation5 + $0x620] sm:$0xff]
    %v1033 = vld [vmem:[#allocation5 + $0x628] sm:$0xff]
    %v1034 = vld [vmem:[#allocation5 + $0x630] sm:$0xff]
    %v1035 = vld [vmem:[#allocation5 + $0x638] sm:$0xff]
    %v1036 = vld [vmem:[#allocation5 + $0x640] sm:$0xff]
    %v1037 = vld [vmem:[#allocation5 + $0x648] sm:$0xff]
    %v1038 = vld [vmem:[#allocation5 + $0x650] sm:$0xff]
    %v1039 = vld [vmem:[#allocation5 + $0x658] sm:$0xff]
    %v1040 = vld [vmem:[#allocation5 + $0x660] sm:$0xff]
    %v1041 = vld [vmem:[#allocation5 + $0x668] sm:$0xff]
    %v1042 = vld [vmem:[#allocation5 + $0x670] sm:$0xff]
    %v1043 = vld [vmem:[#allocation5 + $0x678] sm:$0xff]
    %v1044 = vld [vmem:[#allocation5 + $0x680] sm:$0xff]
    %v1045 = vld [vmem:[#allocation5 + $0x688] sm:$0xff]
    %v1046 = vld [vmem:[#allocation5 + $0x690] sm:$0xff]
    %v1047 = vld [vmem:[#allocation5 + $0x698] sm:$0xff]
    %v1048 = vld [vmem:[#allocation5 + $0x6a0] sm:$0xff]
    %v1049 = vld [vmem:[#allocation5 + $0x6a8] sm:$0xff]
    %v1050 = vld [vmem:[#allocation5 + $0x6b0] sm:$0xff]
    %v1051 = vld [vmem:[#allocation5 + $0x6b8] sm:$0xff]
    %v1052 = vld [vmem:[#allocation5 + $0x6c0] sm:$0xff]
    %v1053 = vld [vmem:[#allocation5 + $0x6c8] sm:$0xff]
    %v1054 = vld [vmem:[#allocation5 + $0x6d0] sm:$0xff]
    %v1055 = vld [vmem:[#allocation5 + $0x6d8] sm:$0xff]
    %v1056 = vld [vmem:[#allocation5 + $0x6e0] sm:$0xff]
    %v1057 = vld [vmem:[#allocation5 + $0x6e8] sm:$0xff]
    %v1058 = vld [vmem:[#allocation5 + $0x6f0] sm:$0xff]
    %v1059 = vld [vmem:[#allocation5 + $0x6f8] sm:$0xff]
    %v1060 = vld [vmem:[#allocation5 + $0x700] sm:$0xff]
    %v1061 = vld [vmem:[#allocation5 + $0x708] sm:$0xff]
    %v1062 = vld [vmem:[#allocation5 + $0x710] sm:$0xff]
    %v1063 = vld [vmem:[#allocation5 + $0x718] sm:$0xff]
    %v1064 = vld [vmem:[#allocation5 + $0x720] sm:$0xff]
    %v1065 = vld [vmem:[#allocation5 + $0x728] sm:$0xff]
    %v1066 = vld [vmem:[#allocation5 + $0x730] sm:$0xff]
    %v1067 = vld [vmem:[#allocation5 + $0x738] sm:$0xff]
    %v1068 = vld [vmem:[#allocation5 + $0x740] sm:$0xff]
    %v1069 = vld [vmem:[#allocation5 + $0x748] sm:$0xff]
    %v1070 = vld [vmem:[#allocation5 + $0x750] sm:$0xff]
    %v1071 = vld [vmem:[#allocation5 + $0x758] sm:$0xff]
    %v1072 = vld [vmem:[#allocation5 + $0x760] sm:$0xff]
    %v1073 = vld [vmem:[#allocation5 + $0x768] sm:$0xff]
    %v1074 = vld [vmem:[#allocation5 + $0x770] sm:$0xff]
    %v1075 = vld [vmem:[#allocation5 + $0x778] sm:$0xff]
    %v1076 = vld [vmem:[#allocation5 + $0x780] sm:$0xff]
    %v1077 = vld [vmem:[#allocation5 + $0x788] sm:$0xff]
    %v1078 = vld [vmem:[#allocation5 + $0x790] sm:$0xff]
    %v1079 = vld [vmem:[#allocation5 + $0x798] sm:$0xff]
    %v1080 = vld [vmem:[#allocation5 + $0x7a0] sm:$0xff]
    %v1081 = vld [vmem:[#allocation5 + $0x7a8] sm:$0xff]
    %v1082 = vld [vmem:[#allocation5 + $0x7b0] sm:$0xff]
    %v1083 = vld [vmem:[#allocation5 + $0x7b8] sm:$0xff]
    %v1084 = vld [vmem:[#allocation5 + $0x7c0] sm:$0xff]
    %v1085 = vld [vmem:[#allocation5 + $0x7c8] sm:$0xff]
    %v1086 = vld [vmem:[#allocation5 + $0x7d0] sm:$0xff]
    %v1087 = vld [vmem:[#allocation5 + $0x7d8] sm:$0xff]
    %v1088 = vld [vmem:[#allocation5 + $0x7e0] sm:$0xff]
    %v1089 = vld [vmem:[#allocation5 + $0x7e8] sm:$0xff]
    %v1090 = vld [vmem:[#allocation5 + $0x7f0] sm:$0xff]
    %v1091 = vld [vmem:[#allocation5 + $0x7f8] sm:$0xff]
    %v1092 = vld [vmem:[#allocation7] sm:$0xf]
    %v1094 = vlaneseq
    %v1095 = vshrl.u32 %v1094, 7
    %v1096 = vsub.s32 0, %v1095
    %v1097 = vrot.slane %v1092, %v1096
    %v1098 = vlaneseq
    %v1099 = vshrl.u32 %v1098, 7
    %v1100 = vsub.s32 1, %v1099
    %v1101 = vrot.slane %v1092, %v1100
    %v1102 = vlaneseq
    %v1103 = vshrl.u32 %v1102, 7
    %v1104 = vsub.s32 2, %v1103
    %v1105 = vrot.slane %v1092, %v1104
    %v1106 = vlaneseq
    %v1107 = vshrl.u32 %v1106, 7
    %v1108 = vsub.s32 3, %v1107
    %v1109 = vrot.slane %v1092, %v1108
    %v1370 = vunpack.c.l.b16 %v836
    %v1371 = vunpack.c.h.b16 %v836
    %v1372 = vunpack.c.l.b16 %v837
    %v1373 = vunpack.c.h.b16 %v837
    %v1374 = vunpack.c.l.b16 %v838
    %v1375 = vunpack.c.h.b16 %v838
    %v1376 = vunpack.c.l.b16 %v839
    %v1377 = vunpack.c.h.b16 %v839
    %v1378 = vunpack.c.l.b16 %v840
    %v1379 = vunpack.c.h.b16 %v840
    %v1380 = vunpack.c.l.b16 %v841
    %v1381 = vunpack.c.h.b16 %v841
    %v1382 = vunpack.c.l.b16 %v842
    %v1383 = vunpack.c.h.b16 %v842
    %v1384 = vunpack.c.l.b16 %v843
    %v1385 = vunpack.c.h.b16 %v843
    %v1386 = vunpack.c.l.b16 %v844
    %v1387 = vunpack.c.h.b16 %v844
    %v1388 = vunpack.c.l.b16 %v845
    %v1389 = vunpack.c.h.b16 %v845
    %v1390 = vunpack.c.l.b16 %v846
    %v1391 = vunpack.c.h.b16 %v846
    %v1392 = vunpack.c.l.b16 %v847
    %v1393 = vunpack.c.h.b16 %v847
    %v1394 = vunpack.c.l.b16 %v848
    %v1395 = vunpack.c.h.b16 %v848
    %v1396 = vunpack.c.l.b16 %v849
    %v1397 = vunpack.c.h.b16 %v849
    %v1398 = vunpack.c.l.b16 %v850
    %v1399 = vunpack.c.h.b16 %v850
    %v1400 = vunpack.c.l.b16 %v851
    %v1401 = vunpack.c.h.b16 %v851
    %v1402 = vunpack.c.l.b16 %v852
    %v1403 = vunpack.c.h.b16 %v852
    %v1404 = vunpack.c.l.b16 %v853
    %v1405 = vunpack.c.h.b16 %v853
    %v1406 = vunpack.c.l.b16 %v854
    %v1407 = vunpack.c.h.b16 %v854
    %v1408 = vunpack.c.l.b16 %v855
    %v1409 = vunpack.c.h.b16 %v855
    %v1410 = vunpack.c.l.b16 %v856
    %v1411 = vunpack.c.h.b16 %v856
    %v1412 = vunpack.c.l.b16 %v857
    %v1413 = vunpack.c.h.b16 %v857
    %v1414 = vunpack.c.l.b16 %v858
    %v1415 = vunpack.c.h.b16 %v858
    %v1416 = vunpack.c.l.b16 %v859
    %v1417 = vunpack.c.h.b16 %v859
    %v1418 = vunpack.c.l.b16 %v860
    %v1419 = vunpack.c.h.b16 %v860
    %v1420 = vunpack.c.l.b16 %v861
    %v1421 = vunpack.c.h.b16 %v861
    %v1422 = vunpack.c.l.b16 %v862
    %v1423 = vunpack.c.h.b16 %v862
    %v1424 = vunpack.c.l.b16 %v863
    %v1425 = vunpack.c.h.b16 %v863
    %v1426 = vunpack.c.l.b16 %v864
    %v1427 = vunpack.c.h.b16 %v864
    %v1428 = vunpack.c.l.b16 %v865
    %v1429 = vunpack.c.h.b16 %v865
    %v1430 = vunpack.c.l.b16 %v866
    %v1431 = vunpack.c.h.b16 %v866
    %v1432 = vunpack.c.l.b16 %v867
    %v1433 = vunpack.c.h.b16 %v867
    %v1434 = vunpack.c.l.b16 %v868
    %v1435 = vunpack.c.h.b16 %v868
    %v1436 = vunpack.c.l.b16 %v869
    %v1437 = vunpack.c.h.b16 %v869
    %v1438 = vunpack.c.l.b16 %v870
    %v1439 = vunpack.c.h.b16 %v870
    %v1440 = vunpack.c.l.b16 %v871
    %v1441 = vunpack.c.h.b16 %v871
    %v1442 = vunpack.c.l.b16 %v872
    %v1443 = vunpack.c.h.b16 %v872
    %v1444 = vunpack.c.l.b16 %v873
    %v1445 = vunpack.c.h.b16 %v873
    %v1446 = vunpack.c.l.b16 %v874
    %v1447 = vunpack.c.h.b16 %v874
    %v1448 = vunpack.c.l.b16 %v875
    %v1449 = vunpack.c.h.b16 %v875
    %v1450 = vunpack.c.l.b16 %v876
    %v1451 = vunpack.c.h.b16 %v876
    %v1452 = vunpack.c.l.b16 %v877
    %v1453 = vunpack.c.h.b16 %v877
    %v1454 = vunpack.c.l.b16 %v878
    %v1455 = vunpack.c.h.b16 %v878
    %v1456 = vunpack.c.l.b16 %v879
    %v1457 = vunpack.c.h.b16 %v879
    %v1458 = vunpack.c.l.b16 %v880
    %v1459 = vunpack.c.h.b16 %v880
    %v1460 = vunpack.c.l.b16 %v881
    %v1461 = vunpack.c.h.b16 %v881
    %v1462 = vunpack.c.l.b16 %v882
    %v1463 = vunpack.c.h.b16 %v882
    %v1464 = vunpack.c.l.b16 %v883
    %v1465 = vunpack.c.h.b16 %v883
    %v1466 = vunpack.c.l.b16 %v884
    %v1467 = vunpack.c.h.b16 %v884
    %v1468 = vunpack.c.l.b16 %v885
    %v1469 = vunpack.c.h.b16 %v885
    %v1470 = vunpack.c.l.b16 %v886
    %v1471 = vunpack.c.h.b16 %v886
    %v1472 = vunpack.c.l.b16 %v887
    %v1473 = vunpack.c.h.b16 %v887
    %v1474 = vunpack.c.l.b16 %v888
    %v1475 = vunpack.c.h.b16 %v888
    %v1476 = vunpack.c.l.b16 %v889
    %v1477 = vunpack.c.h.b16 %v889
    %v1478 = vunpack.c.l.b16 %v890
    %v1479 = vunpack.c.h.b16 %v890
    %v1480 = vunpack.c.l.b16 %v891
    %v1481 = vunpack.c.h.b16 %v891
    %v1482 = vunpack.c.l.b16 %v892
    %v1483 = vunpack.c.h.b16 %v892
    %v1484 = vunpack.c.l.b16 %v893
    %v1485 = vunpack.c.h.b16 %v893
    %v1486 = vunpack.c.l.b16 %v894
    %v1487 = vunpack.c.h.b16 %v894
    %v1488 = vunpack.c.l.b16 %v895
    %v1489 = vunpack.c.h.b16 %v895
    %v1490 = vunpack.c.l.b16 %v896
    %v1491 = vunpack.c.h.b16 %v896
    %v1492 = vunpack.c.l.b16 %v897
    %v1493 = vunpack.c.h.b16 %v897
    %v1494 = vunpack.c.l.b16 %v898
    %v1495 = vunpack.c.h.b16 %v898
    %v1496 = vunpack.c.l.b16 %v899
    %v1497 = vunpack.c.h.b16 %v899
    %v1498 = vunpack.c.l.b16 %v900
    %v1499 = vunpack.c.h.b16 %v900
    %v1500 = vunpack.c.l.b16 %v901
    %v1501 = vunpack.c.h.b16 %v901
    %v1502 = vunpack.c.l.b16 %v902
    %v1503 = vunpack.c.h.b16 %v902
    %v1504 = vunpack.c.l.b16 %v903
    %v1505 = vunpack.c.h.b16 %v903
    %v1506 = vunpack.c.l.b16 %v904
    %v1507 = vunpack.c.h.b16 %v904
    %v1508 = vunpack.c.l.b16 %v905
    %v1509 = vunpack.c.h.b16 %v905
    %v1510 = vunpack.c.l.b16 %v906
    %v1511 = vunpack.c.h.b16 %v906
    %v1512 = vunpack.c.l.b16 %v907
    %v1513 = vunpack.c.h.b16 %v907
    %v1514 = vunpack.c.l.b16 %v908
    %v1515 = vunpack.c.h.b16 %v908
    %v1516 = vunpack.c.l.b16 %v909
    %v1517 = vunpack.c.h.b16 %v909
    %v1518 = vunpack.c.l.b16 %v910
    %v1519 = vunpack.c.h.b16 %v910
    %v1520 = vunpack.c.l.b16 %v911
    %v1521 = vunpack.c.h.b16 %v911
    %v1522 = vunpack.c.l.b16 %v912
    %v1523 = vunpack.c.h.b16 %v912
    %v1524 = vunpack.c.l.b16 %v913
    %v1525 = vunpack.c.h.b16 %v913
    %v1526 = vunpack.c.l.b16 %v914
    %v1527 = vunpack.c.h.b16 %v914
    %v1528 = vunpack.c.l.b16 %v915
    %v1529 = vunpack.c.h.b16 %v915
    %v1530 = vunpack.c.l.b16 %v916
    %v1531 = vunpack.c.h.b16 %v916
    %v1532 = vunpack.c.l.b16 %v917
    %v1533 = vunpack.c.h.b16 %v917
    %v1534 = vunpack.c.l.b16 %v918
    %v1535 = vunpack.c.h.b16 %v918
    %v1536 = vunpack.c.l.b16 %v919
    %v1537 = vunpack.c.h.b16 %v919
    %v1538 = vunpack.c.l.b16 %v920
    %v1539 = vunpack.c.h.b16 %v920
    %v1540 = vunpack.c.l.b16 %v921
    %v1541 = vunpack.c.h.b16 %v921
    %v1542 = vunpack.c.l.b16 %v922
    %v1543 = vunpack.c.h.b16 %v922
    %v1544 = vunpack.c.l.b16 %v923
    %v1545 = vunpack.c.h.b16 %v923
    %v1546 = vunpack.c.l.b16 %v924
    %v1547 = vunpack.c.h.b16 %v924
    %v1548 = vunpack.c.l.b16 %v925
    %v1549 = vunpack.c.h.b16 %v925
    %v1550 = vunpack.c.l.b16 %v926
    %v1551 = vunpack.c.h.b16 %v926
    %v1552 = vunpack.c.l.b16 %v927
    %v1553 = vunpack.c.h.b16 %v927
    %v1554 = vunpack.c.l.b16 %v928
    %v1555 = vunpack.c.h.b16 %v928
    %v1556 = vunpack.c.l.b16 %v929
    %v1557 = vunpack.c.h.b16 %v929
    %v1558 = vunpack.c.l.b16 %v930
    %v1559 = vunpack.c.h.b16 %v930
    %v1560 = vunpack.c.l.b16 %v931
    %v1561 = vunpack.c.h.b16 %v931
    %v1562 = vunpack.c.l.b16 %v932
    %v1563 = vunpack.c.h.b16 %v932
    %v1564 = vunpack.c.l.b16 %v933
    %v1565 = vunpack.c.h.b16 %v933
    %v1566 = vunpack.c.l.b16 %v934
    %v1567 = vunpack.c.h.b16 %v934
    %v1568 = vunpack.c.l.b16 %v935
    %v1569 = vunpack.c.h.b16 %v935
    %v1570 = vunpack.c.l.b16 %v936
    %v1571 = vunpack.c.h.b16 %v936
    %v1572 = vunpack.c.l.b16 %v937
    %v1573 = vunpack.c.h.b16 %v937
    %v1574 = vunpack.c.l.b16 %v938
    %v1575 = vunpack.c.h.b16 %v938
    %v1576 = vunpack.c.l.b16 %v939
    %v1577 = vunpack.c.h.b16 %v939
    %v1578 = vunpack.c.l.b16 %v940
    %v1579 = vunpack.c.h.b16 %v940
    %v1580 = vunpack.c.l.b16 %v941
    %v1581 = vunpack.c.h.b16 %v941
    %v1582 = vunpack.c.l.b16 %v942
    %v1583 = vunpack.c.h.b16 %v942
    %v1584 = vunpack.c.l.b16 %v943
    %v1585 = vunpack.c.h.b16 %v943
    %v1586 = vunpack.c.l.b16 %v944
    %v1587 = vunpack.c.h.b16 %v944
    %v1588 = vunpack.c.l.b16 %v945
    %v1589 = vunpack.c.h.b16 %v945
    %v1590 = vunpack.c.l.b16 %v946
    %v1591 = vunpack.c.h.b16 %v946
    %v1592 = vunpack.c.l.b16 %v947
    %v1593 = vunpack.c.h.b16 %v947
    %v1594 = vunpack.c.l.b16 %v948
    %v1595 = vunpack.c.h.b16 %v948
    %v1596 = vunpack.c.l.b16 %v949
    %v1597 = vunpack.c.h.b16 %v949
    %v1598 = vunpack.c.l.b16 %v950
    %v1599 = vunpack.c.h.b16 %v950
    %v1600 = vunpack.c.l.b16 %v951
    %v1601 = vunpack.c.h.b16 %v951
    %v1602 = vunpack.c.l.b16 %v952
    %v1603 = vunpack.c.h.b16 %v952
    %v1604 = vunpack.c.l.b16 %v953
    %v1605 = vunpack.c.h.b16 %v953
    %v1606 = vunpack.c.l.b16 %v954
    %v1607 = vunpack.c.h.b16 %v954
    %v1608 = vunpack.c.l.b16 %v955
    %v1609 = vunpack.c.h.b16 %v955
    %v1610 = vunpack.c.l.b16 %v956
    %v1611 = vunpack.c.h.b16 %v956
    %v1612 = vunpack.c.l.b16 %v957
    %v1613 = vunpack.c.h.b16 %v957
    %v1614 = vunpack.c.l.b16 %v958
    %v1615 = vunpack.c.h.b16 %v958
    %v1616 = vunpack.c.l.b16 %v959
    %v1617 = vunpack.c.h.b16 %v959
    %v1618 = vunpack.c.l.b16 %v960
    %v1619 = vunpack.c.h.b16 %v960
    %v1620 = vunpack.c.l.b16 %v961
    %v1621 = vunpack.c.h.b16 %v961
    %v1622 = vunpack.c.l.b16 %v962
    %v1623 = vunpack.c.h.b16 %v962
    %v1624 = vunpack.c.l.b16 %v963
    %v1625 = vunpack.c.h.b16 %v963
    %v1626 = vunpack.c.l.b16 %v964
    %v1627 = vunpack.c.h.b16 %v964
    %v1628 = vunpack.c.l.b16 %v965
    %v1629 = vunpack.c.h.b16 %v965
    %v1630 = vunpack.c.l.b16 %v966
    %v1631 = vunpack.c.h.b16 %v966
    %v1632 = vunpack.c.l.b16 %v967
    %v1633 = vunpack.c.h.b16 %v967
    %v1634 = vunpack.c.l.b16 %v968
    %v1635 = vunpack.c.h.b16 %v968
    %v1636 = vunpack.c.l.b16 %v969
    %v1637 = vunpack.c.h.b16 %v969
    %v1638 = vunpack.c.l.b16 %v970
    %v1639 = vunpack.c.h.b16 %v970
    %v1640 = vunpack.c.l.b16 %v971
    %v1641 = vunpack.c.h.b16 %v971
    %v1642 = vunpack.c.l.b16 %v972
    %v1643 = vunpack.c.h.b16 %v972
    %v1644 = vunpack.c.l.b16 %v973
    %v1645 = vunpack.c.h.b16 %v973
    %v1646 = vunpack.c.l.b16 %v974
    %v1647 = vunpack.c.h.b16 %v974
    %v1648 = vunpack.c.l.b16 %v975
    %v1649 = vunpack.c.h.b16 %v975
    %v1650 = vunpack.c.l.b16 %v976
    %v1651 = vunpack.c.h.b16 %v976
    %v1652 = vunpack.c.l.b16 %v977
    %v1653 = vunpack.c.h.b16 %v977
    %v1654 = vunpack.c.l.b16 %v978
    %v1655 = vunpack.c.h.b16 %v978
    %v1656 = vunpack.c.l.b16 %v979
    %v1657 = vunpack.c.h.b16 %v979
    %v1658 = vunpack.c.l.b16 %v980
    %v1659 = vunpack.c.h.b16 %v980
    %v1660 = vunpack.c.l.b16 %v981
    %v1661 = vunpack.c.h.b16 %v981
    %v1662 = vunpack.c.l.b16 %v982
    %v1663 = vunpack.c.h.b16 %v982
    %v1664 = vunpack.c.l.b16 %v983
    %v1665 = vunpack.c.h.b16 %v983
    %v1666 = vunpack.c.l.b16 %v984
    %v1667 = vunpack.c.h.b16 %v984
    %v1668 = vunpack.c.l.b16 %v985
    %v1669 = vunpack.c.h.b16 %v985
    %v1670 = vunpack.c.l.b16 %v986
    %v1671 = vunpack.c.h.b16 %v986
    %v1672 = vunpack.c.l.b16 %v987
    %v1673 = vunpack.c.h.b16 %v987
    %v1674 = vunpack.c.l.b16 %v988
    %v1675 = vunpack.c.h.b16 %v988
    %v1676 = vunpack.c.l.b16 %v989
    %v1677 = vunpack.c.h.b16 %v989
    %v1678 = vunpack.c.l.b16 %v990
    %v1679 = vunpack.c.h.b16 %v990
    %v1680 = vunpack.c.l.b16 %v991
    %v1681 = vunpack.c.h.b16 %v991
    %v1682 = vunpack.c.l.b16 %v992
    %v1683 = vunpack.c.h.b16 %v992
    %v1684 = vunpack.c.l.b16 %v993
    %v1685 = vunpack.c.h.b16 %v993
    %v1686 = vunpack.c.l.b16 %v994
    %v1687 = vunpack.c.h.b16 %v994
    %v1688 = vunpack.c.l.b16 %v995
    %v1689 = vunpack.c.h.b16 %v995
    %v1690 = vunpack.c.l.b16 %v996
    %v1691 = vunpack.c.h.b16 %v996
    %v1692 = vunpack.c.l.b16 %v997
    %v1693 = vunpack.c.h.b16 %v997
    %v1694 = vunpack.c.l.b16 %v998
    %v1695 = vunpack.c.h.b16 %v998
    %v1696 = vunpack.c.l.b16 %v999
    %v1697 = vunpack.c.h.b16 %v999
    %v1698 = vunpack.c.l.b16 %v1000
    %v1699 = vunpack.c.h.b16 %v1000
    %v1700 = vunpack.c.l.b16 %v1001
    %v1701 = vunpack.c.h.b16 %v1001
    %v1702 = vunpack.c.l.b16 %v1002
    %v1703 = vunpack.c.h.b16 %v1002
    %v1704 = vunpack.c.l.b16 %v1003
    %v1705 = vunpack.c.h.b16 %v1003
    %v1706 = vunpack.c.l.b16 %v1004
    %v1707 = vunpack.c.h.b16 %v1004
    %v1708 = vunpack.c.l.b16 %v1005
    %v1709 = vunpack.c.h.b16 %v1005
    %v1710 = vunpack.c.l.b16 %v1006
    %v1711 = vunpack.c.h.b16 %v1006
    %v1712 = vunpack.c.l.b16 %v1007
    %v1713 = vunpack.c.h.b16 %v1007
    %v1714 = vunpack.c.l.b16 %v1008
    %v1715 = vunpack.c.h.b16 %v1008
    %v1716 = vunpack.c.l.b16 %v1009
    %v1717 = vunpack.c.h.b16 %v1009
    %v1718 = vunpack.c.l.b16 %v1010
    %v1719 = vunpack.c.h.b16 %v1010
    %v1720 = vunpack.c.l.b16 %v1011
    %v1721 = vunpack.c.h.b16 %v1011
    %v1722 = vunpack.c.l.b16 %v1012
    %v1723 = vunpack.c.h.b16 %v1012
    %v1724 = vunpack.c.l.b16 %v1013
    %v1725 = vunpack.c.h.b16 %v1013
    %v1726 = vunpack.c.l.b16 %v1014
    %v1727 = vunpack.c.h.b16 %v1014
    %v1728 = vunpack.c.l.b16 %v1015
    %v1729 = vunpack.c.h.b16 %v1015
    %v1730 = vunpack.c.l.b16 %v1016
    %v1731 = vunpack.c.h.b16 %v1016
    %v1732 = vunpack.c.l.b16 %v1017
    %v1733 = vunpack.c.h.b16 %v1017
    %v1734 = vunpack.c.l.b16 %v1018
    %v1735 = vunpack.c.h.b16 %v1018
    %v1736 = vunpack.c.l.b16 %v1019
    %v1737 = vunpack.c.h.b16 %v1019
    %v1738 = vunpack.c.l.b16 %v1020
    %v1739 = vunpack.c.h.b16 %v1020
    %v1740 = vunpack.c.l.b16 %v1021
    %v1741 = vunpack.c.h.b16 %v1021
    %v1742 = vunpack.c.l.b16 %v1022
    %v1743 = vunpack.c.h.b16 %v1022
    %v1744 = vunpack.c.l.b16 %v1023
    %v1745 = vunpack.c.h.b16 %v1023
    %v1746 = vunpack.c.l.b16 %v1024
    %v1747 = vunpack.c.h.b16 %v1024
    %v1748 = vunpack.c.l.b16 %v1025
    %v1749 = vunpack.c.h.b16 %v1025
    %v1750 = vunpack.c.l.b16 %v1026
    %v1751 = vunpack.c.h.b16 %v1026
    %v1752 = vunpack.c.l.b16 %v1027
    %v1753 = vunpack.c.h.b16 %v1027
    %v1754 = vunpack.c.l.b16 %v1028
    %v1755 = vunpack.c.h.b16 %v1028
    %v1756 = vunpack.c.l.b16 %v1029
    %v1757 = vunpack.c.h.b16 %v1029
    %v1758 = vunpack.c.l.b16 %v1030
    %v1759 = vunpack.c.h.b16 %v1030
    %v1760 = vunpack.c.l.b16 %v1031
    %v1761 = vunpack.c.h.b16 %v1031
    %v1762 = vunpack.c.l.b16 %v1032
    %v1763 = vunpack.c.h.b16 %v1032
    %v1764 = vunpack.c.l.b16 %v1033
    %v1765 = vunpack.c.h.b16 %v1033
    %v1766 = vunpack.c.l.b16 %v1034
    %v1767 = vunpack.c.h.b16 %v1034
    %v1768 = vunpack.c.l.b16 %v1035
    %v1769 = vunpack.c.h.b16 %v1035
    %v1770 = vunpack.c.l.b16 %v1036
    %v1771 = vunpack.c.h.b16 %v1036
    %v1772 = vunpack.c.l.b16 %v1037
    %v1773 = vunpack.c.h.b16 %v1037
    %v1774 = vunpack.c.l.b16 %v1038
    %v1775 = vunpack.c.h.b16 %v1038
    %v1776 = vunpack.c.l.b16 %v1039
    %v1777 = vunpack.c.h.b16 %v1039
    %v1778 = vunpack.c.l.b16 %v1040
    %v1779 = vunpack.c.h.b16 %v1040
    %v1780 = vunpack.c.l.b16 %v1041
    %v1781 = vunpack.c.h.b16 %v1041
    %v1782 = vunpack.c.l.b16 %v1042
    %v1783 = vunpack.c.h.b16 %v1042
    %v1784 = vunpack.c.l.b16 %v1043
    %v1785 = vunpack.c.h.b16 %v1043
    %v1786 = vunpack.c.l.b16 %v1044
    %v1787 = vunpack.c.h.b16 %v1044
    %v1788 = vunpack.c.l.b16 %v1045
    %v1789 = vunpack.c.h.b16 %v1045
    %v1790 = vunpack.c.l.b16 %v1046
    %v1791 = vunpack.c.h.b16 %v1046
    %v1792 = vunpack.c.l.b16 %v1047
    %v1793 = vunpack.c.h.b16 %v1047
    %v1794 = vunpack.c.l.b16 %v1048
    %v1795 = vunpack.c.h.b16 %v1048
    %v1796 = vunpack.c.l.b16 %v1049
    %v1797 = vunpack.c.h.b16 %v1049
    %v1798 = vunpack.c.l.b16 %v1050
    %v1799 = vunpack.c.h.b16 %v1050
    %v1800 = vunpack.c.l.b16 %v1051
    %v1801 = vunpack.c.h.b16 %v1051
    %v1802 = vunpack.c.l.b16 %v1052
    %v1803 = vunpack.c.h.b16 %v1052
    %v1804 = vunpack.c.l.b16 %v1053
    %v1805 = vunpack.c.h.b16 %v1053
    %v1806 = vunpack.c.l.b16 %v1054
    %v1807 = vunpack.c.h.b16 %v1054
    %v1808 = vunpack.c.l.b16 %v1055
    %v1809 = vunpack.c.h.b16 %v1055
    %v1810 = vunpack.c.l.b16 %v1056
    %v1811 = vunpack.c.h.b16 %v1056
    %v1812 = vunpack.c.l.b16 %v1057
    %v1813 = vunpack.c.h.b16 %v1057
    %v1814 = vunpack.c.l.b16 %v1058
    %v1815 = vunpack.c.h.b16 %v1058
    %v1816 = vunpack.c.l.b16 %v1059
    %v1817 = vunpack.c.h.b16 %v1059
    %v1818 = vunpack.c.l.b16 %v1060
    %v1819 = vunpack.c.h.b16 %v1060
    %v1820 = vunpack.c.l.b16 %v1061
    %v1821 = vunpack.c.h.b16 %v1061
    %v1822 = vunpack.c.l.b16 %v1062
    %v1823 = vunpack.c.h.b16 %v1062
    %v1824 = vunpack.c.l.b16 %v1063
    %v1825 = vunpack.c.h.b16 %v1063
    %v1826 = vunpack.c.l.b16 %v1064
    %v1827 = vunpack.c.h.b16 %v1064
    %v1828 = vunpack.c.l.b16 %v1065
    %v1829 = vunpack.c.h.b16 %v1065
    %v1830 = vunpack.c.l.b16 %v1066
    %v1831 = vunpack.c.h.b16 %v1066
    %v1832 = vunpack.c.l.b16 %v1067
    %v1833 = vunpack.c.h.b16 %v1067
    %v1834 = vunpack.c.l.b16 %v1068
    %v1835 = vunpack.c.h.b16 %v1068
    %v1836 = vunpack.c.l.b16 %v1069
    %v1837 = vunpack.c.h.b16 %v1069
    %v1838 = vunpack.c.l.b16 %v1070
    %v1839 = vunpack.c.h.b16 %v1070
    %v1840 = vunpack.c.l.b16 %v1071
    %v1841 = vunpack.c.h.b16 %v1071
    %v1842 = vunpack.c.l.b16 %v1072
    %v1843 = vunpack.c.h.b16 %v1072
    %v1844 = vunpack.c.l.b16 %v1073
    %v1845 = vunpack.c.h.b16 %v1073
    %v1846 = vunpack.c.l.b16 %v1074
    %v1847 = vunpack.c.h.b16 %v1074
    %v1848 = vunpack.c.l.b16 %v1075
    %v1849 = vunpack.c.h.b16 %v1075
    %v1850 = vunpack.c.l.b16 %v1076
    %v1851 = vunpack.c.h.b16 %v1076
    %v1852 = vunpack.c.l.b16 %v1077
    %v1853 = vunpack.c.h.b16 %v1077
    %v1854 = vunpack.c.l.b16 %v1078
    %v1855 = vunpack.c.h.b16 %v1078
    %v1856 = vunpack.c.l.b16 %v1079
    %v1857 = vunpack.c.h.b16 %v1079
    %v1858 = vunpack.c.l.b16 %v1080
    %v1859 = vunpack.c.h.b16 %v1080
    %v1860 = vunpack.c.l.b16 %v1081
    %v1861 = vunpack.c.h.b16 %v1081
    %v1862 = vunpack.c.l.b16 %v1082
    %v1863 = vunpack.c.h.b16 %v1082
    %v1864 = vunpack.c.l.b16 %v1083
    %v1865 = vunpack.c.h.b16 %v1083
    %v1866 = vunpack.c.l.b16 %v1084
    %v1867 = vunpack.c.h.b16 %v1084
    %v1868 = vunpack.c.l.b16 %v1085
    %v1869 = vunpack.c.h.b16 %v1085
    %v1870 = vunpack.c.l.b16 %v1086
    %v1871 = vunpack.c.h.b16 %v1086
    %v1872 = vunpack.c.l.b16 %v1087
    %v1873 = vunpack.c.h.b16 %v1087
    %v1874 = vunpack.c.l.b16 %v1088
    %v1875 = vunpack.c.h.b16 %v1088
    %v1876 = vunpack.c.l.b16 %v1089
    %v1877 = vunpack.c.h.b16 %v1089
    %v1878 = vunpack.c.l.b16 %v1090
    %v1879 = vunpack.c.h.b16 %v1090
    %v1880 = vunpack.c.l.b16 %v1091
    %v1881 = vunpack.c.h.b16 %v1091
    %v1882 = vpack.c.b16 %v1374, %v1370
    %v1883 = vpack.c.b16 %v1375, %v1371
    %v1884 = vpack.c.b16 %v1376, %v1372
    %v1885 = vpack.c.b16 %v1377, %v1373
    %v1886 = vpack.c.b16 %v1382, %v1378
    %v1887 = vpack.c.b16 %v1383, %v1379
    %v1888 = vpack.c.b16 %v1384, %v1380
    %v1889 = vpack.c.b16 %v1385, %v1381
    %v1890 = vpack.c.b16 %v1390, %v1386
    %v1891 = vpack.c.b16 %v1391, %v1387
    %v1892 = vpack.c.b16 %v1392, %v1388
    %v1893 = vpack.c.b16 %v1393, %v1389
    %v1894 = vpack.c.b16 %v1398, %v1394
    %v1895 = vpack.c.b16 %v1399, %v1395
    %v1896 = vpack.c.b16 %v1400, %v1396
    %v1897 = vpack.c.b16 %v1401, %v1397
    %v1898 = vpack.c.b16 %v1406, %v1402
    %v1899 = vpack.c.b16 %v1407, %v1403
    %v1900 = vpack.c.b16 %v1408, %v1404
    %v1901 = vpack.c.b16 %v1409, %v1405
    %v1902 = vpack.c.b16 %v1414, %v1410
    %v1903 = vpack.c.b16 %v1415, %v1411
    %v1904 = vpack.c.b16 %v1416, %v1412
    %v1905 = vpack.c.b16 %v1417, %v1413
    %v1906 = vpack.c.b16 %v1422, %v1418
    %v1907 = vpack.c.b16 %v1423, %v1419
    %v1908 = vpack.c.b16 %v1424, %v1420
    %v1909 = vpack.c.b16 %v1425, %v1421
    %v1910 = vpack.c.b16 %v1430, %v1426
    %v1911 = vpack.c.b16 %v1431, %v1427
    %v1912 = vpack.c.b16 %v1432, %v1428
    %v1913 = vpack.c.b16 %v1433, %v1429
    %v1914 = vpack.c.b16 %v1438, %v1434
    %v1915 = vpack.c.b16 %v1439, %v1435
    %v1916 = vpack.c.b16 %v1440, %v1436
    %v1917 = vpack.c.b16 %v1441, %v1437
    %v1918 = vpack.c.b16 %v1446, %v1442
    %v1919 = vpack.c.b16 %v1447, %v1443
    %v1920 = vpack.c.b16 %v1448, %v1444
    %v1921 = vpack.c.b16 %v1449, %v1445
    %v1922 = vpack.c.b16 %v1454, %v1450
    %v1923 = vpack.c.b16 %v1455, %v1451
    %v1924 = vpack.c.b16 %v1456, %v1452
    %v1925 = vpack.c.b16 %v1457, %v1453
    %v1926 = vpack.c.b16 %v1462, %v1458
    %v1927 = vpack.c.b16 %v1463, %v1459
    %v1928 = vpack.c.b16 %v1464, %v1460
    %v1929 = vpack.c.b16 %v1465, %v1461
    %v1930 = vpack.c.b16 %v1470, %v1466
    %v1931 = vpack.c.b16 %v1471, %v1467
    %v1932 = vpack.c.b16 %v1472, %v1468
    %v1933 = vpack.c.b16 %v1473, %v1469
    %v1934 = vpack.c.b16 %v1478, %v1474
    %v1935 = vpack.c.b16 %v1479, %v1475
    %v1936 = vpack.c.b16 %v1480, %v1476
    %v1937 = vpack.c.b16 %v1481, %v1477
    %v1938 = vpack.c.b16 %v1486, %v1482
    %v1939 = vpack.c.b16 %v1487, %v1483
    %v1940 = vpack.c.b16 %v1488, %v1484
    %v1941 = vpack.c.b16 %v1489, %v1485
    %v1942 = vpack.c.b16 %v1494, %v1490
    %v1943 = vpack.c.b16 %v1495, %v1491
    %v1944 = vpack.c.b16 %v1496, %v1492
    %v1945 = vpack.c.b16 %v1497, %v1493
    %v1946 = vpack.c.b16 %v1502, %v1498
    %v1947 = vpack.c.b16 %v1503, %v1499
    %v1948 = vpack.c.b16 %v1504, %v1500
    %v1949 = vpack.c.b16 %v1505, %v1501
    %v1950 = vpack.c.b16 %v1510, %v1506
    %v1951 = vpack.c.b16 %v1511, %v1507
    %v1952 = vpack.c.b16 %v1512, %v1508
    %v1953 = vpack.c.b16 %v1513, %v1509
    %v1954 = vpack.c.b16 %v1518, %v1514
    %v1955 = vpack.c.b16 %v1519, %v1515
    %v1956 = vpack.c.b16 %v1520, %v1516
    %v1957 = vpack.c.b16 %v1521, %v1517
    %v1958 = vpack.c.b16 %v1526, %v1522
    %v1959 = vpack.c.b16 %v1527, %v1523
    %v1960 = vpack.c.b16 %v1528, %v1524
    %v1961 = vpack.c.b16 %v1529, %v1525
    %v1962 = vpack.c.b16 %v1534, %v1530
    %v1963 = vpack.c.b16 %v1535, %v1531
    %v1964 = vpack.c.b16 %v1536, %v1532
    %v1965 = vpack.c.b16 %v1537, %v1533
    %v1966 = vpack.c.b16 %v1542, %v1538
    %v1967 = vpack.c.b16 %v1543, %v1539
    %v1968 = vpack.c.b16 %v1544, %v1540
    %v1969 = vpack.c.b16 %v1545, %v1541
    %v1970 = vpack.c.b16 %v1550, %v1546
    %v1971 = vpack.c.b16 %v1551, %v1547
    %v1972 = vpack.c.b16 %v1552, %v1548
    %v1973 = vpack.c.b16 %v1553, %v1549
    %v1974 = vpack.c.b16 %v1558, %v1554
    %v1975 = vpack.c.b16 %v1559, %v1555
    %v1976 = vpack.c.b16 %v1560, %v1556
    %v1977 = vpack.c.b16 %v1561, %v1557
    %v1978 = vpack.c.b16 %v1566, %v1562
    %v1979 = vpack.c.b16 %v1567, %v1563
    %v1980 = vpack.c.b16 %v1568, %v1564
    %v1981 = vpack.c.b16 %v1569, %v1565
    %v1982 = vpack.c.b16 %v1574, %v1570
    %v1983 = vpack.c.b16 %v1575, %v1571
    %v1984 = vpack.c.b16 %v1576, %v1572
    %v1985 = vpack.c.b16 %v1577, %v1573
    %v1986 = vpack.c.b16 %v1582, %v1578
    %v1987 = vpack.c.b16 %v1583, %v1579
    %v1988 = vpack.c.b16 %v1584, %v1580
    %v1989 = vpack.c.b16 %v1585, %v1581
    %v1990 = vpack.c.b16 %v1590, %v1586
    %v1991 = vpack.c.b16 %v1591, %v1587
    %v1992 = vpack.c.b16 %v1592, %v1588
    %v1993 = vpack.c.b16 %v1593, %v1589
    %v1994 = vpack.c.b16 %v1598, %v1594
    %v1995 = vpack.c.b16 %v1599, %v1595
    %v1996 = vpack.c.b16 %v1600, %v1596
    %v1997 = vpack.c.b16 %v1601, %v1597
    %v1998 = vpack.c.b16 %v1606, %v1602
    %v1999 = vpack.c.b16 %v1607, %v1603
    %v2000 = vpack.c.b16 %v1608, %v1604
    %v2001 = vpack.c.b16 %v1609, %v1605
    %v2002 = vpack.c.b16 %v1614, %v1610
    %v2003 = vpack.c.b16 %v1615, %v1611
    %v2004 = vpack.c.b16 %v1616, %v1612
    %v2005 = vpack.c.b16 %v1617, %v1613
    %v2006 = vpack.c.b16 %v1622, %v1618
    %v2007 = vpack.c.b16 %v1623, %v1619
    %v2008 = vpack.c.b16 %v1624, %v1620
    %v2009 = vpack.c.b16 %v1625, %v1621
    %v2010 = vpack.c.b16 %v1630, %v1626
    %v2011 = vpack.c.b16 %v1631, %v1627
    %v2012 = vpack.c.b16 %v1632, %v1628
    %v2013 = vpack.c.b16 %v1633, %v1629
    %v2014 = vpack.c.b16 %v1638, %v1634
    %v2015 = vpack.c.b16 %v1639, %v1635
    %v2016 = vpack.c.b16 %v1640, %v1636
    %v2017 = vpack.c.b16 %v1641, %v1637
    %v2018 = vpack.c.b16 %v1646, %v1642
    %v2019 = vpack.c.b16 %v1647, %v1643
    %v2020 = vpack.c.b16 %v1648, %v1644
    %v2021 = vpack.c.b16 %v1649, %v1645
    %v2022 = vpack.c.b16 %v1654, %v1650
    %v2023 = vpack.c.b16 %v1655, %v1651
    %v2024 = vpack.c.b16 %v1656, %v1652
    %v2025 = vpack.c.b16 %v1657, %v1653
    %v2026 = vpack.c.b16 %v1662, %v1658
    %v2027 = vpack.c.b16 %v1663, %v1659
    %v2028 = vpack.c.b16 %v1664, %v1660
    %v2029 = vpack.c.b16 %v1665, %v1661
    %v2030 = vpack.c.b16 %v1670, %v1666
    %v2031 = vpack.c.b16 %v1671, %v1667
    %v2032 = vpack.c.b16 %v1672, %v1668
    %v2033 = vpack.c.b16 %v1673, %v1669
    %v2034 = vpack.c.b16 %v1678, %v1674
    %v2035 = vpack.c.b16 %v1679, %v1675
    %v2036 = vpack.c.b16 %v1680, %v1676
    %v2037 = vpack.c.b16 %v1681, %v1677
    %v2038 = vpack.c.b16 %v1686, %v1682
    %v2039 = vpack.c.b16 %v1687, %v1683
    %v2040 = vpack.c.b16 %v1688, %v1684
    %v2041 = vpack.c.b16 %v1689, %v1685
    %v2042 = vpack.c.b16 %v1694, %v1690
    %v2043 = vpack.c.b16 %v1695, %v1691
    %v2044 = vpack.c.b16 %v1696, %v1692
    %v2045 = vpack.c.b16 %v1697, %v1693
    %v2046 = vpack.c.b16 %v1702, %v1698
    %v2047 = vpack.c.b16 %v1703, %v1699
    %v2048 = vpack.c.b16 %v1704, %v1700
    %v2049 = vpack.c.b16 %v1705, %v1701
    %v2050 = vpack.c.b16 %v1710, %v1706
    %v2051 = vpack.c.b16 %v1711, %v1707
    %v2052 = vpack.c.b16 %v1712, %v1708
    %v2053 = vpack.c.b16 %v1713, %v1709
    %v2054 = vpack.c.b16 %v1718, %v1714
    %v2055 = vpack.c.b16 %v1719, %v1715
    %v2056 = vpack.c.b16 %v1720, %v1716
    %v2057 = vpack.c.b16 %v1721, %v1717
    %v2058 = vpack.c.b16 %v1726, %v1722
    %v2059 = vpack.c.b16 %v1727, %v1723
    %v2060 = vpack.c.b16 %v1728, %v1724
    %v2061 = vpack.c.b16 %v1729, %v1725
    %v2062 = vpack.c.b16 %v1734, %v1730
    %v2063 = vpack.c.b16 %v1735, %v1731
    %v2064 = vpack.c.b16 %v1736, %v1732
    %v2065 = vpack.c.b16 %v1737, %v1733
    %v2066 = vpack.c.b16 %v1742, %v1738
    %v2067 = vpack.c.b16 %v1743, %v1739
    %v2068 = vpack.c.b16 %v1744, %v1740
    %v2069 = vpack.c.b16 %v1745, %v1741
    %v2070 = vpack.c.b16 %v1750, %v1746
    %v2071 = vpack.c.b16 %v1751, %v1747
    %v2072 = vpack.c.b16 %v1752, %v1748
    %v2073 = vpack.c.b16 %v1753, %v1749
    %v2074 = vpack.c.b16 %v1758, %v1754
    %v2075 = vpack.c.b16 %v1759, %v1755
    %v2076 = vpack.c.b16 %v1760, %v1756
    %v2077 = vpack.c.b16 %v1761, %v1757
    %v2078 = vpack.c.b16 %v1766, %v1762
    %v2079 = vpack.c.b16 %v1767, %v1763
    %v2080 = vpack.c.b16 %v1768, %v1764
    %v2081 = vpack.c.b16 %v1769, %v1765
    %v2082 = vpack.c.b16 %v1774, %v1770
    %v2083 = vpack.c.b16 %v1775, %v1771
    %v2084 = vpack.c.b16 %v1776, %v1772
    %v2085 = vpack.c.b16 %v1777, %v1773
    %v2086 = vpack.c.b16 %v1782, %v1778
    %v2087 = vpack.c.b16 %v1783, %v1779
    %v2088 = vpack.c.b16 %v1784, %v1780
    %v2089 = vpack.c.b16 %v1785, %v1781
    %v2090 = vpack.c.b16 %v1790, %v1786
    %v2091 = vpack.c.b16 %v1791, %v1787
    %v2092 = vpack.c.b16 %v1792, %v1788
    %v2093 = vpack.c.b16 %v1793, %v1789
    %v2094 = vpack.c.b16 %v1798, %v1794
    %v2095 = vpack.c.b16 %v1799, %v1795
    %v2096 = vpack.c.b16 %v1800, %v1796
    %v2097 = vpack.c.b16 %v1801, %v1797
    %v2098 = vpack.c.b16 %v1806, %v1802
    %v2099 = vpack.c.b16 %v1807, %v1803
    %v2100 = vpack.c.b16 %v1808, %v1804
    %v2101 = vpack.c.b16 %v1809, %v1805
    %v2102 = vpack.c.b16 %v1814, %v1810
    %v2103 = vpack.c.b16 %v1815, %v1811
    %v2104 = vpack.c.b16 %v1816, %v1812
    %v2105 = vpack.c.b16 %v1817, %v1813
    %v2106 = vpack.c.b16 %v1822, %v1818
    %v2107 = vpack.c.b16 %v1823, %v1819
    %v2108 = vpack.c.b16 %v1824, %v1820
    %v2109 = vpack.c.b16 %v1825, %v1821
    %v2110 = vpack.c.b16 %v1830, %v1826
    %v2111 = vpack.c.b16 %v1831, %v1827
    %v2112 = vpack.c.b16 %v1832, %v1828
    %v2113 = vpack.c.b16 %v1833, %v1829
    %v2114 = vpack.c.b16 %v1838, %v1834
    %v2115 = vpack.c.b16 %v1839, %v1835
    %v2116 = vpack.c.b16 %v1840, %v1836
    %v2117 = vpack.c.b16 %v1841, %v1837
    %v2118 = vpack.c.b16 %v1846, %v1842
    %v2119 = vpack.c.b16 %v1847, %v1843
    %v2120 = vpack.c.b16 %v1848, %v1844
    %v2121 = vpack.c.b16 %v1849, %v1845
    %v2122 = vpack.c.b16 %v1854, %v1850
    %v2123 = vpack.c.b16 %v1855, %v1851
    %v2124 = vpack.c.b16 %v1856, %v1852
    %v2125 = vpack.c.b16 %v1857, %v1853
    %v2126 = vpack.c.b16 %v1862, %v1858
    %v2127 = vpack.c.b16 %v1863, %v1859
    %v2128 = vpack.c.b16 %v1864, %v1860
    %v2129 = vpack.c.b16 %v1865, %v1861
    %v2130 = vpack.c.b16 %v1870, %v1866
    %v2131 = vpack.c.b16 %v1871, %v1867
    %v2132 = vpack.c.b16 %v1872, %v1868
    %v2133 = vpack.c.b16 %v1873, %v1869
    %v2134 = vpack.c.b16 %v1878, %v1874
    %v2135 = vpack.c.b16 %v1879, %v1875
    %v2136 = vpack.c.b16 %v1880, %v1876
    %v2137 = vpack.c.b16 %v1881, %v1877
    %2394 = vmatprep.subr.bf16.mxu0 %v1883
    %2395 = vmatpush1.bf16.msra.mxu0 %v1882
    %2396 = vmatprep.subr.bf16.mxu0 %v1887
    %2397 = vmatpush1.bf16.msra.mxu0 %v1886
    %2398 = vmatprep.subr.bf16.mxu0 %v1891
    %2399 = vmatpush1.bf16.msra.mxu0 %v1890
    %2400 = vmatprep.subr.bf16.mxu0 %v1895
    %2401 = vmatpush1.bf16.msra.mxu0 %v1894
    %2402 = vmatprep.subr.bf16.mxu0 %v1899
    %2403 = vmatpush1.bf16.msra.mxu0 %v1898
    %2404 = vmatprep.subr.bf16.mxu0 %v1903
    %2405 = vmatpush1.bf16.msra.mxu0 %v1902
    %2406 = vmatprep.subr.bf16.mxu0 %v1907
    %2407 = vmatpush1.bf16.msra.mxu0 %v1906
    %2408 = vmatprep.subr.bf16.mxu0 %v1911
    %2409 = vmatpush1.bf16.msra.mxu0 %v1910
    %2410 = vmatprep.subr.bf16.mxu0 %v1915
    %2411 = vmatpush1.bf16.msra.mxu0 %v1914
    %2412 = vmatprep.subr.bf16.mxu0 %v1919
    %2413 = vmatpush1.bf16.msra.mxu0 %v1918
    %2414 = vmatprep.subr.bf16.mxu0 %v1923
    %2415 = vmatpush1.bf16.msra.mxu0 %v1922
    %2416 = vmatprep.subr.bf16.mxu0 %v1927
    %2417 = vmatpush1.bf16.msra.mxu0 %v1926
    %2418 = vmatprep.subr.bf16.mxu0 %v1931
    %2419 = vmatpush1.bf16.msra.mxu0 %v1930
    %2420 = vmatprep.subr.bf16.mxu0 %v1935
    %2421 = vmatpush1.bf16.msra.mxu0 %v1934
    %2422 = vmatprep.subr.bf16.mxu0 %v1939
    %2423 = vmatpush1.bf16.msra.mxu0 %v1938
    %2424 = vmatprep.subr.bf16.mxu0 %v1943
    %2425 = vmatpush1.bf16.msra.mxu0 %v1942
    %2426 = vmatprep.mubr.bf16.mxu0 %v829
    %2427 = vmatmul.mubr.bf16.gmra.mrb[0].mxu0 %v828
    %v2428 = vpop.f32.mrb[0].mxu0
    %v2429 = vadd.f32 %v1097, %v2428
    %v2430 = vpop.f32.mrb[0].mxu0
    %v2431 = vadd.f32 %v1101, %v2430
    %v2432 = vpop.f32.mrb[0].mxu0
    %v2433 = vpop.f32.mrb[0].mxu0
    %2434 = vdwg.mxu0
    %2435 = vmatprep.subr.bf16.mxu0 %v1947
    %2436 = vmatpush1.bf16.msra.mxu0 %v1946
    %2437 = vmatprep.subr.bf16.mxu0 %v1951
    %2438 = vmatpush1.bf16.msra.mxu0 %v1950
    %2439 = vmatprep.subr.bf16.mxu0 %v1955
    %2440 = vmatpush1.bf16.msra.mxu0 %v1954
    %2441 = vmatprep.subr.bf16.mxu0 %v1959
    %2442 = vmatpush1.bf16.msra.mxu0 %v1958
    %2443 = vmatprep.subr.bf16.mxu0 %v1963
    %2444 = vmatpush1.bf16.msra.mxu0 %v1962
    %2445 = vmatprep.subr.bf16.mxu0 %v1967
    %2446 = vmatpush1.bf16.msra.mxu0 %v1966
    %2447 = vmatprep.subr.bf16.mxu0 %v1971
    %2448 = vmatpush1.bf16.msra.mxu0 %v1970
    %2449 = vmatprep.subr.bf16.mxu0 %v1975
    %2450 = vmatpush1.bf16.msra.mxu0 %v1974
    %2451 = vmatprep.subr.bf16.mxu0 %v1979
    %2452 = vmatpush1.bf16.msra.mxu0 %v1978
    %2453 = vmatprep.subr.bf16.mxu0 %v1983
    %2454 = vmatpush1.bf16.msra.mxu0 %v1982
    %2455 = vmatprep.subr.bf16.mxu0 %v1987
    %2456 = vmatpush1.bf16.msra.mxu0 %v1986
    %2457 = vmatprep.subr.bf16.mxu0 %v1991
    %2458 = vmatpush1.bf16.msra.mxu0 %v1990
    %2459 = vmatprep.subr.bf16.mxu0 %v1995
    %2460 = vmatpush1.bf16.msra.mxu0 %v1994
    %2461 = vmatprep.subr.bf16.mxu0 %v1999
    %2462 = vmatpush1.bf16.msra.mxu0 %v1998
    %2463 = vmatprep.subr.bf16.mxu0 %v2003
    %2464 = vmatpush1.bf16.msra.mxu0 %v2002
    %2465 = vmatprep.subr.bf16.mxu0 %v2007
    %2466 = vmatpush1.bf16.msra.mxu0 %v2006
    %2467 = vmatprep.mubr.bf16.mxu0 %v831
    %2468 = vmatmul.mubr.bf16.gmra.mrb[0].mxu0 %v830
    %v2469 = vpop.f32.mrb[0].mxu0
    %v2470 = vadd.f32 %v2429, %v2469
    %v2471 = vpop.f32.mrb[0].mxu0
    %v2472 = vadd.f32 %v2431, %v2471
    %v2473 = vpop.f32.mrb[0].mxu0
    %v2474 = vpop.f32.mrb[0].mxu0
    %2475 = vdwg.mxu0
    %2476 = vmatprep.subr.bf16.mxu0 %v2011
    %2477 = vmatpush1.bf16.msra.mxu0 %v2010
    %2478 = vmatprep.subr.bf16.mxu0 %v2015
    %2479 = vmatpush1.bf16.msra.mxu0 %v2014
    %2480 = vmatprep.subr.bf16.mxu0 %v2019
    %2481 = vmatpush1.bf16.msra.mxu0 %v2018
    %2482 = vmatprep.subr.bf16.mxu0 %v2023
    %2483 = vmatpush1.bf16.msra.mxu0 %v2022
    %2484 = vmatprep.subr.bf16.mxu0 %v2027
    %2485 = vmatpush1.bf16.msra.mxu0 %v2026
    %2486 = vmatprep.subr.bf16.mxu0 %v2031
    %2487 = vmatpush1.bf16.msra.mxu0 %v2030
    %2488 = vmatprep.subr.bf16.mxu0 %v2035
    %2489 = vmatpush1.bf16.msra.mxu0 %v2034
    %2490 = vmatprep.subr.bf16.mxu0 %v2039
    %2491 = vmatpush1.bf16.msra.mxu0 %v2038
    %2492 = vmatprep.subr.bf16.mxu0 %v2043
    %2493 = vmatpush1.bf16.msra.mxu0 %v2042
    %2494 = vmatprep.subr.bf16.mxu0 %v2047
    %2495 = vmatpush1.bf16.msra.mxu0 %v2046
    %2496 = vmatprep.subr.bf16.mxu0 %v2051
    %2497 = vmatpush1.bf16.msra.mxu0 %v2050
    %2498 = vmatprep.subr.bf16.mxu0 %v2055
    %2499 = vmatpush1.bf16.msra.mxu0 %v2054
    %2500 = vmatprep.subr.bf16.mxu0 %v2059
    %2501 = vmatpush1.bf16.msra.mxu0 %v2058
    %2502 = vmatprep.subr.bf16.mxu0 %v2063
    %2503 = vmatpush1.bf16.msra.mxu0 %v2062
    %2504 = vmatprep.subr.bf16.mxu0 %v2067
    %2505 = vmatpush1.bf16.msra.mxu0 %v2066
    %2506 = vmatprep.subr.bf16.mxu0 %v2071
    %2507 = vmatpush1.bf16.msra.mxu0 %v2070
    %2508 = vmatprep.mubr.bf16.mxu0 %v833
    %2509 = vmatmul.mubr.bf16.gmra.mrb[0].mxu0 %v832
    %v2510 = vpop.f32.mrb[0].mxu0
    %v2511 = vadd.f32 %v2470, %v2510
    %v2512 = vpop.f32.mrb[0].mxu0
    %v2513 = vadd.f32 %v2472, %v2512
    %v2514 = vpop.f32.mrb[0].mxu0
    %v2515 = vpop.f32.mrb[0].mxu0
    %2516 = vdwg.mxu0
    %2517 = vmatprep.subr.bf16.mxu0 %v2075
    %2518 = vmatpush1.bf16.msra.mxu0 %v2074
    %2519 = vmatprep.subr.bf16.mxu0 %v2079
    %2520 = vmatpush1.bf16.msra.mxu0 %v2078
    %2521 = vmatprep.subr.bf16.mxu0 %v2083
    %2522 = vmatpush1.bf16.msra.mxu0 %v2082
    %2523 = vmatprep.subr.bf16.mxu0 %v2087
    %2524 = vmatpush1.bf16.msra.mxu0 %v2086
    %2525 = vmatprep.subr.bf16.mxu0 %v2091
    %2526 = vmatpush1.bf16.msra.mxu0 %v2090
    %2527 = vmatprep.subr.bf16.mxu0 %v2095
    %2528 = vmatpush1.bf16.msra.mxu0 %v2094
    %2529 = vmatprep.subr.bf16.mxu0 %v2099
    %2530 = vmatpush1.bf16.msra.mxu0 %v2098
    %2531 = vmatprep.subr.bf16.mxu0 %v2103
    %2532 = vmatpush1.bf16.msra.mxu0 %v2102
    %2533 = vmatprep.subr.bf16.mxu0 %v2107
    %2534 = vmatpush1.bf16.msra.mxu0 %v2106
    %2535 = vmatprep.subr.bf16.mxu0 %v2111
    %2536 = vmatpush1.bf16.msra.mxu0 %v2110
    %2537 = vmatprep.subr.bf16.mxu0 %v2115
    %2538 = vmatpush1.bf16.msra.mxu0 %v2114
    %2539 = vmatprep.subr.bf16.mxu0 %v2119
    %2540 = vmatpush1.bf16.msra.mxu0 %v2118
    %2541 = vmatprep.subr.bf16.mxu0 %v2123
    %2542 = vmatpush1.bf16.msra.mxu0 %v2122
    %2543 = vmatprep.subr.bf16.mxu0 %v2127
    %2544 = vmatpush1.bf16.msra.mxu0 %v2126
    %2545 = vmatprep.subr.bf16.mxu0 %v2131
    %2546 = vmatpush1.bf16.msra.mxu0 %v2130
    %2547 = vmatprep.subr.bf16.mxu0 %v2135
    %2548 = vmatpush1.bf16.msra.mxu0 %v2134
    %2549 = vmatprep.mubr.bf16.mxu0 %v835
    %2550 = vmatmul.mubr.bf16.gmra.mrb[0].mxu0 %v834
    %v2551 = vpop.f32.mrb[0].mxu0
    %v2552 = vadd.f32 %v2511, %v2551
    %v2553 = vpop.f32.mrb[0].mxu0
    %v2554 = vadd.f32 %v2513, %v2553
    %v2555 = vpop.f32.mrb[0].mxu0
    %v2556 = vpop.f32.mrb[0].mxu0
    %2557 = vdwg.mxu0
    %2558 = vmatprep.subr.bf16.mxu0 %v1885
    %2559 = vmatpush1.bf16.msra.mxu0 %v1884
    %2560 = vmatprep.subr.bf16.mxu0 %v1889
    %2561 = vmatpush1.bf16.msra.mxu0 %v1888
    %2562 = vmatprep.subr.bf16.mxu0 %v1893
    %2563 = vmatpush1.bf16.msra.mxu0 %v1892
    %2564 = vmatprep.subr.bf16.mxu0 %v1897
    %2565 = vmatpush1.bf16.msra.mxu0 %v1896
    %2566 = vmatprep.subr.bf16.mxu0 %v1901
    %2567 = vmatpush1.bf16.msra.mxu0 %v1900
    %2568 = vmatprep.subr.bf16.mxu0 %v1905
    %2569 = vmatpush1.bf16.msra.mxu0 %v1904
    %2570 = vmatprep.subr.bf16.mxu0 %v1909
    %2571 = vmatpush1.bf16.msra.mxu0 %v1908
    %2572 = vmatprep.subr.bf16.mxu0 %v1913
    %2573 = vmatpush1.bf16.msra.mxu0 %v1912
    %2574 = vmatprep.subr.bf16.mxu0 %v1917
    %2575 = vmatpush1.bf16.msra.mxu0 %v1916
    %2576 = vmatprep.subr.bf16.mxu0 %v1921
    %2577 = vmatpush1.bf16.msra.mxu0 %v1920
    %2578 = vmatprep.subr.bf16.mxu0 %v1925
    %2579 = vmatpush1.bf16.msra.mxu0 %v1924
    %2580 = vmatprep.subr.bf16.mxu0 %v1929
    %2581 = vmatpush1.bf16.msra.mxu0 %v1928
    %2582 = vmatprep.subr.bf16.mxu0 %v1933
    %2583 = vmatpush1.bf16.msra.mxu0 %v1932
    %2584 = vmatprep.subr.bf16.mxu0 %v1937
    %2585 = vmatpush1.bf16.msra.mxu0 %v1936
    %2586 = vmatprep.subr.bf16.mxu0 %v1941
    %2587 = vmatpush1.bf16.msra.mxu0 %v1940
    %2588 = vmatprep.subr.bf16.mxu0 %v1945
    %2589 = vmatpush1.bf16.msra.mxu0 %v1944
    %2590 = vmatprep.mubr.bf16.mxu0 %v829
    %2591 = vmatmul.mubr.bf16.gmra.mrb[0].mxu0 %v828
    %v2592 = vpop.f32.mrb[0].mxu0
    %v2593 = vadd.f32 %v1105, %v2592
    %v2594 = vpop.f32.mrb[0].mxu0
    %v2595 = vadd.f32 %v1109, %v2594
    %v2596 = vpop.f32.mrb[0].mxu0
    %v2597 = vpop.f32.mrb[0].mxu0
    %2598 = vdwg.mxu0
    %2599 = vmatprep.subr.bf16.mxu0 %v1949
    %2600 = vmatpush1.bf16.msra.mxu0 %v1948
    %2601 = vmatprep.subr.bf16.mxu0 %v1953
    %2602 = vmatpush1.bf16.msra.mxu0 %v1952
    %2603 = vmatprep.subr.bf16.mxu0 %v1957
    %2604 = vmatpush1.bf16.msra.mxu0 %v1956
    %2605 = vmatprep.subr.bf16.mxu0 %v1961
    %2606 = vmatpush1.bf16.msra.mxu0 %v1960
    %2607 = vmatprep.subr.bf16.mxu0 %v1965
    %2608 = vmatpush1.bf16.msra.mxu0 %v1964
    %2609 = vmatprep.subr.bf16.mxu0 %v1969
    %2610 = vmatpush1.bf16.msra.mxu0 %v1968
    %2611 = vmatprep.subr.bf16.mxu0 %v1973
    %2612 = vmatpush1.bf16.msra.mxu0 %v1972
    %2613 = vmatprep.subr.bf16.mxu0 %v1977
    %2614 = vmatpush1.bf16.msra.mxu0 %v1976
    %2615 = vmatprep.subr.bf16.mxu0 %v1981
    %2616 = vmatpush1.bf16.msra.mxu0 %v1980
    %2617 = vmatprep.subr.bf16.mxu0 %v1985
    %2618 = vmatpush1.bf16.msra.mxu0 %v1984
    %2619 = vmatprep.subr.bf16.mxu0 %v1989
    %2620 = vmatpush1.bf16.msra.mxu0 %v1988
    %2621 = vmatprep.subr.bf16.mxu0 %v1993
    %2622 = vmatpush1.bf16.msra.mxu0 %v1992
    %2623 = vmatprep.subr.bf16.mxu0 %v1997
    %2624 = vmatpush1.bf16.msra.mxu0 %v1996
    %2625 = vmatprep.subr.bf16.mxu0 %v2001
    %2626 = vmatpush1.bf16.msra.mxu0 %v2000
    %2627 = vmatprep.subr.bf16.mxu0 %v2005
    %2628 = vmatpush1.bf16.msra.mxu0 %v2004
    %2629 = vmatprep.subr.bf16.mxu0 %v2009
    %2630 = vmatpush1.bf16.msra.mxu0 %v2008
    %2631 = vmatprep.mubr.bf16.mxu0 %v831
    %2632 = vmatmul.mubr.bf16.gmra.mrb[0].mxu0 %v830
    %v2633 = vpop.f32.mrb[0].mxu0
    %v2634 = vadd.f32 %v2593, %v2633
    %v2635 = vpop.f32.mrb[0].mxu0
    %v2636 = vadd.f32 %v2595, %v2635
    %v2637 = vpop.f32.mrb[0].mxu0
    %v2638 = vpop.f32.mrb[0].mxu0
    %2639 = vdwg.mxu0
    %2640 = vmatprep.subr.bf16.mxu0 %v2013
    %2641 = vmatpush1.bf16.msra.mxu0 %v2012
    %2642 = vmatprep.subr.bf16.mxu0 %v2017
    %2643 = vmatpush1.bf16.msra.mxu0 %v2016
    %2644 = vmatprep.subr.bf16.mxu0 %v2021
    %2645 = vmatpush1.bf16.msra.mxu0 %v2020
    %2646 = vmatprep.subr.bf16.mxu0 %v2025
    %2647 = vmatpush1.bf16.msra.mxu0 %v2024
    %2648 = vmatprep.subr.bf16.mxu0 %v2029
    %2649 = vmatpush1.bf16.msra.mxu0 %v2028
    %2650 = vmatprep.subr.bf16.mxu0 %v2033
    %2651 = vmatpush1.bf16.msra.mxu0 %v2032
    %2652 = vmatprep.subr.bf16.mxu0 %v2037
    %2653 = vmatpush1.bf16.msra.mxu0 %v2036
    %2654 = vmatprep.subr.bf16.mxu0 %v2041
    %2655 = vmatpush1.bf16.msra.mxu0 %v2040
    %2656 = vmatprep.subr.bf16.mxu0 %v2045
    %2657 = vmatpush1.bf16.msra.mxu0 %v2044
    %2658 = vmatprep.subr.bf16.mxu0 %v2049
    %2659 = vmatpush1.bf16.msra.mxu0 %v2048
    %2660 = vmatprep.subr.bf16.mxu0 %v2053
    %2661 = vmatpush1.bf16.msra.mxu0 %v2052
    %2662 = vmatprep.subr.bf16.mxu0 %v2057
    %2663 = vmatpush1.bf16.msra.mxu0 %v2056
    %2664 = vmatprep.subr.bf16.mxu0 %v2061
    %2665 = vmatpush1.bf16.msra.mxu0 %v2060
    %2666 = vmatprep.subr.bf16.mxu0 %v2065
    %2667 = vmatpush1.bf16.msra.mxu0 %v2064
    %2668 = vmatprep.subr.bf16.mxu0 %v2069
    %2669 = vmatpush1.bf16.msra.mxu0 %v2068
    %2670 = vmatprep.subr.bf16.mxu0 %v2073
    %2671 = vmatpush1.bf16.msra.mxu0 %v2072
    %2672 = vmatprep.mubr.bf16.mxu0 %v833
    %2673 = vmatmul.mubr.bf16.gmra.mrb[0].mxu0 %v832
    %v2674 = vpop.f32.mrb[0].mxu0
    %v2675 = vadd.f32 %v2634, %v2674
    %v2676 = vpop.f32.mrb[0].mxu0
    %v2677 = vadd.f32 %v2636, %v2676
    %v2678 = vpop.f32.mrb[0].mxu0
    %v2679 = vpop.f32.mrb[0].mxu0
    %2680 = vdwg.mxu0
    %2681 = vmatprep.subr.bf16.mxu0 %v2077
    %2682 = vmatpush1.bf16.msra.mxu0 %v2076
    %2683 = vmatprep.subr.bf16.mxu0 %v2081
    %2684 = vmatpush1.bf16.msra.mxu0 %v2080
    %2685 = vmatprep.subr.bf16.mxu0 %v2085
    %2686 = vmatpush1.bf16.msra.mxu0 %v2084
    %2687 = vmatprep.subr.bf16.mxu0 %v2089
    %2688 = vmatpush1.bf16.msra.mxu0 %v2088
    %2689 = vmatprep.subr.bf16.mxu0 %v2093
    %2690 = vmatpush1.bf16.msra.mxu0 %v2092
    %2691 = vmatprep.subr.bf16.mxu0 %v2097
    %2692 = vmatpush1.bf16.msra.mxu0 %v2096
    %2693 = vmatprep.subr.bf16.mxu0 %v2101
    %2694 = vmatpush1.bf16.msra.mxu0 %v2100
    %2695 = vmatprep.subr.bf16.mxu0 %v2105
    %2696 = vmatpush1.bf16.msra.mxu0 %v2104
    %2697 = vmatprep.subr.bf16.mxu0 %v2109
    %2698 = vmatpush1.bf16.msra.mxu0 %v2108
    %2699 = vmatprep.subr.bf16.mxu0 %v2113
    %2700 = vmatpush1.bf16.msra.mxu0 %v2112
    %2701 = vmatprep.subr.bf16.mxu0 %v2117
    %2702 = vmatpush1.bf16.msra.mxu0 %v2116
    %2703 = vmatprep.subr.bf16.mxu0 %v2121
    %2704 = vmatpush1.bf16.msra.mxu0 %v2120
    %2705 = vmatprep.subr.bf16.mxu0 %v2125
    %2706 = vmatpush1.bf16.msra.mxu0 %v2124
    %2707 = vmatprep.subr.bf16.mxu0 %v2129
    %2708 = vmatpush1.bf16.msra.mxu0 %v2128
    %2709 = vmatprep.subr.bf16.mxu0 %v2133
    %2710 = vmatpush1.bf16.msra.mxu0 %v2132
    %2711 = vmatprep.subr.bf16.mxu0 %v2137
    %2712 = vmatpush1.bf16.msra.mxu0 %v2136
    %2713 = vmatprep.mubr.bf16.mxu0 %v835
    %2714 = vmatmul.mubr.bf16.gmra.mrb[0].mxu0 %v834
    %v2715 = vpop.f32.mrb[0].mxu0
    %v2716 = vadd.f32 %v2675, %v2715
    %v2717 = vpop.f32.mrb[0].mxu0
    %v2718 = vadd.f32 %v2677, %v2717
    %v2719 = vpop.f32.mrb[0].mxu0
    %v2720 = vpop.f32.mrb[0].mxu0
    %2721 = vdwg.mxu0
    %v2722 = vmax.f32 %v2552, 0.0
    %v2723 = vmax.f32 %v2554, 0.0
    %v2724 = vmax.f32 %v2716, 0.0
    %v2725 = vmax.f32 %v2718, 0.0
    %v2726 = vpack.c.bf16 %v2722, %v2722
    %v2727 = vpack.c.bf16 %v2723, %v2723
    %v2728 = vpack.c.bf16 %v2724, %v2724
    %v2729 = vpack.c.bf16 %v2725, %v2725
    %v2730 = vld [vmem:[%s6] sm:$0xf]
    %v2731 = vld [vmem:[%s6 + $0x4] sm:$0xf]
    %v2732 = vld [vmem:[%s6 + $0x8] sm:$0xf]
    %v2733 = vld [vmem:[%s6 + $0xc] sm:$0xf]
    %v2734 = vld [vmem:[%s6 + $0x10] sm:$0xf]
    %v2735 = vld [vmem:[%s6 + $0x14] sm:$0xf]
    %v2736 = vld [vmem:[%s6 + $0x18] sm:$0xf]
    %v2737 = vld [vmem:[%s6 + $0x1c] sm:$0xf]
    %v2738 = vld [vmem:[%s6 + $0x20] sm:$0xf]
    %v2739 = vld [vmem:[%s6 + $0x24] sm:$0xf]
    %v2740 = vld [vmem:[%s6 + $0x28] sm:$0xf]
    %v2741 = vld [vmem:[%s6 + $0x2c] sm:$0xf]
    %v2742 = vld [vmem:[%s6 + $0x30] sm:$0xf]
    %v2743 = vld [vmem:[%s6 + $0x34] sm:$0xf]
    %v2744 = vld [vmem:[%s6 + $0x38] sm:$0xf]
    %v2745 = vld [vmem:[%s6 + $0x3c] sm:$0xf]
    %v2746 = vld [vmem:[%s6 + $0x40] sm:$0xf]
    %v2747 = vld [vmem:[%s6 + $0x44] sm:$0xf]
    %v2748 = vld [vmem:[%s6 + $0x48] sm:$0xf]
    %v2749 = vld [vmem:[%s6 + $0x4c] sm:$0xf]
    %v2750 = vld [vmem:[%s6 + $0x50] sm:$0xf]
    %v2751 = vld [vmem:[%s6 + $0x54] sm:$0xf]
    %v2752 = vld [vmem:[%s6 + $0x58] sm:$0xf]
    %v2753 = vld [vmem:[%s6 + $0x5c] sm:$0xf]
    %v2754 = vld [vmem:[%s6 + $0x60] sm:$0xf]
    %v2755 = vld [vmem:[%s6 + $0x64] sm:$0xf]
    %v2756 = vld [vmem:[%s6 + $0x68] sm:$0xf]
    %v2757 = vld [vmem:[%s6 + $0x6c] sm:$0xf]
    %v2758 = vld [vmem:[%s6 + $0x70] sm:$0xf]
    %v2759 = vld [vmem:[%s6 + $0x74] sm:$0xf]
    %v2760 = vld [vmem:[%s6 + $0x78] sm:$0xf]
    %v2761 = vld [vmem:[%s6 + $0x7c] sm:$0xf]
    %v2762 = vld [vmem:[%s6 + $0x80] sm:$0xf]
    %v2763 = vld [vmem:[%s6 + $0x84] sm:$0xf]
    %v2764 = vld [vmem:[%s6 + $0x88] sm:$0xf]
    %v2765 = vld [vmem:[%s6 + $0x8c] sm:$0xf]
    %v2766 = vld [vmem:[%s6 + $0x90] sm:$0xf]
    %v2767 = vld [vmem:[%s6 + $0x94] sm:$0xf]
    %v2768 = vld [vmem:[%s6 + $0x98] sm:$0xf]
    %v2769 = vld [vmem:[%s6 + $0x9c] sm:$0xf]
    %v2770 = vld [vmem:[%s6 + $0xa0] sm:$0xf]
    %v2771 = vld [vmem:[%s6 + $0xa4] sm:$0xf]
    %v2772 = vld [vmem:[%s6 + $0xa8] sm:$0xf]
    %v2773 = vld [vmem:[%s6 + $0xac] sm:$0xf]
    %v2774 = vld [vmem:[%s6 + $0xb0] sm:$0xf]
    %v2775 = vld [vmem:[%s6 + $0xb4] sm:$0xf]
    %v2776 = vld [vmem:[%s6 + $0xb8] sm:$0xf]
    %v2777 = vld [vmem:[%s6 + $0xbc] sm:$0xf]
    %v2778 = vld [vmem:[%s6 + $0xc0] sm:$0xf]
    %v2779 = vld [vmem:[%s6 + $0xc4] sm:$0xf]
    %v2780 = vld [vmem:[%s6 + $0xc8] sm:$0xf]
    %v2781 = vld [vmem:[%s6 + $0xcc] sm:$0xf]
    %v2782 = vld [vmem:[%s6 + $0xd0] sm:$0xf]
    %v2783 = vld [vmem:[%s6 + $0xd4] sm:$0xf]
    %v2784 = vld [vmem:[%s6 + $0xd8] sm:$0xf]
    %v2785 = vld [vmem:[%s6 + $0xdc] sm:$0xf]
    %v2786 = vld [vmem:[%s6 + $0xe0] sm:$0xf]
    %v2787 = vld [vmem:[%s6 + $0xe4] sm:$0xf]
    %v2788 = vld [vmem:[%s6 + $0xe8] sm:$0xf]
    %v2789 = vld [vmem:[%s6 + $0xec] sm:$0xf]
    %v2790 = vld [vmem:[%s6 + $0xf0] sm:$0xf]
    %v2791 = vld [vmem:[%s6 + $0xf4] sm:$0xf]
    %v2792 = vld [vmem:[%s6 + $0xf8] sm:$0xf]
    %v2793 = vld [vmem:[%s6 + $0xfc] sm:$0xf]
    %v2794 = vld [vmem:[#allocation8] sm:$0x1]
    %v2796 = vlaneseq
    %v2797 = vshrl.u32 %v2796, 7
    %v2798 = vsub.s32 0, %v2797
    %v2799 = vrot.slane %v2794, %v2798
    %v2865 = vunpack.c.l.b16 %v2730
    %v2866 = vunpack.c.l.b16 %v2731
    %v2867 = vunpack.c.l.b16 %v2732
    %v2868 = vunpack.c.l.b16 %v2733
    %v2869 = vunpack.c.l.b16 %v2734
    %v2870 = vunpack.c.l.b16 %v2735
    %v2871 = vunpack.c.l.b16 %v2736
    %v2872 = vunpack.c.l.b16 %v2737
    %v2873 = vunpack.c.l.b16 %v2738
    %v2874 = vunpack.c.l.b16 %v2739
    %v2875 = vunpack.c.l.b16 %v2740
    %v2876 = vunpack.c.l.b16 %v2741
    %v2877 = vunpack.c.l.b16 %v2742
    %v2878 = vunpack.c.l.b16 %v2743
    %v2879 = vunpack.c.l.b16 %v2744
    %v2880 = vunpack.c.l.b16 %v2745
    %v2881 = vunpack.c.l.b16 %v2746
    %v2882 = vunpack.c.l.b16 %v2747
    %v2883 = vunpack.c.l.b16 %v2748
    %v2884 = vunpack.c.l.b16 %v2749
    %v2885 = vunpack.c.l.b16 %v2750
    %v2886 = vunpack.c.l.b16 %v2751
    %v2887 = vunpack.c.l.b16 %v2752
    %v2888 = vunpack.c.l.b16 %v2753
    %v2889 = vunpack.c.l.b16 %v2754
    %v2890 = vunpack.c.l.b16 %v2755
    %v2891 = vunpack.c.l.b16 %v2756
    %v2892 = vunpack.c.l.b16 %v2757
    %v2893 = vunpack.c.l.b16 %v2758
    %v2894 = vunpack.c.l.b16 %v2759
    %v2895 = vunpack.c.l.b16 %v2760
    %v2896 = vunpack.c.l.b16 %v2761
    %v2897 = vunpack.c.l.b16 %v2762
    %v2898 = vunpack.c.l.b16 %v2763
    %v2899 = vunpack.c.l.b16 %v2764
    %v2900 = vunpack.c.l.b16 %v2765
    %v2901 = vunpack.c.l.b16 %v2766
    %v2902 = vunpack.c.l.b16 %v2767
    %v2903 = vunpack.c.l.b16 %v2768
    %v2904 = vunpack.c.l.b16 %v2769
    %v2905 = vunpack.c.l.b16 %v2770
    %v2906 = vunpack.c.l.b16 %v2771
    %v2907 = vunpack.c.l.b16 %v2772
    %v2908 = vunpack.c.l.b16 %v2773
    %v2909 = vunpack.c.l.b16 %v2774
    %v2910 = vunpack.c.l.b16 %v2775
    %v2911 = vunpack.c.l.b16 %v2776
    %v2912 = vunpack.c.l.b16 %v2777
    %v2913 = vunpack.c.l.b16 %v2778
    %v2914 = vunpack.c.l.b16 %v2779
    %v2915 = vunpack.c.l.b16 %v2780
    %v2916 = vunpack.c.l.b16 %v2781
    %v2917 = vunpack.c.l.b16 %v2782
    %v2918 = vunpack.c.l.b16 %v2783
    %v2919 = vunpack.c.l.b16 %v2784
    %v2920 = vunpack.c.l.b16 %v2785
    %v2921 = vunpack.c.l.b16 %v2786
    %v2922 = vunpack.c.l.b16 %v2787
    %v2923 = vunpack.c.l.b16 %v2788
    %v2924 = vunpack.c.l.b16 %v2789
    %v2925 = vunpack.c.l.b16 %v2790
    %v2926 = vunpack.c.l.b16 %v2791
    %v2927 = vunpack.c.l.b16 %v2792
    %v2928 = vunpack.c.l.b16 %v2793
    %v2929 = vpack.c.b16 %v2866, %v2865
    %v2930 = vpack.c.b16 %v2868, %v2867
    %v2931 = vpack.c.b16 %v2870, %v2869
    %v2932 = vpack.c.b16 %v2872, %v2871
    %v2933 = vpack.c.b16 %v2874, %v2873
    %v2934 = vpack.c.b16 %v2876, %v2875
    %v2935 = vpack.c.b16 %v2878, %v2877
    %v2936 = vpack.c.b16 %v2880, %v2879
    %v2937 = vpack.c.b16 %v2882, %v2881
    %v2938 = vpack.c.b16 %v2884, %v2883
    %v2939 = vpack.c.b16 %v2886, %v2885
    %v2940 = vpack.c.b16 %v2888, %v2887
    %v2941 = vpack.c.b16 %v2890, %v2889
    %v2942 = vpack.c.b16 %v2892, %v2891
    %v2943 = vpack.c.b16 %v2894, %v2893
    %v2944 = vpack.c.b16 %v2896, %v2895
    %v2945 = vpack.c.b16 %v2898, %v2897
    %v2946 = vpack.c.b16 %v2900, %v2899
    %v2947 = vpack.c.b16 %v2902, %v2901
    %v2948 = vpack.c.b16 %v2904, %v2903
    %v2949 = vpack.c.b16 %v2906, %v2905
    %v2950 = vpack.c.b16 %v2908, %v2907
    %v2951 = vpack.c.b16 %v2910, %v2909
    %v2952 = vpack.c.b16 %v2912, %v2911
    %v2953 = vpack.c.b16 %v2914, %v2913
    %v2954 = vpack.c.b16 %v2916, %v2915
    %v2955 = vpack.c.b16 %v2918, %v2917
    %v2956 = vpack.c.b16 %v2920, %v2919
    %v2957 = vpack.c.b16 %v2922, %v2921
    %v2958 = vpack.c.b16 %v2924, %v2923
    %v2959 = vpack.c.b16 %v2926, %v2925
    %v2960 = vpack.c.b16 %v2928, %v2927
    %2993 = vmatprep.subr.bf16.mxu0 0
    %2994 = vmatpush1.bf16.msra.mxu0 %v2929
    %2995 = vmatprep.subr.bf16.mxu0 0
    %2996 = vmatpush1.bf16.msra.mxu0 %v2930
    %2997 = vmatprep.subr.bf16.mxu0 0
    %2998 = vmatpush1.bf16.msra.mxu0 %v2931
    %2999 = vmatprep.subr.bf16.mxu0 0
    %3000 = vmatpush1.bf16.msra.mxu0 %v2932
    %3001 = vmatprep.subr.bf16.mxu0 0
    %3002 = vmatpush1.bf16.msra.mxu0 %v2933
    %3003 = vmatprep.subr.bf16.mxu0 0
    %3004 = vmatpush1.bf16.msra.mxu0 %v2934
    %3005 = vmatprep.subr.bf16.mxu0 0
    %3006 = vmatpush1.bf16.msra.mxu0 %v2935
    %3007 = vmatprep.subr.bf16.mxu0 0
    %3008 = vmatpush1.bf16.msra.mxu0 %v2936
    %3009 = vmatprep.subr.bf16.mxu0 0
    %3010 = vmatpush1.bf16.msra.mxu0 %v2937
    %3011 = vmatprep.subr.bf16.mxu0 0
    %3012 = vmatpush1.bf16.msra.mxu0 %v2938
    %3013 = vmatprep.subr.bf16.mxu0 0
    %3014 = vmatpush1.bf16.msra.mxu0 %v2939
    %3015 = vmatprep.subr.bf16.mxu0 0
    %3016 = vmatpush1.bf16.msra.mxu0 %v2940
    %3017 = vmatprep.subr.bf16.mxu0 0
    %3018 = vmatpush1.bf16.msra.mxu0 %v2941
    %3019 = vmatprep.subr.bf16.mxu0 0
    %3020 = vmatpush1.bf16.msra.mxu0 %v2942
    %3021 = vmatprep.subr.bf16.mxu0 0
    %3022 = vmatpush1.bf16.msra.mxu0 %v2943
    %3023 = vmatprep.subr.bf16.mxu0 0
    %3024 = vmatpush1.bf16.msra.mxu0 %v2944
    %3025 = vmatprep.mubr.bf16.mxu0 %v2727
    %3026 = vmatmul.mubr.bf16.gmra.mrb[0].mxu0 %v2726
    %v3027 = vpop.f32.mrb[0].mxu0
    %v3028 = vadd.f32 %v2799, %v3027
    %v3029 = vpop.f32.mrb[0].mxu0
    %v3030 = vpop.f32.mrb[0].mxu0
    %v3031 = vpop.f32.mrb[0].mxu0
    %3032 = vdwg.mxu0
    %3033 = vmatprep.subr.bf16.mxu0 0
    %3034 = vmatpush1.bf16.msra.mxu0 %v2945
    %3035 = vmatprep.subr.bf16.mxu0 0
    %3036 = vmatpush1.bf16.msra.mxu0 %v2946
    %3037 = vmatprep.subr.bf16.mxu0 0
    %3038 = vmatpush1.bf16.msra.mxu0 %v2947
    %3039 = vmatprep.subr.bf16.mxu0 0
    %3040 = vmatpush1.bf16.msra.mxu0 %v2948
    %3041 = vmatprep.subr.bf16.mxu0 0
    %3042 = vmatpush1.bf16.msra.mxu0 %v2949
    %3043 = vmatprep.subr.bf16.mxu0 0
    %3044 = vmatpush1.bf16.msra.mxu0 %v2950
    %3045 = vmatprep.subr.bf16.mxu0 0
    %3046 = vmatpush1.bf16.msra.mxu0 %v2951
    %3047 = vmatprep.subr.bf16.mxu0 0
    %3048 = vmatpush1.bf16.msra.mxu0 %v2952
    %3049 = vmatprep.subr.bf16.mxu0 0
    %3050 = vmatpush1.bf16.msra.mxu0 %v2953
    %3051 = vmatprep.subr.bf16.mxu0 0
    %3052 = vmatpush1.bf16.msra.mxu0 %v2954
    %3053 = vmatprep.subr.bf16.mxu0 0
    %3054 = vmatpush1.bf16.msra.mxu0 %v2955
    %3055 = vmatprep.subr.bf16.mxu0 0
    %3056 = vmatpush1.bf16.msra.mxu0 %v2956
    %3057 = vmatprep.subr.bf16.mxu0 0
    %3058 = vmatpush1.bf16.msra.mxu0 %v2957
    %3059 = vmatprep.subr.bf16.mxu0 0
    %3060 = vmatpush1.bf16.msra.mxu0 %v2958
    %3061 = vmatprep.subr.bf16.mxu0 0
    %3062 = vmatpush1.bf16.msra.mxu0 %v2959
    %3063 = vmatprep.subr.bf16.mxu0 0
    %3064 = vmatpush1.bf16.msra.mxu0 %v2960
    %3065 = vmatprep.mubr.bf16.mxu0 %v2729
    %3066 = vmatmul.mubr.bf16.gmra.mrb[0].mxu0 %v2728
    %v3067 = vpop.f32.mrb[0].mxu0
    %v3068 = vadd.f32 %v3028, %v3067
    %v3069 = vpop.f32.mrb[0].mxu0
    %v3070 = vpop.f32.mrb[0].mxu0
    %v3071 = vpop.f32.mrb[0].mxu0
    %3072 = vdwg.mxu0
    %v3073 = vmax.f32 %v3068, 0.0
    %v3074 = vld [vmem:[%s1] sm:$0xff]
    %v3075 = vpack.c.bf16 %v3074, %v3074
    %v3076 = vld [vmem:[#allocation10] sm:$0xf]
    %v3077 = vld [vmem:[#allocation10 + $0x4] sm:$0xf]
    %v3078 = vld [vmem:[#allocation10 + $0x8] sm:$0xf]
    %v3079 = vld [vmem:[#allocation10 + $0xc] sm:$0xf]
    %v3080 = vld [vmem:[#allocation10 + $0x10] sm:$0xf]
    %v3081 = vld [vmem:[#allocation10 + $0x14] sm:$0xf]
    %v3082 = vld [vmem:[#allocation10 + $0x18] sm:$0xf]
    %v3083 = vld [vmem:[#allocation10 + $0x1c] sm:$0xf]
    %v3084 = vld [vmem:[#allocation10 + $0x20] sm:$0xf]
    %v3085 = vld [vmem:[#allocation10 + $0x24] sm:$0xf]
    %v3086 = vld [vmem:[#allocation10 + $0x28] sm:$0xf]
    %v3087 = vld [vmem:[#allocation10 + $0x2c] sm:$0xf]
    %v3088 = vld [vmem:[#allocation10 + $0x30] sm:$0xf]
    %v3089 = vld [vmem:[#allocation10 + $0x34] sm:$0xf]
    %v3090 = vld [vmem:[#allocation10 + $0x38] sm:$0xf]
    %v3091 = vld [vmem:[#allocation10 + $0x3c] sm:$0xf]
    %v3092 = vld [vmem:[#allocation11] sm:$0x1]
    %v3094 = vlaneseq
    %v3095 = vshrl.u32 %v3094, 7
    %v3096 = vsub.s32 0, %v3095
    %v3097 = vrot.slane %v3092, %v3096
    %v3115 = vunpack.c.l.b16 %v3076
    %v3116 = vunpack.c.l.b16 %v3077
    %v3117 = vunpack.c.l.b16 %v3078
    %v3118 = vunpack.c.l.b16 %v3079
    %v3119 = vunpack.c.l.b16 %v3080
    %v3120 = vunpack.c.l.b16 %v3081
    %v3121 = vunpack.c.l.b16 %v3082
    %v3122 = vunpack.c.l.b16 %v3083
    %v3123 = vunpack.c.l.b16 %v3084
    %v3124 = vunpack.c.l.b16 %v3085
    %v3125 = vunpack.c.l.b16 %v3086
    %v3126 = vunpack.c.l.b16 %v3087
    %v3127 = vunpack.c.l.b16 %v3088
    %v3128 = vunpack.c.l.b16 %v3089
    %v3129 = vunpack.c.l.b16 %v3090
    %v3130 = vunpack.c.l.b16 %v3091
    %v3131 = vpack.c.b16 %v3116, %v3115
    %v3132 = vpack.c.b16 %v3118, %v3117
    %v3133 = vpack.c.b16 %v3120, %v3119
    %v3134 = vpack.c.b16 %v3122, %v3121
    %v3135 = vpack.c.b16 %v3124, %v3123
    %v3136 = vpack.c.b16 %v3126, %v3125
    %v3137 = vpack.c.b16 %v3128, %v3127
    %v3138 = vpack.c.b16 %v3130, %v3129
    %3147 = vmatprep.subr.bf16.mxu0 0
    %3148 = vmatpush1.bf16.msra.mxu0 %v3131
    %3149 = vmatprep.subr.bf16.mxu0 0
    %3150 = vmatpush1.bf16.msra.mxu0 %v3132
    %3151 = vmatprep.subr.bf16.mxu0 0
    %3152 = vmatpush1.bf16.msra.mxu0 %v3133
    %3153 = vmatprep.subr.bf16.mxu0 0
    %3154 = vmatpush1.bf16.msra.mxu0 %v3134
    %3155 = vmatprep.subr.bf16.mxu0 0
    %3156 = vmatpush1.bf16.msra.mxu0 %v3135
    %3157 = vmatprep.subr.bf16.mxu0 0
    %3158 = vmatpush1.bf16.msra.mxu0 %v3136
    %3159 = vmatprep.subr.bf16.mxu0 0
    %3160 = vmatpush1.bf16.msra.mxu0 %v3137
    %3161 = vmatprep.subr.bf16.mxu0 0
    %3162 = vmatpush1.bf16.msra.mxu0 %v3138
    %3163 = vmatprep.subr.bf16.mxu0 0
    %3164 = vmatpush1.bf16.msra.mxu0 0
    %3165 = vmatprep.subr.bf16.mxu0 0
    %3166 = vmatpush1.bf16.msra.mxu0 0
    %3167 = vmatprep.subr.bf16.mxu0 0
    %3168 = vmatpush1.bf16.msra.mxu0 0
    %3169 = vmatprep.subr.bf16.mxu0 0
    %3170 = vmatpush1.bf16.msra.mxu0 0
    %3171 = vmatprep.subr.bf16.mxu0 0
    %3172 = vmatpush1.bf16.msra.mxu0 0
    %3173 = vmatprep.subr.bf16.mxu0 0
    %3174 = vmatpush1.bf16.msra.mxu0 0
    %3175 = vmatprep.subr.bf16.mxu0 0
    %3176 = vmatpush1.bf16.msra.mxu0 0
    %3177 = vmatprep.subr.bf16.mxu0 0
    %3178 = vmatpush1.bf16.msra.mxu0 0
    %3179 = vmatprep.mubr.bf16.mxu0 0
    %3180 = vmatmul.mubr.bf16.gmra.mrb[0].mxu0 %v3075
    %v3181 = vpop.f32.mrb[0].mxu0
    %v3182 = vadd.f32 %v3097, %v3181
    %v3183 = vpop.f32.mrb[0].mxu0
    %v3184 = vpop.f32.mrb[0].mxu0
    %v3185 = vpop.f32.mrb[0].mxu0
    %3186 = vdwg.mxu0
    %v3187 = vmax.f32 %v3182, 0.0
    %v3188 = vpack.c.bf16 %v3187, %v3187
    %v3189 = vld [vmem:[%s10] sm:$0xf]
    %v3190 = vld [vmem:[%s10 + $0x4] sm:$0xf]
    %v3191 = vld [vmem:[%s10 + $0x8] sm:$0xf]
    %v3192 = vld [vmem:[%s10 + $0xc] sm:$0xf]
    %v3193 = vld [vmem:[%s10 + $0x10] sm:$0xf]
    %v3194 = vld [vmem:[%s10 + $0x14] sm:$0xf]
    %v3195 = vld [vmem:[%s10 + $0x18] sm:$0xf]
    %v3196 = vld [vmem:[%s10 + $0x1c] sm:$0xf]
    %v3197 = vld [vmem:[%s10 + $0x20] sm:$0xf]
    %v3198 = vld [vmem:[%s10 + $0x24] sm:$0xf]
    %v3199 = vld [vmem:[%s10 + $0x28] sm:$0xf]
    %v3200 = vld [vmem:[%s10 + $0x2c] sm:$0xf]
    %v3201 = vld [vmem:[%s10 + $0x30] sm:$0xf]
    %v3202 = vld [vmem:[%s10 + $0x34] sm:$0xf]
    %v3203 = vld [vmem:[%s10 + $0x38] sm:$0xf]
    %v3204 = vld [vmem:[%s10 + $0x3c] sm:$0xf]
    %v3205 = vld [vmem:[#allocation13] sm:$0x1]
    %v3207 = vlaneseq
    %v3208 = vshrl.u32 %v3207, 7
    %v3209 = vsub.s32 0, %v3208
    %v3210 = vrot.slane %v3205, %v3209
    %v3228 = vunpack.c.l.b16 %v3189
    %v3229 = vunpack.c.l.b16 %v3190
    %v3230 = vunpack.c.l.b16 %v3191
    %v3231 = vunpack.c.l.b16 %v3192
    %v3232 = vunpack.c.l.b16 %v3193
    %v3233 = vunpack.c.l.b16 %v3194
    %v3234 = vunpack.c.l.b16 %v3195
    %v3235 = vunpack.c.l.b16 %v3196
    %v3236 = vunpack.c.l.b16 %v3197
    %v3237 = vunpack.c.l.b16 %v3198
    %v3238 = vunpack.c.l.b16 %v3199
    %v3239 = vunpack.c.l.b16 %v3200
    %v3240 = vunpack.c.l.b16 %v3201
    %v3241 = vunpack.c.l.b16 %v3202
    %v3242 = vunpack.c.l.b16 %v3203
    %v3243 = vunpack.c.l.b16 %v3204
    %v3244 = vpack.c.b16 %v3229, %v3228
    %v3245 = vpack.c.b16 %v3231, %v3230
    %v3246 = vpack.c.b16 %v3233, %v3232
    %v3247 = vpack.c.b16 %v3235, %v3234
    %v3248 = vpack.c.b16 %v3237, %v3236
    %v3249 = vpack.c.b16 %v3239, %v3238
    %v3250 = vpack.c.b16 %v3241, %v3240
    %v3251 = vpack.c.b16 %v3243, %v3242
    %3260 = vmatprep.subr.bf16.mxu0 0
    %3261 = vmatpush1.bf16.msra.mxu0 %v3244
    %3262 = vmatprep.subr.bf16.mxu0 0
    %3263 = vmatpush1.bf16.msra.mxu0 %v3245
    %3264 = vmatprep.subr.bf16.mxu0 0
    %3265 = vmatpush1.bf16.msra.mxu0 %v3246
    %3266 = vmatprep.subr.bf16.mxu0 0
    %3267 = vmatpush1.bf16.msra.mxu0 %v3247
    %3268 = vmatprep.subr.bf16.mxu0 0
    %3269 = vmatpush1.bf16.msra.mxu0 %v3248
    %3270 = vmatprep.subr.bf16.mxu0 0
    %3271 = vmatpush1.bf16.msra.mxu0 %v3249
    %3272 = vmatprep.subr.bf16.mxu0 0
    %3273 = vmatpush1.bf16.msra.mxu0 %v3250
    %3274 = vmatprep.subr.bf16.mxu0 0
    %3275 = vmatpush1.bf16.msra.mxu0 %v3251
    %3276 = vmatprep.subr.bf16.mxu0 0
    %3277 = vmatpush1.bf16.msra.mxu0 0
    %3278 = vmatprep.subr.bf16.mxu0 0
    %3279 = vmatpush1.bf16.msra.mxu0 0
    %3280 = vmatprep.subr.bf16.mxu0 0
    %3281 = vmatpush1.bf16.msra.mxu0 0
    %3282 = vmatprep.subr.bf16.mxu0 0
    %3283 = vmatpush1.bf16.msra.mxu0 0
    %3284 = vmatprep.subr.bf16.mxu0 0
    %3285 = vmatpush1.bf16.msra.mxu0 0
    %3286 = vmatprep.subr.bf16.mxu0 0
    %3287 = vmatpush1.bf16.msra.mxu0 0
    %3288 = vmatprep.subr.bf16.mxu0 0
    %3289 = vmatpush1.bf16.msra.mxu0 0
    %3290 = vmatprep.subr.bf16.mxu0 0
    %3291 = vmatpush1.bf16.msra.mxu0 0
    %3292 = vmatprep.mubr.bf16.mxu0 0
    %3293 = vmatmul.mubr.bf16.gmra.mrb[0].mxu0 %v3188
    %v3294 = vpop.f32.mrb[0].mxu0
    %v3295 = vadd.f32 %v3210, %v3294
    %v3296 = vpop.f32.mrb[0].mxu0
    %v3297 = vpop.f32.mrb[0].mxu0
    %v3298 = vpop.f32.mrb[0].mxu0
    %3299 = vdwg.mxu0
    %v3300 = vmax.f32 %v3295, 0.0
    %v3301 = vpack.c.bf16 %v3073, %v3073
    %v3302 = vld [vmem:[#allocation14] sm:$0xff]
    %v3303 = vld [vmem:[#allocation14 + $0x8] sm:$0xff]
    %v3304 = vld [vmem:[#allocation14 + $0x10] sm:$0xff]
    %v3305 = vld [vmem:[#allocation14 + $0x18] sm:$0xff]
    %v3306 = vld [vmem:[#allocation14 + $0x20] sm:$0xff]
    %v3307 = vld [vmem:[#allocation14 + $0x28] sm:$0xff]
    %v3308 = vld [vmem:[#allocation14 + $0x30] sm:$0xff]
    %v3309 = vld [vmem:[#allocation14 + $0x38] sm:$0xff]
    %v3310 = vld [vmem:[#allocation14 + $0x40] sm:$0xff]
    %v3311 = vld [vmem:[#allocation14 + $0x48] sm:$0xff]
    %v3312 = vld [vmem:[#allocation14 + $0x50] sm:$0xff]
    %v3313 = vld [vmem:[#allocation14 + $0x58] sm:$0xff]
    %v3314 = vld [vmem:[#allocation14 + $0x60] sm:$0xff]
    %v3315 = vld [vmem:[#allocation14 + $0x68] sm:$0xff]
    %v3316 = vld [vmem:[#allocation14 + $0x70] sm:$0xff]
    %v3317 = vld [vmem:[#allocation14 + $0x78] sm:$0xff]
    %v3318 = vpack.c.bf16 %v3300, %v3300
    %v3319 = vld [vmem:[#allocation16] sm:$0xff]
    %v3320 = vld [vmem:[#allocation16 + $0x8] sm:$0xff]
    %v3321 = vld [vmem:[#allocation16 + $0x10] sm:$0xff]
    %v3322 = vld [vmem:[#allocation16 + $0x18] sm:$0xff]
    %v3323 = vld [vmem:[#allocation16 + $0x20] sm:$0xff]
    %v3324 = vld [vmem:[#allocation16 + $0x28] sm:$0xff]
    %v3325 = vld [vmem:[#allocation16 + $0x30] sm:$0xff]
    %v3326 = vld [vmem:[#allocation16 + $0x38] sm:$0xff]
    %v3327 = vld [vmem:[#allocation16 + $0x40] sm:$0xff]
    %v3328 = vld [vmem:[#allocation16 + $0x48] sm:$0xff]
    %v3329 = vld [vmem:[#allocation16 + $0x50] sm:$0xff]
    %v3330 = vld [vmem:[#allocation16 + $0x58] sm:$0xff]
    %v3331 = vld [vmem:[#allocation16 + $0x60] sm:$0xff]
    %v3332 = vld [vmem:[#allocation16 + $0x68] sm:$0xff]
    %v3333 = vld [vmem:[#allocation16 + $0x70] sm:$0xff]
    %v3334 = vld [vmem:[#allocation16 + $0x78] sm:$0xff]
    %v3351 = vunpack.c.l.b16 %v3319
    %v3352 = vunpack.c.h.b16 %v3319
    %v3353 = vunpack.c.l.b16 %v3320
    %v3354 = vunpack.c.h.b16 %v3320
    %v3355 = vunpack.c.l.b16 %v3321
    %v3356 = vunpack.c.h.b16 %v3321
    %v3357 = vunpack.c.l.b16 %v3322
    %v3358 = vunpack.c.h.b16 %v3322
    %v3359 = vunpack.c.l.b16 %v3323
    %v3360 = vunpack.c.h.b16 %v3323
    %v3361 = vunpack.c.l.b16 %v3324
    %v3362 = vunpack.c.h.b16 %v3324
    %v3363 = vunpack.c.l.b16 %v3325
    %v3364 = vunpack.c.h.b16 %v3325
    %v3365 = vunpack.c.l.b16 %v3326
    %v3366 = vunpack.c.h.b16 %v3326
    %v3367 = vunpack.c.l.b16 %v3327
    %v3368 = vunpack.c.h.b16 %v3327
    %v3369 = vunpack.c.l.b16 %v3328
    %v3370 = vunpack.c.h.b16 %v3328
    %v3371 = vunpack.c.l.b16 %v3329
    %v3372 = vunpack.c.h.b16 %v3329
    %v3373 = vunpack.c.l.b16 %v3330
    %v3374 = vunpack.c.h.b16 %v3330
    %v3375 = vunpack.c.l.b16 %v3331
    %v3376 = vunpack.c.h.b16 %v3331
    %v3377 = vunpack.c.l.b16 %v3332
    %v3378 = vunpack.c.h.b16 %v3332
    %v3379 = vunpack.c.l.b16 %v3333
    %v3380 = vunpack.c.h.b16 %v3333
    %v3381 = vunpack.c.l.b16 %v3334
    %v3382 = vunpack.c.h.b16 %v3334
    %v3383 = vpack.c.b16 %v3355, %v3351
    %v3384 = vpack.c.b16 %v3356, %v3352
    %v3385 = vpack.c.b16 %v3357, %v3353
    %v3386 = vpack.c.b16 %v3358, %v3354
    %v3387 = vpack.c.b16 %v3363, %v3359
    %v3388 = vpack.c.b16 %v3364, %v3360
    %v3389 = vpack.c.b16 %v3365, %v3361
    %v3390 = vpack.c.b16 %v3366, %v3362
    %v3391 = vpack.c.b16 %v3371, %v3367
    %v3392 = vpack.c.b16 %v3372, %v3368
    %v3393 = vpack.c.b16 %v3373, %v3369
    %v3394 = vpack.c.b16 %v3374, %v3370
    %v3395 = vpack.c.b16 %v3379, %v3375
    %v3396 = vpack.c.b16 %v3380, %v3376
    %v3397 = vpack.c.b16 %v3381, %v3377
    %v3398 = vpack.c.b16 %v3382, %v3378
    %vm3415 = vcmask 523264
    %v3417 = vsel %vm3415, %v3318, 0
    %3419 = vmatprep.subr.bf16.mxu0 %v3384
    %3420 = vmatpush1.bf16.msra.mxu0 %v3383
    %3421 = vmatprep.subr.bf16.mxu0 %v3388
    %3422 = vmatpush1.bf16.msra.mxu0 %v3387
    %3423 = vmatprep.subr.bf16.mxu0 %v3392
    %3424 = vmatpush1.bf16.msra.mxu0 %v3391
    %3425 = vmatprep.subr.bf16.mxu0 %v3396
    %3426 = vmatpush1.bf16.msra.mxu0 %v3395
    %3427 = vmatprep.subr.bf16.mxu0 0
    %3428 = vmatpush1.bf16.msra.mxu0 0
    %3429 = vmatprep.subr.bf16.mxu0 0
    %3430 = vmatpush1.bf16.msra.mxu0 0
    %3431 = vmatprep.subr.bf16.mxu0 0
    %3432 = vmatpush1.bf16.msra.mxu0 0
    %3433 = vmatprep.subr.bf16.mxu0 0
    %3434 = vmatpush1.bf16.msra.mxu0 0
    %3435 = vmatprep.subr.bf16.mxu0 0
    %3436 = vmatpush1.bf16.msra.mxu0 0
    %3437 = vmatprep.subr.bf16.mxu0 0
    %3438 = vmatpush1.bf16.msra.mxu0 0
    %3439 = vmatprep.subr.bf16.mxu0 0
    %3440 = vmatpush1.bf16.msra.mxu0 0
    %3441 = vmatprep.subr.bf16.mxu0 0
    %3442 = vmatpush1.bf16.msra.mxu0 0
    %3443 = vmatprep.subr.bf16.mxu0 0
    %3444 = vmatpush1.bf16.msra.mxu0 0
    %3445 = vmatprep.subr.bf16.mxu0 0
    %3446 = vmatpush1.bf16.msra.mxu0 0
    %3447 = vmatprep.subr.bf16.mxu0 0
    %3448 = vmatpush1.bf16.msra.mxu0 0
    %3449 = vmatprep.subr.bf16.mxu0 0
    %3450 = vmatpush1.bf16.msra.mxu0 0
    %3451 = vmatprep.mubr.bf16.mxu0 0
    %3452 = vmatmul.mubr.bf16.gmra.mrb[0].mxu0 %v3417
    %v3453 = vpop.f32.mrb[0].mxu0
    %v3454 = vadd.f32 0.0, %v3453
    %v3455 = vpop.f32.mrb[0].mxu0
    %v3456 = vadd.f32 0.0, %v3455
    %v3457 = vpop.f32.mrb[0].mxu0
    %v3458 = vpop.f32.mrb[0].mxu0
    %3459 = vdwg.mxu0
    %3460 = vmatprep.subr.bf16.mxu0 %v3386
    %3461 = vmatpush1.bf16.msra.mxu0 %v3385
    %3462 = vmatprep.subr.bf16.mxu0 %v3390
    %3463 = vmatpush1.bf16.msra.mxu0 %v3389
    %3464 = vmatprep.subr.bf16.mxu0 %v3394
    %3465 = vmatpush1.bf16.msra.mxu0 %v3393
    %3466 = vmatprep.subr.bf16.mxu0 %v3398
    %3467 = vmatpush1.bf16.msra.mxu0 %v3397
    %3468 = vmatprep.subr.bf16.mxu0 0
    %3469 = vmatpush1.bf16.msra.mxu0 0
    %3470 = vmatprep.subr.bf16.mxu0 0
    %3471 = vmatpush1.bf16.msra.mxu0 0
    %3472 = vmatprep.subr.bf16.mxu0 0
    %3473 = vmatpush1.bf16.msra.mxu0 0
    %3474 = vmatprep.subr.bf16.mxu0 0
    %3475 = vmatpush1.bf16.msra.mxu0 0
    %3476 = vmatprep.subr.bf16.mxu0 0
    %3477 = vmatpush1.bf16.msra.mxu0 0
    %3478 = vmatprep.subr.bf16.mxu0 0
    %3479 = vmatpush1.bf16.msra.mxu0 0
    %3480 = vmatprep.subr.bf16.mxu0 0
    %3481 = vmatpush1.bf16.msra.mxu0 0
    %3482 = vmatprep.subr.bf16.mxu0 0
    %3483 = vmatpush1.bf16.msra.mxu0 0
    %3484 = vmatprep.subr.bf16.mxu0 0
    %3485 = vmatpush1.bf16.msra.mxu0 0
    %3486 = vmatprep.subr.bf16.mxu0 0
    %3487 = vmatpush1.bf16.msra.mxu0 0
    %3488 = vmatprep.subr.bf16.mxu0 0
    %3489 = vmatpush1.bf16.msra.mxu0 0
    %3490 = vmatprep.subr.bf16.mxu0 0
    %3491 = vmatpush1.bf16.msra.mxu0 0
    %3492 = vmatprep.mubr.bf16.mxu0 0
    %3493 = vmatmul.mubr.bf16.gmra.mrb[0].mxu0 %v3417
    %v3494 = vpop.f32.mrb[0].mxu0
    %v3495 = vadd.f32 0.0, %v3494
    %v3496 = vpop.f32.mrb[0].mxu0
    %v3497 = vadd.f32 0.0, %v3496
    %v3498 = vpop.f32.mrb[0].mxu0
    %v3499 = vpop.f32.mrb[0].mxu0
    %3500 = vdwg.mxu0
    %v3517 = vunpack.c.l.b16 %v3302
    %v3518 = vunpack.c.h.b16 %v3302
    %v3519 = vunpack.c.l.b16 %v3303
    %v3520 = vunpack.c.h.b16 %v3303
    %v3521 = vunpack.c.l.b16 %v3304
    %v3522 = vunpack.c.h.b16 %v3304
    %v3523 = vunpack.c.l.b16 %v3305
    %v3524 = vunpack.c.h.b16 %v3305
    %v3525 = vunpack.c.l.b16 %v3306
    %v3526 = vunpack.c.h.b16 %v3306
    %v3527 = vunpack.c.l.b16 %v3307
    %v3528 = vunpack.c.h.b16 %v3307
    %v3529 = vunpack.c.l.b16 %v3308
    %v3530 = vunpack.c.h.b16 %v3308
    %v3531 = vunpack.c.l.b16 %v3309
    %v3532 = vunpack.c.h.b16 %v3309
    %v3533 = vunpack.c.l.b16 %v3310
    %v3534 = vunpack.c.h.b16 %v3310
    %v3535 = vunpack.c.l.b16 %v3311
    %v3536 = vunpack.c.h.b16 %v3311
    %v3537 = vunpack.c.l.b16 %v3312
    %v3538 = vunpack.c.h.b16 %v3312
    %v3539 = vunpack.c.l.b16 %v3313
    %v3540 = vunpack.c.h.b16 %v3313
    %v3541 = vunpack.c.l.b16 %v3314
    %v3542 = vunpack.c.h.b16 %v3314
    %v3543 = vunpack.c.l.b16 %v3315
    %v3544 = vunpack.c.h.b16 %v3315
    %v3545 = vunpack.c.l.b16 %v3316
    %v3546 = vunpack.c.h.b16 %v3316
    %v3547 = vunpack.c.l.b16 %v3317
    %v3548 = vunpack.c.h.b16 %v3317
    %v3549 = vpack.c.b16 %v3521, %v3517
    %v3550 = vpack.c.b16 %v3522, %v3518
    %v3551 = vpack.c.b16 %v3523, %v3519
    %v3552 = vpack.c.b16 %v3524, %v3520
    %v3553 = vpack.c.b16 %v3529, %v3525
    %v3554 = vpack.c.b16 %v3530, %v3526
    %v3555 = vpack.c.b16 %v3531, %v3527
    %v3556 = vpack.c.b16 %v3532, %v3528
    %v3557 = vpack.c.b16 %v3537, %v3533
    %v3558 = vpack.c.b16 %v3538, %v3534
    %v3559 = vpack.c.b16 %v3539, %v3535
    %v3560 = vpack.c.b16 %v3540, %v3536
    %v3561 = vpack.c.b16 %v3545, %v3541
    %v3562 = vpack.c.b16 %v3546, %v3542
    %v3563 = vpack.c.b16 %v3547, %v3543
    %v3564 = vpack.c.b16 %v3548, %v3544
    %v3582 = vsel %vm3415, %v3301, 0
    %3584 = vmatprep.subr.bf16.mxu0 %v3550
    %3585 = vmatpush1.bf16.msra.mxu0 %v3549
    %3586 = vmatprep.subr.bf16.mxu0 %v3554
    %3587 = vmatpush1.bf16.msra.mxu0 %v3553
    %3588 = vmatprep.subr.bf16.mxu0 %v3558
    %3589 = vmatpush1.bf16.msra.mxu0 %v3557
    %3590 = vmatprep.subr.bf16.mxu0 %v3562
    %3591 = vmatpush1.bf16.msra.mxu0 %v3561
    %3592 = vmatprep.subr.bf16.mxu0 0
    %3593 = vmatpush1.bf16.msra.mxu0 0
    %3594 = vmatprep.subr.bf16.mxu0 0
    %3595 = vmatpush1.bf16.msra.mxu0 0
    %3596 = vmatprep.subr.bf16.mxu0 0
    %3597 = vmatpush1.bf16.msra.mxu0 0
    %3598 = vmatprep.subr.bf16.mxu0 0
    %3599 = vmatpush1.bf16.msra.mxu0 0
    %3600 = vmatprep.subr.bf16.mxu0 0
    %3601 = vmatpush1.bf16.msra.mxu0 0
    %3602 = vmatprep.subr.bf16.mxu0 0
    %3603 = vmatpush1.bf16.msra.mxu0 0
    %3604 = vmatprep.subr.bf16.mxu0 0
    %3605 = vmatpush1.bf16.msra.mxu0 0
    %3606 = vmatprep.subr.bf16.mxu0 0
    %3607 = vmatpush1.bf16.msra.mxu0 0
    %3608 = vmatprep.subr.bf16.mxu0 0
    %3609 = vmatpush1.bf16.msra.mxu0 0
    %3610 = vmatprep.subr.bf16.mxu0 0
    %3611 = vmatpush1.bf16.msra.mxu0 0
    %3612 = vmatprep.subr.bf16.mxu0 0
    %3613 = vmatpush1.bf16.msra.mxu0 0
    %3614 = vmatprep.subr.bf16.mxu0 0
    %3615 = vmatpush1.bf16.msra.mxu0 0
    %3616 = vmatprep.mubr.bf16.mxu0 0
    %3617 = vmatmul.mubr.bf16.gmra.mrb[0].mxu0 %v3582
    %v3618 = vpop.f32.mrb[0].mxu0
    %v3619 = vadd.f32 %v3454, %v3618
    %v3620 = vpop.f32.mrb[0].mxu0
    %v3621 = vadd.f32 %v3456, %v3620
    %v3622 = vpop.f32.mrb[0].mxu0
    %v3623 = vpop.f32.mrb[0].mxu0
    %3624 = vdwg.mxu0
    %3625 = vmatprep.subr.bf16.mxu0 %v3552
    %3626 = vmatpush1.bf16.msra.mxu0 %v3551
    %3627 = vmatprep.subr.bf16.mxu0 %v3556
    %3628 = vmatpush1.bf16.msra.mxu0 %v3555
    %3629 = vmatprep.subr.bf16.mxu0 %v3560
    %3630 = vmatpush1.bf16.msra.mxu0 %v3559
    %3631 = vmatprep.subr.bf16.mxu0 %v3564
    %3632 = vmatpush1.bf16.msra.mxu0 %v3563
    %3633 = vmatprep.subr.bf16.mxu0 0
    %3634 = vmatpush1.bf16.msra.mxu0 0
    %3635 = vmatprep.subr.bf16.mxu0 0
    %3636 = vmatpush1.bf16.msra.mxu0 0
    %3637 = vmatprep.subr.bf16.mxu0 0
    %3638 = vmatpush1.bf16.msra.mxu0 0
    %3639 = vmatprep.subr.bf16.mxu0 0
    %3640 = vmatpush1.bf16.msra.mxu0 0
    %3641 = vmatprep.subr.bf16.mxu0 0
    %3642 = vmatpush1.bf16.msra.mxu0 0
    %3643 = vmatprep.subr.bf16.mxu0 0
    %3644 = vmatpush1.bf16.msra.mxu0 0
    %3645 = vmatprep.subr.bf16.mxu0 0
    %3646 = vmatpush1.bf16.msra.mxu0 0
    %3647 = vmatprep.subr.bf16.mxu0 0
    %3648 = vmatpush1.bf16.msra.mxu0 0
    %3649 = vmatprep.subr.bf16.mxu0 0
    %3650 = vmatpush1.bf16.msra.mxu0 0
    %3651 = vmatprep.subr.bf16.mxu0 0
    %3652 = vmatpush1.bf16.msra.mxu0 0
    %3653 = vmatprep.subr.bf16.mxu0 0
    %3654 = vmatpush1.bf16.msra.mxu0 0
    %3655 = vmatprep.subr.bf16.mxu0 0
    %3656 = vmatpush1.bf16.msra.mxu0 0
    %3657 = vmatprep.mubr.bf16.mxu0 0
    %3658 = vmatmul.mubr.bf16.gmra.mrb[0].mxu0 %v3582
    %v3659 = vpop.f32.mrb[0].mxu0
    %v3660 = vadd.f32 %v3495, %v3659
    %v3661 = vpop.f32.mrb[0].mxu0
    %v3662 = vadd.f32 %v3497, %v3661
    %v3663 = vpop.f32.mrb[0].mxu0
    %v3664 = vpop.f32.mrb[0].mxu0
    %3665 = vdwg.mxu0
    %v3666 = vld [vmem:[#allocation17] sm:$0xf]
    %v3668 = vlaneseq
    %v3669 = vshrl.u32 %v3668, 7
    %v3670 = vsub.s32 0, %v3669
    %v3671 = vrot.slane %v3666, %v3670
    %v3672 = vlaneseq
    %v3673 = vshrl.u32 %v3672, 7
    %v3674 = vsub.s32 1, %v3673
    %v3675 = vrot.slane %v3666, %v3674
    %v3676 = vlaneseq
    %v3677 = vshrl.u32 %v3676, 7
    %v3678 = vsub.s32 2, %v3677
    %v3679 = vrot.slane %v3666, %v3678
    %v3680 = vlaneseq
    %v3681 = vshrl.u32 %v3680, 7
    %v3682 = vsub.s32 3, %v3681
    %v3683 = vrot.slane %v3666, %v3682
    %v3688 = vadd.f32 %v3619, %v3671
    %v3689 = vadd.f32 %v3621, %v3675
    %v3690 = vadd.f32 %v3660, %v3679
    %v3691 = vadd.f32 %v3662, %v3683
    %v3692 = vmax.f32 %v3688, 0.0
    %v3693 = vmax.f32 %v3689, 0.0
    %v3694 = vmax.f32 %v3690, 0.0
    %v3695 = vmax.f32 %v3691, 0.0
    %v3696 = vpack.c.bf16 %v3692, %v3692
    %v3697 = vpack.c.bf16 %v3693, %v3693
    %v3698 = vpack.c.bf16 %v3694, %v3694
    %v3699 = vpack.c.bf16 %v3695, %v3695
    %v3700 = vld [vmem:[#allocation19] sm:$0xff]
    %v3701 = vld [vmem:[#allocation19 + $0x8] sm:$0xff]
    %v3702 = vld [vmem:[#allocation19 + $0x10] sm:$0xff]
    %v3703 = vld [vmem:[#allocation19 + $0x18] sm:$0xff]
    %v3704 = vld [vmem:[#allocation19 + $0x20] sm:$0xff]
    %v3705 = vld [vmem:[#allocation19 + $0x28] sm:$0xff]
    %v3706 = vld [vmem:[#allocation19 + $0x30] sm:$0xff]
    %v3707 = vld [vmem:[#allocation19 + $0x38] sm:$0xff]
    %v3708 = vld [vmem:[#allocation19 + $0x40] sm:$0xff]
    %v3709 = vld [vmem:[#allocation19 + $0x48] sm:$0xff]
    %v3710 = vld [vmem:[#allocation19 + $0x50] sm:$0xff]
    %v3711 = vld [vmem:[#allocation19 + $0x58] sm:$0xff]
    %v3712 = vld [vmem:[#allocation19 + $0x60] sm:$0xff]
    %v3713 = vld [vmem:[#allocation19 + $0x68] sm:$0xff]
    %v3714 = vld [vmem:[#allocation19 + $0x70] sm:$0xff]
    %v3715 = vld [vmem:[#allocation19 + $0x78] sm:$0xff]
    %v3716 = vld [vmem:[#allocation19 + $0x80] sm:$0xff]
    %v3717 = vld [vmem:[#allocation19 + $0x88] sm:$0xff]
    %v3718 = vld [vmem:[#allocation19 + $0x90] sm:$0xff]
    %v3719 = vld [vmem:[#allocation19 + $0x98] sm:$0xff]
    %v3720 = vld [vmem:[#allocation19 + $0xa0] sm:$0xff]
    %v3721 = vld [vmem:[#allocation19 + $0xa8] sm:$0xff]
    %v3722 = vld [vmem:[#allocation19 + $0xb0] sm:$0xff]
    %v3723 = vld [vmem:[#allocation19 + $0xb8] sm:$0xff]
    %v3724 = vld [vmem:[#allocation19 + $0xc0] sm:$0xff]
    %v3725 = vld [vmem:[#allocation19 + $0xc8] sm:$0xff]
    %v3726 = vld [vmem:[#allocation19 + $0xd0] sm:$0xff]
    %v3727 = vld [vmem:[#allocation19 + $0xd8] sm:$0xff]
    %v3728 = vld [vmem:[#allocation19 + $0xe0] sm:$0xff]
    %v3729 = vld [vmem:[#allocation19 + $0xe8] sm:$0xff]
    %v3730 = vld [vmem:[#allocation19 + $0xf0] sm:$0xff]
    %v3731 = vld [vmem:[#allocation19 + $0xf8] sm:$0xff]
    %v3732 = vld [vmem:[#allocation19 + $0x100] sm:$0xff]
    %v3733 = vld [vmem:[#allocation19 + $0x108] sm:$0xff]
    %v3734 = vld [vmem:[#allocation19 + $0x110] sm:$0xff]
    %v3735 = vld [vmem:[#allocation19 + $0x118] sm:$0xff]
    %v3736 = vld [vmem:[#allocation19 + $0x120] sm:$0xff]
    %v3737 = vld [vmem:[#allocation19 + $0x128] sm:$0xff]
    %v3738 = vld [vmem:[#allocation19 + $0x130] sm:$0xff]
    %v3739 = vld [vmem:[#allocation19 + $0x138] sm:$0xff]
    %v3740 = vld [vmem:[#allocation19 + $0x140] sm:$0xff]
    %v3741 = vld [vmem:[#allocation19 + $0x148] sm:$0xff]
    %v3742 = vld [vmem:[#allocation19 + $0x150] sm:$0xff]
    %v3743 = vld [vmem:[#allocation19 + $0x158] sm:$0xff]
    %v3744 = vld [vmem:[#allocation19 + $0x160] sm:$0xff]
    %v3745 = vld [vmem:[#allocation19 + $0x168] sm:$0xff]
    %v3746 = vld [vmem:[#allocation19 + $0x170] sm:$0xff]
    %v3747 = vld [vmem:[#allocation19 + $0x178] sm:$0xff]
    %v3748 = vld [vmem:[#allocation19 + $0x180] sm:$0xff]
    %v3749 = vld [vmem:[#allocation19 + $0x188] sm:$0xff]
    %v3750 = vld [vmem:[#allocation19 + $0x190] sm:$0xff]
    %v3751 = vld [vmem:[#allocation19 + $0x198] sm:$0xff]
    %v3752 = vld [vmem:[#allocation19 + $0x1a0] sm:$0xff]
    %v3753 = vld [vmem:[#allocation19 + $0x1a8] sm:$0xff]
    %v3754 = vld [vmem:[#allocation19 + $0x1b0] sm:$0xff]
    %v3755 = vld [vmem:[#allocation19 + $0x1b8] sm:$0xff]
    %v3756 = vld [vmem:[#allocation19 + $0x1c0] sm:$0xff]
    %v3757 = vld [vmem:[#allocation19 + $0x1c8] sm:$0xff]
    %v3758 = vld [vmem:[#allocation19 + $0x1d0] sm:$0xff]
    %v3759 = vld [vmem:[#allocation19 + $0x1d8] sm:$0xff]
    %v3760 = vld [vmem:[#allocation19 + $0x1e0] sm:$0xff]
    %v3761 = vld [vmem:[#allocation19 + $0x1e8] sm:$0xff]
    %v3762 = vld [vmem:[#allocation19 + $0x1f0] sm:$0xff]
    %v3763 = vld [vmem:[#allocation19 + $0x1f8] sm:$0xff]
    %v3764 = vld [vmem:[%s16] sm:$0x3]
    %v3766 = vlaneseq
    %v3767 = vshrl.u32 %v3766, 7
    %v3768 = vsub.s32 0, %v3767
    %v3769 = vrot.slane %v3764, %v3768
    %v3770 = vlaneseq
    %v3771 = vshrl.u32 %v3770, 7
    %v3772 = vsub.s32 1, %v3771
    %v3773 = vrot.slane %v3764, %v3772
    %v3840 = vunpack.c.l.b16 %v3700
    %v3841 = vunpack.c.h.b16 %v3700
    %v3842 = vunpack.c.l.b16 %v3701
    %v3843 = vunpack.c.h.b16 %v3701
    %v3844 = vunpack.c.l.b16 %v3702
    %v3845 = vunpack.c.h.b16 %v3702
    %v3846 = vunpack.c.l.b16 %v3703
    %v3847 = vunpack.c.h.b16 %v3703
    %v3848 = vunpack.c.l.b16 %v3704
    %v3849 = vunpack.c.h.b16 %v3704
    %v3850 = vunpack.c.l.b16 %v3705
    %v3851 = vunpack.c.h.b16 %v3705
    %v3852 = vunpack.c.l.b16 %v3706
    %v3853 = vunpack.c.h.b16 %v3706
    %v3854 = vunpack.c.l.b16 %v3707
    %v3855 = vunpack.c.h.b16 %v3707
    %v3856 = vunpack.c.l.b16 %v3708
    %v3857 = vunpack.c.h.b16 %v3708
    %v3858 = vunpack.c.l.b16 %v3709
    %v3859 = vunpack.c.h.b16 %v3709
    %v3860 = vunpack.c.l.b16 %v3710
    %v3861 = vunpack.c.h.b16 %v3710
    %v3862 = vunpack.c.l.b16 %v3711
    %v3863 = vunpack.c.h.b16 %v3711
    %v3864 = vunpack.c.l.b16 %v3712
    %v3865 = vunpack.c.h.b16 %v3712
    %v3866 = vunpack.c.l.b16 %v3713
    %v3867 = vunpack.c.h.b16 %v3713
    %v3868 = vunpack.c.l.b16 %v3714
    %v3869 = vunpack.c.h.b16 %v3714
    %v3870 = vunpack.c.l.b16 %v3715
    %v3871 = vunpack.c.h.b16 %v3715
    %v3872 = vunpack.c.l.b16 %v3716
    %v3873 = vunpack.c.h.b16 %v3716
    %v3874 = vunpack.c.l.b16 %v3717
    %v3875 = vunpack.c.h.b16 %v3717
    %v3876 = vunpack.c.l.b16 %v3718
    %v3877 = vunpack.c.h.b16 %v3718
    %v3878 = vunpack.c.l.b16 %v3719
    %v3879 = vunpack.c.h.b16 %v3719
    %v3880 = vunpack.c.l.b16 %v3720
    %v3881 = vunpack.c.h.b16 %v3720
    %v3882 = vunpack.c.l.b16 %v3721
    %v3883 = vunpack.c.h.b16 %v3721
    %v3884 = vunpack.c.l.b16 %v3722
    %v3885 = vunpack.c.h.b16 %v3722
    %v3886 = vunpack.c.l.b16 %v3723
    %v3887 = vunpack.c.h.b16 %v3723
    %v3888 = vunpack.c.l.b16 %v3724
    %v3889 = vunpack.c.h.b16 %v3724
    %v3890 = vunpack.c.l.b16 %v3725
    %v3891 = vunpack.c.h.b16 %v3725
    %v3892 = vunpack.c.l.b16 %v3726
    %v3893 = vunpack.c.h.b16 %v3726
    %v3894 = vunpack.c.l.b16 %v3727
    %v3895 = vunpack.c.h.b16 %v3727
    %v3896 = vunpack.c.l.b16 %v3728
    %v3897 = vunpack.c.h.b16 %v3728
    %v3898 = vunpack.c.l.b16 %v3729
    %v3899 = vunpack.c.h.b16 %v3729
    %v3900 = vunpack.c.l.b16 %v3730
    %v3901 = vunpack.c.h.b16 %v3730
    %v3902 = vunpack.c.l.b16 %v3731
    %v3903 = vunpack.c.h.b16 %v3731
    %v3904 = vunpack.c.l.b16 %v3732
    %v3905 = vunpack.c.h.b16 %v3732
    %v3906 = vunpack.c.l.b16 %v3733
    %v3907 = vunpack.c.h.b16 %v3733
    %v3908 = vunpack.c.l.b16 %v3734
    %v3909 = vunpack.c.h.b16 %v3734
    %v3910 = vunpack.c.l.b16 %v3735
    %v3911 = vunpack.c.h.b16 %v3735
    %v3912 = vunpack.c.l.b16 %v3736
    %v3913 = vunpack.c.h.b16 %v3736
    %v3914 = vunpack.c.l.b16 %v3737
    %v3915 = vunpack.c.h.b16 %v3737
    %v3916 = vunpack.c.l.b16 %v3738
    %v3917 = vunpack.c.h.b16 %v3738
    %v3918 = vunpack.c.l.b16 %v3739
    %v3919 = vunpack.c.h.b16 %v3739
    %v3920 = vunpack.c.l.b16 %v3740
    %v3921 = vunpack.c.h.b16 %v3740
    %v3922 = vunpack.c.l.b16 %v3741
    %v3923 = vunpack.c.h.b16 %v3741
    %v3924 = vunpack.c.l.b16 %v3742
    %v3925 = vunpack.c.h.b16 %v3742
    %v3926 = vunpack.c.l.b16 %v3743
    %v3927 = vunpack.c.h.b16 %v3743
    %v3928 = vunpack.c.l.b16 %v3744
    %v3929 = vunpack.c.h.b16 %v3744
    %v3930 = vunpack.c.l.b16 %v3745
    %v3931 = vunpack.c.h.b16 %v3745
    %v3932 = vunpack.c.l.b16 %v3746
    %v3933 = vunpack.c.h.b16 %v3746
    %v3934 = vunpack.c.l.b16 %v3747
    %v3935 = vunpack.c.h.b16 %v3747
    %v3936 = vunpack.c.l.b16 %v3748
    %v3937 = vunpack.c.h.b16 %v3748
    %v3938 = vunpack.c.l.b16 %v3749
    %v3939 = vunpack.c.h.b16 %v3749
    %v3940 = vunpack.c.l.b16 %v3750
    %v3941 = vunpack.c.h.b16 %v3750
    %v3942 = vunpack.c.l.b16 %v3751
    %v3943 = vunpack.c.h.b16 %v3751
    %v3944 = vunpack.c.l.b16 %v3752
    %v3945 = vunpack.c.h.b16 %v3752
    %v3946 = vunpack.c.l.b16 %v3753
    %v3947 = vunpack.c.h.b16 %v3753
    %v3948 = vunpack.c.l.b16 %v3754
    %v3949 = vunpack.c.h.b16 %v3754
    %v3950 = vunpack.c.l.b16 %v3755
    %v3951 = vunpack.c.h.b16 %v3755
    %v3952 = vunpack.c.l.b16 %v3756
    %v3953 = vunpack.c.h.b16 %v3756
    %v3954 = vunpack.c.l.b16 %v3757
    %v3955 = vunpack.c.h.b16 %v3757
    %v3956 = vunpack.c.l.b16 %v3758
    %v3957 = vunpack.c.h.b16 %v3758
    %v3958 = vunpack.c.l.b16 %v3759
    %v3959 = vunpack.c.h.b16 %v3759
    %v3960 = vunpack.c.l.b16 %v3760
    %v3961 = vunpack.c.h.b16 %v3760
    %v3962 = vunpack.c.l.b16 %v3761
    %v3963 = vunpack.c.h.b16 %v3761
    %v3964 = vunpack.c.l.b16 %v3762
    %v3965 = vunpack.c.h.b16 %v3762
    %v3966 = vunpack.c.l.b16 %v3763
    %v3967 = vunpack.c.h.b16 %v3763
    %v3968 = vpack.c.b16 %v3842, %v3840
    %v3969 = vpack.c.b16 %v3843, %v3841
    %v3970 = vpack.c.b16 %v3846, %v3844
    %v3971 = vpack.c.b16 %v3847, %v3845
    %v3972 = vpack.c.b16 %v3850, %v3848
    %v3973 = vpack.c.b16 %v3851, %v3849
    %v3974 = vpack.c.b16 %v3854, %v3852
    %v3975 = vpack.c.b16 %v3855, %v3853
    %v3976 = vpack.c.b16 %v3858, %v3856
    %v3977 = vpack.c.b16 %v3859, %v3857
    %v3978 = vpack.c.b16 %v3862, %v3860
    %v3979 = vpack.c.b16 %v3863, %v3861
    %v3980 = vpack.c.b16 %v3866, %v3864
    %v3981 = vpack.c.b16 %v3867, %v3865
    %v3982 = vpack.c.b16 %v3870, %v3868
    %v3983 = vpack.c.b16 %v3871, %v3869
    %v3984 = vpack.c.b16 %v3874, %v3872
    %v3985 = vpack.c.b16 %v3875, %v3873
    %v3986 = vpack.c.b16 %v3878, %v3876
    %v3987 = vpack.c.b16 %v3879, %v3877
    %v3988 = vpack.c.b16 %v3882, %v3880
    %v3989 = vpack.c.b16 %v3883, %v3881
    %v3990 = vpack.c.b16 %v3886, %v3884
    %v3991 = vpack.c.b16 %v3887, %v3885
    %v3992 = vpack.c.b16 %v3890, %v3888
    %v3993 = vpack.c.b16 %v3891, %v3889
    %v3994 = vpack.c.b16 %v3894, %v3892
    %v3995 = vpack.c.b16 %v3895, %v3893
    %v3996 = vpack.c.b16 %v3898, %v3896
    %v3997 = vpack.c.b16 %v3899, %v3897
    %v3998 = vpack.c.b16 %v3902, %v3900
    %v3999 = vpack.c.b16 %v3903, %v3901
    %v4000 = vpack.c.b16 %v3906, %v3904
    %v4001 = vpack.c.b16 %v3907, %v3905
    %v4002 = vpack.c.b16 %v3910, %v3908
    %v4003 = vpack.c.b16 %v3911, %v3909
    %v4004 = vpack.c.b16 %v3914, %v3912
    %v4005 = vpack.c.b16 %v3915, %v3913
    %v4006 = vpack.c.b16 %v3918, %v3916
    %v4007 = vpack.c.b16 %v3919, %v3917
    %v4008 = vpack.c.b16 %v3922, %v3920
    %v4009 = vpack.c.b16 %v3923, %v3921
    %v4010 = vpack.c.b16 %v3926, %v3924
    %v4011 = vpack.c.b16 %v3927, %v3925
    %v4012 = vpack.c.b16 %v3930, %v3928
    %v4013 = vpack.c.b16 %v3931, %v3929
    %v4014 = vpack.c.b16 %v3934, %v3932
    %v4015 = vpack.c.b16 %v3935, %v3933
    %v4016 = vpack.c.b16 %v3938, %v3936
    %v4017 = vpack.c.b16 %v3939, %v3937
    %v4018 = vpack.c.b16 %v3942, %v3940
    %v4019 = vpack.c.b16 %v3943, %v3941
    %v4020 = vpack.c.b16 %v3946, %v3944
    %v4021 = vpack.c.b16 %v3947, %v3945
    %v4022 = vpack.c.b16 %v3950, %v3948
    %v4023 = vpack.c.b16 %v3951, %v3949
    %v4024 = vpack.c.b16 %v3954, %v3952
    %v4025 = vpack.c.b16 %v3955, %v3953
    %v4026 = vpack.c.b16 %v3958, %v3956
    %v4027 = vpack.c.b16 %v3959, %v3957
    %v4028 = vpack.c.b16 %v3962, %v3960
    %v4029 = vpack.c.b16 %v3963, %v3961
    %v4030 = vpack.c.b16 %v3966, %v3964
    %v4031 = vpack.c.b16 %v3967, %v3965
    %4096 = vmatprep.subr.bf16.mxu0 %v3969
    %4097 = vmatpush1.bf16.msra.mxu0 %v3968
    %4098 = vmatprep.subr.bf16.mxu0 %v3971
    %4099 = vmatpush1.bf16.msra.mxu0 %v3970
    %4100 = vmatprep.subr.bf16.mxu0 %v3973
    %4101 = vmatpush1.bf16.msra.mxu0 %v3972
    %4102 = vmatprep.subr.bf16.mxu0 %v3975
    %4103 = vmatpush1.bf16.msra.mxu0 %v3974
    %4104 = vmatprep.subr.bf16.mxu0 %v3977
    %4105 = vmatpush1.bf16.msra.mxu0 %v3976
    %4106 = vmatprep.subr.bf16.mxu0 %v3979
    %4107 = vmatpush1.bf16.msra.mxu0 %v3978
    %4108 = vmatprep.subr.bf16.mxu0 %v3981
    %4109 = vmatpush1.bf16.msra.mxu0 %v3980
    %4110 = vmatprep.subr.bf16.mxu0 %v3983
    %4111 = vmatpush1.bf16.msra.mxu0 %v3982
    %4112 = vmatprep.subr.bf16.mxu0 %v3985
    %4113 = vmatpush1.bf16.msra.mxu0 %v3984
    %4114 = vmatprep.subr.bf16.mxu0 %v3987
    %4115 = vmatpush1.bf16.msra.mxu0 %v3986
    %4116 = vmatprep.subr.bf16.mxu0 %v3989
    %4117 = vmatpush1.bf16.msra.mxu0 %v3988
    %4118 = vmatprep.subr.bf16.mxu0 %v3991
    %4119 = vmatpush1.bf16.msra.mxu0 %v3990
    %4120 = vmatprep.subr.bf16.mxu0 %v3993
    %4121 = vmatpush1.bf16.msra.mxu0 %v3992
    %4122 = vmatprep.subr.bf16.mxu0 %v3995
    %4123 = vmatpush1.bf16.msra.mxu0 %v3994
    %4124 = vmatprep.subr.bf16.mxu0 %v3997
    %4125 = vmatpush1.bf16.msra.mxu0 %v3996
    %4126 = vmatprep.subr.bf16.mxu0 %v3999
    %4127 = vmatpush1.bf16.msra.mxu0 %v3998
    %4128 = vmatprep.mubr.bf16.mxu0 %v3697
    %4129 = vmatmul.mubr.bf16.gmra.mrb[0].mxu0 %v3696
    %v4130 = vpop.f32.mrb[0].mxu0
    %v4131 = vadd.f32 %v3769, %v4130
    %v4132 = vpop.f32.mrb[0].mxu0
    %v4133 = vadd.f32 %v3773, %v4132
    %v4134 = vpop.f32.mrb[0].mxu0
    %v4135 = vpop.f32.mrb[0].mxu0
    %4136 = vdwg.mxu0
    %4137 = vmatprep.subr.bf16.mxu0 %v4001
    %4138 = vmatpush1.bf16.msra.mxu0 %v4000
    %4139 = vmatprep.subr.bf16.mxu0 %v4003
    %4140 = vmatpush1.bf16.msra.mxu0 %v4002
    %4141 = vmatprep.subr.bf16.mxu0 %v4005
    %4142 = vmatpush1.bf16.msra.mxu0 %v4004
    %4143 = vmatprep.subr.bf16.mxu0 %v4007
    %4144 = vmatpush1.bf16.msra.mxu0 %v4006
    %4145 = vmatprep.subr.bf16.mxu0 %v4009
    %4146 = vmatpush1.bf16.msra.mxu0 %v4008
    %4147 = vmatprep.subr.bf16.mxu0 %v4011
    %4148 = vmatpush1.bf16.msra.mxu0 %v4010
    %4149 = vmatprep.subr.bf16.mxu0 %v4013
    %4150 = vmatpush1.bf16.msra.mxu0 %v4012
    %4151 = vmatprep.subr.bf16.mxu0 %v4015
    %4152 = vmatpush1.bf16.msra.mxu0 %v4014
    %4153 = vmatprep.subr.bf16.mxu0 %v4017
    %4154 = vmatpush1.bf16.msra.mxu0 %v4016
    %4155 = vmatprep.subr.bf16.mxu0 %v4019
    %4156 = vmatpush1.bf16.msra.mxu0 %v4018
    %4157 = vmatprep.subr.bf16.mxu0 %v4021
    %4158 = vmatpush1.bf16.msra.mxu0 %v4020
    %4159 = vmatprep.subr.bf16.mxu0 %v4023
    %4160 = vmatpush1.bf16.msra.mxu0 %v4022
    %4161 = vmatprep.subr.bf16.mxu0 %v4025
    %4162 = vmatpush1.bf16.msra.mxu0 %v4024
    %4163 = vmatprep.subr.bf16.mxu0 %v4027
    %4164 = vmatpush1.bf16.msra.mxu0 %v4026
    %4165 = vmatprep.subr.bf16.mxu0 %v4029
    %4166 = vmatpush1.bf16.msra.mxu0 %v4028
    %4167 = vmatprep.subr.bf16.mxu0 %v4031
    %4168 = vmatpush1.bf16.msra.mxu0 %v4030
    %4169 = vmatprep.mubr.bf16.mxu0 %v3699
    %4170 = vmatmul.mubr.bf16.gmra.mrb[0].mxu0 %v3698
    %v4171 = vpop.f32.mrb[0].mxu0
    %v4172 = vadd.f32 %v4131, %v4171
    %v4173 = vpop.f32.mrb[0].mxu0
    %v4174 = vadd.f32 %v4133, %v4173
    %v4175 = vpop.f32.mrb[0].mxu0
    %v4176 = vpop.f32.mrb[0].mxu0
    %4177 = vdwg.mxu0
    %v4178 = vmax.f32 %v4172, 0.0
    %v4179 = vmax.f32 %v4174, 0.0
    %v4180 = vpack.c.bf16 %v4178, %v4178
    %v4181 = vpack.c.bf16 %v4179, %v4179
    %v4182 = vld [vmem:[#allocation20] sm:$0xf]
    %v4183 = vld [vmem:[#allocation20 + $0x4] sm:$0xf]
    %v4184 = vld [vmem:[#allocation20 + $0x8] sm:$0xf]
    %v4185 = vld [vmem:[#allocation20 + $0xc] sm:$0xf]
    %v4186 = vld [vmem:[#allocation20 + $0x10] sm:$0xf]
    %v4187 = vld [vmem:[#allocation20 + $0x14] sm:$0xf]
    %v4188 = vld [vmem:[#allocation20 + $0x18] sm:$0xf]
    %v4189 = vld [vmem:[#allocation20 + $0x1c] sm:$0xf]
    %v4190 = vld [vmem:[#allocation20 + $0x20] sm:$0xf]
    %v4191 = vld [vmem:[#allocation20 + $0x24] sm:$0xf]
    %v4192 = vld [vmem:[#allocation20 + $0x28] sm:$0xf]
    %v4193 = vld [vmem:[#allocation20 + $0x2c] sm:$0xf]
    %v4194 = vld [vmem:[#allocation20 + $0x30] sm:$0xf]
    %v4195 = vld [vmem:[#allocation20 + $0x34] sm:$0xf]
    %v4196 = vld [vmem:[#allocation20 + $0x38] sm:$0xf]
    %v4197 = vld [vmem:[#allocation20 + $0x3c] sm:$0xf]
    %v4198 = vld [vmem:[#allocation20 + $0x40] sm:$0xf]
    %v4199 = vld [vmem:[#allocation20 + $0x44] sm:$0xf]
    %v4200 = vld [vmem:[#allocation20 + $0x48] sm:$0xf]
    %v4201 = vld [vmem:[#allocation20 + $0x4c] sm:$0xf]
    %v4202 = vld [vmem:[#allocation20 + $0x50] sm:$0xf]
    %v4203 = vld [vmem:[#allocation20 + $0x54] sm:$0xf]
    %v4204 = vld [vmem:[#allocation20 + $0x58] sm:$0xf]
    %v4205 = vld [vmem:[#allocation20 + $0x5c] sm:$0xf]
    %v4206 = vld [vmem:[#allocation20 + $0x60] sm:$0xf]
    %v4207 = vld [vmem:[#allocation20 + $0x64] sm:$0xf]
    %v4208 = vld [vmem:[#allocation20 + $0x68] sm:$0xf]
    %v4209 = vld [vmem:[#allocation20 + $0x6c] sm:$0xf]
    %v4210 = vld [vmem:[#allocation20 + $0x70] sm:$0xf]
    %v4211 = vld [vmem:[#allocation20 + $0x74] sm:$0xf]
    %v4212 = vld [vmem:[#allocation20 + $0x78] sm:$0xf]
    %v4213 = vld [vmem:[#allocation20 + $0x7c] sm:$0xf]
    %v4214 = vld [vmem:[%s18] sm:$0x1]
    %v4216 = vlaneseq
    %v4217 = vshrl.u32 %v4216, 7
    %v4218 = vsub.s32 0, %v4217
    %v4219 = vrot.slane %v4214, %v4218
    %v4253 = vunpack.c.l.b16 %v4182
    %v4254 = vunpack.c.l.b16 %v4183
    %v4255 = vunpack.c.l.b16 %v4184
    %v4256 = vunpack.c.l.b16 %v4185
    %v4257 = vunpack.c.l.b16 %v4186
    %v4258 = vunpack.c.l.b16 %v4187
    %v4259 = vunpack.c.l.b16 %v4188
    %v4260 = vunpack.c.l.b16 %v4189
    %v4261 = vunpack.c.l.b16 %v4190
    %v4262 = vunpack.c.l.b16 %v4191
    %v4263 = vunpack.c.l.b16 %v4192
    %v4264 = vunpack.c.l.b16 %v4193
    %v4265 = vunpack.c.l.b16 %v4194
    %v4266 = vunpack.c.l.b16 %v4195
    %v4267 = vunpack.c.l.b16 %v4196
    %v4268 = vunpack.c.l.b16 %v4197
    %v4269 = vunpack.c.l.b16 %v4198
    %v4270 = vunpack.c.l.b16 %v4199
    %v4271 = vunpack.c.l.b16 %v4200
    %v4272 = vunpack.c.l.b16 %v4201
    %v4273 = vunpack.c.l.b16 %v4202
    %v4274 = vunpack.c.l.b16 %v4203
    %v4275 = vunpack.c.l.b16 %v4204
    %v4276 = vunpack.c.l.b16 %v4205
    %v4277 = vunpack.c.l.b16 %v4206
    %v4278 = vunpack.c.l.b16 %v4207
    %v4279 = vunpack.c.l.b16 %v4208
    %v4280 = vunpack.c.l.b16 %v4209
    %v4281 = vunpack.c.l.b16 %v4210
    %v4282 = vunpack.c.l.b16 %v4211
    %v4283 = vunpack.c.l.b16 %v4212
    %v4284 = vunpack.c.l.b16 %v4213
    %v4285 = vpack.c.b16 %v4254, %v4253
    %v4286 = vpack.c.b16 %v4256, %v4255
    %v4287 = vpack.c.b16 %v4258, %v4257
    %v4288 = vpack.c.b16 %v4260, %v4259
    %v4289 = vpack.c.b16 %v4262, %v4261
    %v4290 = vpack.c.b16 %v4264, %v4263
    %v4291 = vpack.c.b16 %v4266, %v4265
    %v4292 = vpack.c.b16 %v4268, %v4267
    %v4293 = vpack.c.b16 %v4270, %v4269
    %v4294 = vpack.c.b16 %v4272, %v4271
    %v4295 = vpack.c.b16 %v4274, %v4273
    %v4296 = vpack.c.b16 %v4276, %v4275
    %v4297 = vpack.c.b16 %v4278, %v4277
    %v4298 = vpack.c.b16 %v4280, %v4279
    %v4299 = vpack.c.b16 %v4282, %v4281
    %v4300 = vpack.c.b16 %v4284, %v4283
    %4317 = vmatprep.subr.bf16.mxu0 0
    %4318 = vmatpush1.bf16.msra.mxu0 %v4285
    %4319 = vmatprep.subr.bf16.mxu0 0
    %4320 = vmatpush1.bf16.msra.mxu0 %v4286
    %4321 = vmatprep.subr.bf16.mxu0 0
    %4322 = vmatpush1.bf16.msra.mxu0 %v4287
    %4323 = vmatprep.subr.bf16.mxu0 0
    %4324 = vmatpush1.bf16.msra.mxu0 %v4288
    %4325 = vmatprep.subr.bf16.mxu0 0
    %4326 = vmatpush1.bf16.msra.mxu0 %v4289
    %4327 = vmatprep.subr.bf16.mxu0 0
    %4328 = vmatpush1.bf16.msra.mxu0 %v4290
    %4329 = vmatprep.subr.bf16.mxu0 0
    %4330 = vmatpush1.bf16.msra.mxu0 %v4291
    %4331 = vmatprep.subr.bf16.mxu0 0
    %4332 = vmatpush1.bf16.msra.mxu0 %v4292
    %4333 = vmatprep.subr.bf16.mxu0 0
    %4334 = vmatpush1.bf16.msra.mxu0 %v4293
    %4335 = vmatprep.subr.bf16.mxu0 0
    %4336 = vmatpush1.bf16.msra.mxu0 %v4294
    %4337 = vmatprep.subr.bf16.mxu0 0
    %4338 = vmatpush1.bf16.msra.mxu0 %v4295
    %4339 = vmatprep.subr.bf16.mxu0 0
    %4340 = vmatpush1.bf16.msra.mxu0 %v4296
    %4341 = vmatprep.subr.bf16.mxu0 0
    %4342 = vmatpush1.bf16.msra.mxu0 %v4297
    %4343 = vmatprep.subr.bf16.mxu0 0
    %4344 = vmatpush1.bf16.msra.mxu0 %v4298
    %4345 = vmatprep.subr.bf16.mxu0 0
    %4346 = vmatpush1.bf16.msra.mxu0 %v4299
    %4347 = vmatprep.subr.bf16.mxu0 0
    %4348 = vmatpush1.bf16.msra.mxu0 %v4300
    %4349 = vmatprep.mubr.bf16.mxu0 %v4181
    %4350 = vmatmul.mubr.bf16.gmra.mrb[0].mxu0 %v4180
    %v4351 = vpop.f32.mrb[0].mxu0
    %v4352 = vadd.f32 %v4219, %v4351
    %v4353 = vpop.f32.mrb[0].mxu0
    %v4354 = vpop.f32.mrb[0].mxu0
    %v4355 = vpop.f32.mrb[0].mxu0
    %4356 = vdwg.mxu0
    %v4357 = vmax.f32 %v4352, 0.0
    %v4358 = vpack.c.bf16 %v4357, %v4357
    %v4359 = vld [vmem:[%s19] sm:$0xf]
    %v4360 = vld [vmem:[%s19 + $0x4] sm:$0xf]
    %v4361 = vld [vmem:[%s19 + $0x8] sm:$0xf]
    %v4362 = vld [vmem:[%s19 + $0xc] sm:$0xf]
    %v4363 = vld [vmem:[%s19 + $0x10] sm:$0xf]
    %v4364 = vld [vmem:[%s19 + $0x14] sm:$0xf]
    %v4365 = vld [vmem:[%s19 + $0x18] sm:$0xf]
    %v4366 = vld [vmem:[%s19 + $0x1c] sm:$0xf]
    %v4367 = vld [vmem:[%s19 + $0x20] sm:$0xf]
    %v4368 = vld [vmem:[%s19 + $0x24] sm:$0xf]
    %v4369 = vld [vmem:[%s19 + $0x28] sm:$0xf]
    %v4370 = vld [vmem:[%s19 + $0x2c] sm:$0xf]
    %v4371 = vld [vmem:[%s19 + $0x30] sm:$0xf]
    %v4372 = vld [vmem:[%s19 + $0x34] sm:$0xf]
    %v4373 = vld [vmem:[%s19 + $0x38] sm:$0xf]
    %v4374 = vld [vmem:[%s19 + $0x3c] sm:$0xf]
    %v4375 = vld [vmem:[%s20] sm:$0x1]
    %v4377 = vlaneseq
    %v4378 = vshrl.u32 %v4377, 7
    %v4379 = vsub.s32 0, %v4378
    %v4380 = vrot.slane %v4375, %v4379
    %v4398 = vunpack.c.l.b16 %v4359
    %v4399 = vunpack.c.l.b16 %v4360
    %v4400 = vunpack.c.l.b16 %v4361
    %v4401 = vunpack.c.l.b16 %v4362
    %v4402 = vunpack.c.l.b16 %v4363
    %v4403 = vunpack.c.l.b16 %v4364
    %v4404 = vunpack.c.l.b16 %v4365
    %v4405 = vunpack.c.l.b16 %v4366
    %v4406 = vunpack.c.l.b16 %v4367
    %v4407 = vunpack.c.l.b16 %v4368
    %v4408 = vunpack.c.l.b16 %v4369
    %v4409 = vunpack.c.l.b16 %v4370
    %v4410 = vunpack.c.l.b16 %v4371
    %v4411 = vunpack.c.l.b16 %v4372
    %v4412 = vunpack.c.l.b16 %v4373
    %v4413 = vunpack.c.l.b16 %v4374
    %v4414 = vpack.c.b16 %v4399, %v4398
    %v4415 = vpack.c.b16 %v4401, %v4400
    %v4416 = vpack.c.b16 %v4403, %v4402
    %v4417 = vpack.c.b16 %v4405, %v4404
    %v4418 = vpack.c.b16 %v4407, %v4406
    %v4419 = vpack.c.b16 %v4409, %v4408
    %v4420 = vpack.c.b16 %v4411, %v4410
    %v4421 = vpack.c.b16 %v4413, %v4412
    %4430 = vmatprep.subr.bf16.mxu0 0
    %4431 = vmatpush1.bf16.msra.mxu0 %v4414
    %4432 = vmatprep.subr.bf16.mxu0 0
    %4433 = vmatpush1.bf16.msra.mxu0 %v4415
    %4434 = vmatprep.subr.bf16.mxu0 0
    %4435 = vmatpush1.bf16.msra.mxu0 %v4416
    %4436 = vmatprep.subr.bf16.mxu0 0
    %4437 = vmatpush1.bf16.msra.mxu0 %v4417
    %4438 = vmatprep.subr.bf16.mxu0 0
    %4439 = vmatpush1.bf16.msra.mxu0 %v4418
    %4440 = vmatprep.subr.bf16.mxu0 0
    %4441 = vmatpush1.bf16.msra.mxu0 %v4419
    %4442 = vmatprep.subr.bf16.mxu0 0
    %4443 = vmatpush1.bf16.msra.mxu0 %v4420
    %4444 = vmatprep.subr.bf16.mxu0 0
    %4445 = vmatpush1.bf16.msra.mxu0 %v4421
    %4446 = vmatprep.subr.bf16.mxu0 0
    %4447 = vmatpush1.bf16.msra.mxu0 0
    %4448 = vmatprep.subr.bf16.mxu0 0
    %4449 = vmatpush1.bf16.msra.mxu0 0
    %4450 = vmatprep.subr.bf16.mxu0 0
    %4451 = vmatpush1.bf16.msra.mxu0 0
    %4452 = vmatprep.subr.bf16.mxu0 0
    %4453 = vmatpush1.bf16.msra.mxu0 0
    %4454 = vmatprep.subr.bf16.mxu0 0
    %4455 = vmatpush1.bf16.msra.mxu0 0
    %4456 = vmatprep.subr.bf16.mxu0 0
    %4457 = vmatpush1.bf16.msra.mxu0 0
    %4458 = vmatprep.subr.bf16.mxu0 0
    %4459 = vmatpush1.bf16.msra.mxu0 0
    %4460 = vmatprep.subr.bf16.mxu0 0
    %4461 = vmatpush1.bf16.msra.mxu0 0
    %4462 = vmatprep.mubr.bf16.mxu0 0
    %4463 = vmatmul.mubr.bf16.gmra.mrb[0].mxu0 %v4358
    %v4464 = vpop.f32.mrb[0].mxu0
    %v4465 = vadd.f32 %v4380, %v4464
    %v4466 = vpop.f32.mrb[0].mxu0
    %v4467 = vpop.f32.mrb[0].mxu0
    %v4468 = vpop.f32.mrb[0].mxu0
    %4469 = vdwg.mxu0
    %v4470 = vmax.f32 %v4465, 0.0
    %v4471 = vld [vmem:[%s21] sm:$0x1]
    %v4473 = vlaneseq
    %v4474 = vshrl.u32 %v4473, 7
    %v4475 = vsub.s32 0, %v4474
    %v4476 = vrot.slane %v4471, %v4475
    %v4478 = vmul.f32 %v4470, %v4476
    %v4479 = vsel %vm3415, %v4478, 0.0
    %4480 = vadd.xlane.f32.xlu0 %v4479
    %v4481 = vpop.xlane.xlu0 %4480
    %v4482 = vld [vmem:[#allocation2] sm:$0x1]
    %v4484 = vlaneseq
    %v4485 = vshrl.u32 %v4484, 7
    %v4486 = vsub.s32 0, %v4485
    %v4487 = vrot.slane %v4482, %v4486
    %v4489 = vadd.f32 %v4481, %v4487
    %v4490 = vxor.u32 %v4489, 2147483648
    %v4491 = vmul.f32 %v4490, 1.442695
    %v4492 = vpow.pop %v4491
    %v4493 = vadd.f32 %v4492, 1.0
    %v4494 = vrcp.pop %v4493
    %v4495 = vmul.f32 1.0, %v4494
    %vm4496 = vcmask 7168
    %4497 = vst.msk [vmem:[%s23] sm:$0xff] %vm4496, %v4495
    // Predicated region
    $region142: #{_attack_pallas.1} parent=1 // pred_check
      _
    $region143: #{_attack_pallas.1} parent=1 // pred_check_branch
      %4499 = sbr.rel (0) target = $region145
    $region144: #{_attack_pallas.1} parent=1 // pred_region
      _
    $region145: #{_attack_pallas.1} parent=1 // pred_fallthru
      _
    // Predicated region
    $region146: #{_attack_pallas.1} parent=1 // pred_check
      _
    $region147: #{_attack_pallas.1} parent=1 // pred_check_branch
      %4501 = sbr.rel (0) target = $region149
    $region148: #{_attack_pallas.1} parent=1 // pred_region
      _
    $region149: #{_attack_pallas.1} parent=1 // pred_fallthru
      _
    %4502 = vsyncpa [#allocation4], 1
    %4503 = vsyncpa [#allocation6], 1
    %4504 = vsyncpa [#allocation9], 1
    %4505 = vsyncpa [#allocation12], 1
    %4506 = vsyncpa [#allocation15], 1
    %4507 = vsyncpa [#allocation18], 1
    %4508 = vsyncpa [#allocation21], 1

</llo_original>
